<compile_context>
chip_gen: v6e
topology: v6e:2x2x1
jax: 0.10.0
libtpu: 0.0.40
codegen_flags: <defaults>
</compile_context>

<pallas_src>
import functools
import math

import numpy as np

import jax
import jax.numpy as jnp
from jax import lax
from jax.experimental import pallas as pl
from jax.experimental.pallas import tpu as pltpu


# ============================================================================
# The single fused MMLTF kernel.
# ============================================================================
def _mmltf_kernel(x_ref, sm_ref, sb_ref, c1m_ref, c1b_ref, c2m_ref, c2b_ref,
                  fca_ref,
                  emb_ref, wihf_ref, wihb_ref, bg_ref, whh_ref, fct_ref,
                  bcat_ref,
                  wv_ref, bv_ref, wo_ref, bo_ref, ln1_ref,
                  w1_ref, fb1_ref, w2_ref, fb2_ref, ln2_ref,
                  wc_ref, bc_ref,
                  o_ref, pad_a, pad_b, *, cin, cconv, eps):
    f32 = jnp.float32
    B, H, w_cin = x_ref.shape
    W = w_cin // cin
    N = B * H                       # GEMM M dimension (batch folded in)
    WC = W * cconv                  # lane width of conv activations (=128)

    # --------------------- audio branch: ResNet ----------------------------
    # Zero the padded scratches once (halos stay zero; only interiors are
    # rewritten per layer).
    pad_a[...] = jnp.zeros_like(pad_a)
    pad_b[...] = jnp.zeros_like(pad_b)
    # in-kernel 'same' padding of the input (lanes are j*cin + c).
    pad_a[:, 1:H + 1, cin:cin + W * cin] = x_ref[...]

    def conv3x3(pad_ref, m_ref, b_ref, kdim):
        # 3x3 conv as 3 banded GEMMs: for each row tap di, contract the whole
        # padded row slab [(b,i), (j_pad,c)] against M_di[(j_pad,c),(j,co)].
        acc = jnp.zeros((N, WC), f32)
        for di in range(3):                                   # static unroll
            lhs = pad_ref[:, di:di + H, :].reshape(N, kdim)
            acc = acc + jnp.dot(lhs, m_ref[di],
                                preferred_element_type=f32)
        return acc + b_ref[...]                               # [N, W*C]

    # stem conv + ReLU
    h = jnp.maximum(conv3x3(pad_a, sm_ref, sb_ref, (W + 2) * cin), 0.0)

    # block conv1 + ReLU
    pad_b[:, 1:H + 1, cconv:cconv + WC] = h.reshape(B, H, WC)
    r = jnp.maximum(conv3x3(pad_b, c1m_ref, c1b_ref, (W + 2) * cconv), 0.0)

    # block conv2 + residual + ReLU
    pad_b[:, 1:H + 1, cconv:cconv + WC] = r.reshape(B, H, WC)
    y = jnp.maximum(conv3x3(pad_b, c2m_ref, c2b_ref, (W + 2) * cconv) + h, 0.0)

    # Global-avg-pool + audio FC: the 1/(H*W) factor and the per-channel FC
    # are folded into fca (zero-padded to d_model on the text half).
    rowsum = jnp.sum(y.reshape(B, H, WC), axis=1)             # [B, W*C]
    x_cat = jnp.dot(rowsum, fca_ref[...], preferred_element_type=f32)

    # --------------------- text branch: packed BiLSTM ----------------------
    Bt, T, E = emb_ref.shape
    HL = whh_ref.shape[0] // 2
    e2 = emb_ref[...].reshape(Bt * T, E)
    # gate columns: [i_f, i_b, f_f, f_b, g_f, g_b, o_f, o_b] -> 8H = 128 lanes
    gf = jnp.dot(e2, wihf_ref[...],
                 preferred_element_type=f32).reshape(Bt, T, 8 * HL)
    gb = jnp.dot(e2, wihb_ref[...],
                 preferred_element_type=f32).reshape(Bt, T, 8 * HL)

    hs = jnp.zeros((Bt, 2 * HL), f32)                         # [h_f | h_b]
    cs = jnp.zeros((Bt, 2 * HL), f32)
    for t in range(T):                                        # T static: unroll
        g = (gf[:, t, :] + gb[:, T - 1 - t, :] + bg_ref[...]
             + jnp.dot(hs, whh_ref[...], preferred_element_type=f32))
        zi = jax.nn.sigmoid(g[:, 0:2 * HL])
        zf = jax.nn.sigmoid(g[:, 2 * HL:4 * HL])
        zg = jnp.tanh(g[:, 4 * HL:6 * HL])
        zo = jax.nn.sigmoid(g[:, 6 * HL:8 * HL])
        cs = zf * cs + zi * zg
        hs = zo * jnp.tanh(cs)

    # Text FC (zero-padded to d_model on the audio half); adding it to the
    # audio FC output realises torch.cat([x_audio, x_text], dim=1).
    x_cat = x_cat + jnp.dot(hs, fct_ref[...],
                            preferred_element_type=f32) + bcat_ref[...]

    # --------------------- fusion transformer (seq len == 1) ---------------
    # Softmax over a single key is identically 1 -> attention output == V
    # projection; q/k projections are dropped with zero numerical change.
    v = jnp.dot(x_cat, wv_ref[...], preferred_element_type=f32) + bv_ref[...]
    attn = jnp.dot(v, wo_ref[...], preferred_element_type=f32) + bo_ref[...]

    def layer_norm(z, ln_ref):
        mu = jnp.mean(z, axis=-1, keepdims=True)
        var = jnp.mean(jnp.square(z - mu), axis=-1, keepdims=True)
        return (z - mu) * lax.rsqrt(var + eps) * ln_ref[0:1, :] + ln_ref[1:2, :]

    hf = layer_norm(x_cat + attn, ln1_ref)                    # post-norm
    ff = jnp.maximum(jnp.dot(hf, w1_ref[...],
                             preferred_element_type=f32) + fb1_ref[...], 0.0)
    ff = jnp.dot(ff, w2_ref[...], preferred_element_type=f32) + fb2_ref[...]
    hf = layer_norm(hf + ff, ln2_ref)
    o_ref[...] = (jnp.dot(hf, wc_ref[...],
                          preferred_element_type=f32) + bc_ref[...])


def _full_spec(a):
    nd = a.ndim
    return pl.BlockSpec(a.shape, lambda i: (0,) * nd)


def mmltf_forward(params, audio_in, text_in):
    p = params
    B, cin, H, W = audio_in.shape
    cconv = p["stem_b"].shape[1] // W
    ncls = p["b_cls"].shape[1]

    # Host glue (one-time, tiny): NCHW -> [B, H, W*Cin] and embedding gather.
    x = jnp.transpose(audio_in, (0, 2, 3, 1)).reshape(B, H, W * cin)
    emb = p["embed"][text_in]                                  # [B, T, E]

    args = (x, p["stem_m"], p["stem_b"], p["blk1_m"], p["blk1_b"],
            p["blk2_m"], p["blk2_b"], p["fc_audio"],
            emb, p["wih_f"], p["wih_b"], p["b_g"], p["w_hh"], p["fc_text"],
            p["b_cat"],
            p["wv"], p["bv"], p["wo"], p["bo"], p["ln1"],
            p["w1"], p["b1"], p["w2"], p["b2"], p["ln2"],
            p["w_cls"], p["b_cls"])

    kernel = functools.partial(_mmltf_kernel, cin=cin, cconv=cconv, eps=1e-5)
    return pl.pallas_call(
        kernel,
        grid=(1,),
        in_specs=[_full_spec(a) for a in args],
        out_specs=pl.BlockSpec((B, ncls), lambda i: (0, 0)),
        out_shape=jax.ShapeDtypeStruct((B, ncls), jnp.float32),
        scratch_shapes=[
            pltpu.VMEM((B, H + 2, (W + 2) * cin), jnp.float32),    # pad_a
            pltpu.VMEM((B, H + 2, (W + 2) * cconv), jnp.float32),  # pad_b
        ],
    )(*args)


# ============================================================================
# Deterministic synthetic parameters (packed for the fused kernel layouts).
# ============================================================================
def init_params(key, *, c_in=4, c_conv=8, d_audio=32,
                vocab=50, emb=16, h_lstm=16, d_text=32,
                d_ff=128, num_classes=4, H=16, W=16):
    keys = iter(jax.random.split(key, 80))

    def rnd(shape, scale):
        return scale * jax.random.normal(next(keys), shape, jnp.float32)

    def wmat(shape):
        return rnd(shape, 1.0 / math.sqrt(shape[0]))

    def conv_w(cin, cout):                      # [9, cin, cout], 3x3 taps flat
        return rnd((9, cin, cout), 1.0 / math.sqrt(9 * cin))

    def banded(w9):
        # [9, cin, cout] -> [3, (W+2)*cin, W*cout] block-banded matrices:
        # M[di, (j+dj)*cin + c, j*cout + co] = w9[3*di+dj, c, co].
        k9 = np.asarray(w9)
        _, ci, co = k9.shape
        M = np.zeros((3, (W + 2) * ci, W * co), np.float32)
        for di in range(3):
            for dj in range(3):
                tap = k9[3 * di + dj]
                for j in range(W):
                    jp = j + dj
                    M[di, jp * ci:(jp + 1) * ci, j * co:(j + 1) * co] = tap
        return jnp.asarray(M)

    def lane_bias(b):                            # [cout] -> [1, W*cout]
        return jnp.tile(b.reshape(1, -1), (1, W))

    d_model = d_audio + d_text

    # --- audio (ResNet) -----------------------------------------------------
    stem_w = conv_w(c_in, c_conv); stem_b = rnd((c_conv,), 0.01)
    blk_w1 = conv_w(c_conv, c_conv); blk_b1 = rnd((c_conv,), 0.01)
    blk_w2 = conv_w(c_conv, c_conv); blk_b2 = rnd((c_conv,), 0.01)
    fc_aw = wmat((c_conv, d_audio)); fc_ab = rnd((d_audio,), 0.01)
    # GAP (1/(H*W)) folded into a [W*C, d_audio] matrix, zero-padded to d_model.
    fc_audio = jnp.tile(fc_aw, (W, 1)) / float(H * W)
    fc_audio = jnp.concatenate(
        [fc_audio, jnp.zeros((W * c_conv, d_text), jnp.float32)], axis=1)

    # --- text (BiLSTM, gates packed to 8H lanes) -----------------------------
    E, HL = emb, h_lstm
    wih_f4 = [wmat((E, HL)) for _ in range(4)]
    wih_b4 = [wmat((E, HL)) for _ in range(4)]
    whh_f4 = [wmat((HL, HL)) for _ in range(4)]
    whh_b4 = [wmat((HL, HL)) for _ in range(4)]
    bg_f = [rnd((HL,), 0.01) for _ in range(4)]
    bg_b = [rnd((HL,), 0.01) for _ in range(4)]
    zE = jnp.zeros((E, HL), jnp.float32)
    zH = jnp.zeros((HL, HL), jnp.float32)
    # gate column order: [i_f, i_b, f_f, f_b, g_f, g_b, o_f, o_b]
    wih_f = jnp.concatenate([wih_f4[0], zE, wih_f4[1], zE,
                             wih_f4[2], zE, wih_f4[3], zE], axis=1)   # [E, 8H]
    wih_b = jnp.concatenate([zE, wih_b4[0], zE, wih_b4[1],
                             zE, wih_b4[2], zE, wih_b4[3]], axis=1)   # [E, 8H]
    w_hh = jnp.concatenate([
        jnp.concatenate([whh_f4[0], zH, whh_f4[1], zH,
                         whh_f4[2], zH, whh_f4[3], zH], axis=1),
        jnp.concatenate([zH, whh_b4[0], zH, whh_b4[1],
                         zH, whh_b4[2], zH, whh_b4[3]], axis=1)], axis=0)
    # TODO(synk): torch.nn.LSTM has b_ih + b_hh; their sum is used here.
    b_g = jnp.concatenate([bg_f[0], bg_b[0], bg_f[1], bg_b[1],
                           bg_f[2], bg_b[2], bg_f[3], bg_b[3]])[None, :]
    fc_tw = wmat((2 * h_lstm, d_text)); fc_tb = rnd((d_text,), 0.01)
    fc_text = jnp.concatenate(
        [jnp.zeros((2 * h_lstm, d_audio), jnp.float32), fc_tw], axis=1)
    b_cat = jnp.concatenate([fc_ab, fc_tb])[None, :]                 # [1, d_model]

    # --- fusion transformer (q/k omitted: seq len 1 -> attention == V) ------
    transformer = dict(
        wv=wmat((d_model, d_model)), bv=rnd((1, d_model), 0.01),
        wo=wmat((d_model, d_model)), bo=rnd((1, d_model), 0.01),
        ln1=jnp.stack([jnp.ones((d_model,), jnp.float32),
                       jnp.zeros((d_model,), jnp.float32)]),
        w1=wmat((d_model, d_ff)), b1=rnd((1, d_ff), 0.01),
        w2=wmat((d_ff, d_model)), b2=rnd((1, d_model), 0.01),
        ln2=jnp.stack([jnp.ones((d_model,), jnp.float32),
                       jnp.zeros((d_model,), jnp.float32)]),
        w_cls=wmat((d_model, num_classes)), b_cls=rnd((1, num_classes), 0.01),
    )

    return dict(
        stem_m=banded(stem_w), stem_b=lane_bias(stem_b),
        blk1_m=banded(blk_w1), blk1_b=lane_bias(blk_b1),
        blk2_m=banded(blk_w2), blk2_b=lane_bias(blk_b2),
        fc_audio=fc_audio,
        embed=rnd((vocab, emb), 0.1),
        wih_f=wih_f, wih_b=wih_b, b_g=b_g, w_hh=w_hh, fc_text=fc_text,
        b_cat=b_cat,
        **transformer,
    )


if __name__ == "__main__":
    key = jax.random.PRNGKey(0)
    k_param, k_audio, k_text = jax.random.split(key, 3)

    B = 2
    audio_in = jax.random.normal(k_audio, (B, 4, 16, 16), jnp.float32)  # NCHW
    text_in = jax.random.randint(k_text, (B, 8), 0, 50)                 # tokens

    params = init_params(k_param)

    fwd = jax.jit(mmltf_forward)
    out = jax.block_until_ready(fwd(params, audio_in, text_in))

    assert out.shape == (B, 4), out.shape
    assert bool(jnp.all(jnp.isfinite(out)))
    print("KERNEL_OK")
</pallas_src>

<mosaic_0001>
module attributes {stable_mosaic.version = 11 : i64} {
  func.func @_mmltf_kernel(%arg0: i32, %arg1: memref<2x16x64xf32, #tpu.memory_space<vmem>>, %arg2: memref<3x72x128xf32, #tpu.memory_space<vmem>>, %arg3: memref<1x128xf32, #tpu.memory_space<vmem>>, %arg4: memref<3x144x128xf32, #tpu.memory_space<vmem>>, %arg5: memref<1x128xf32, #tpu.memory_space<vmem>>, %arg6: memref<3x144x128xf32, #tpu.memory_space<vmem>>, %arg7: memref<1x128xf32, #tpu.memory_space<vmem>>, %arg8: memref<128x64xf32, #tpu.memory_space<vmem>>, %arg9: memref<2x8x16xf32, #tpu.memory_space<vmem>>, %arg10: memref<16x128xf32, #tpu.memory_space<vmem>>, %arg11: memref<16x128xf32, #tpu.memory_space<vmem>>, %arg12: memref<1x128xf32, #tpu.memory_space<vmem>>, %arg13: memref<32x128xf32, #tpu.memory_space<vmem>>, %arg14: memref<32x64xf32, #tpu.memory_space<vmem>>, %arg15: memref<1x64xf32, #tpu.memory_space<vmem>>, %arg16: memref<64x64xf32, #tpu.memory_space<vmem>>, %arg17: memref<1x64xf32, #tpu.memory_space<vmem>>, %arg18: memref<64x64xf32, #tpu.memory_space<vmem>>, %arg19: memref<1x64xf32, #tpu.memory_space<vmem>>, %arg20: memref<2x64xf32, #tpu.memory_space<vmem>>, %arg21: memref<64x128xf32, #tpu.memory_space<vmem>>, %arg22: memref<1x128xf32, #tpu.memory_space<vmem>>, %arg23: memref<128x64xf32, #tpu.memory_space<vmem>>, %arg24: memref<1x64xf32, #tpu.memory_space<vmem>>, %arg25: memref<2x64xf32, #tpu.memory_space<vmem>>, %arg26: memref<64x4xf32, #tpu.memory_space<vmem>>, %arg27: memref<1x4xf32, #tpu.memory_space<vmem>>, %arg28: memref<2x4xf32, #tpu.memory_space<vmem>>, %arg29: memref<2x18x72xf32, #tpu.memory_space<vmem>>, %arg30: memref<2x18x144xf32, #tpu.memory_space<vmem>>) attributes {dimension_semantics = [#tpu.dimension_semantics<arbitrary>], iteration_bounds = array<i64: 1>, scalar_prefetch = 0 : i64, scratch_operands = 2 : i64, tpu.core_type = #tpu.core_type<tc>, window_params = [{pipeline_mode = #tpu.pipeline_mode<synchronous>, transform_indices = @transform_0, window_bounds = array<i64: 2, 16, 64>}, {pipeline_mode = #tpu.pipeline_mode<synchronous>, transform_indices = @transform_1, window_bounds = array<i64: 3, 72, 128>}, {pipeline_mode = #tpu.pipeline_mode<synchronous>, transform_indices = @transform_2, window_bounds = array<i64: 1, 128>}, {pipeline_mode = #tpu.pipeline_mode<synchronous>, transform_indices = @transform_3, window_bounds = array<i64: 3, 144, 128>}, {pipeline_mode = #tpu.pipeline_mode<synchronous>, transform_indices = @transform_4, window_bounds = array<i64: 1, 128>}, {pipeline_mode = #tpu.pipeline_mode<synchronous>, transform_indices = @transform_5, window_bounds = array<i64: 3, 144, 128>}, {pipeline_mode = #tpu.pipeline_mode<synchronous>, transform_indices = @transform_6, window_bounds = array<i64: 1, 128>}, {pipeline_mode = #tpu.pipeline_mode<synchronous>, transform_indices = @transform_7, window_bounds = array<i64: 128, 64>}, {pipeline_mode = #tpu.pipeline_mode<synchronous>, transform_indices = @transform_8, window_bounds = array<i64: 2, 8, 16>}, {pipeline_mode = #tpu.pipeline_mode<synchronous>, transform_indices = @transform_9, window_bounds = array<i64: 16, 128>}, {pipeline_mode = #tpu.pipeline_mode<synchronous>, transform_indices = @transform_10, window_bounds = array<i64: 16, 128>}, {pipeline_mode = #tpu.pipeline_mode<synchronous>, transform_indices = @transform_11, window_bounds = array<i64: 1, 128>}, {pipeline_mode = #tpu.pipeline_mode<synchronous>, transform_indices = @transform_12, window_bounds = array<i64: 32, 128>}, {pipeline_mode = #tpu.pipeline_mode<synchronous>, transform_indices = @transform_13, window_bounds = array<i64: 32, 64>}, {pipeline_mode = #tpu.pipeline_mode<synchronous>, transform_indices = @transform_14, window_bounds = array<i64: 1, 64>}, {pipeline_mode = #tpu.pipeline_mode<synchronous>, transform_indices = @transform_15, window_bounds = array<i64: 64, 64>}, {pipeline_mode = #tpu.pipeline_mode<synchronous>, transform_indices = @transform_16, window_bounds = array<i64: 1, 64>}, {pipeline_mode = #tpu.pipeline_mode<synchronous>, transform_indices = @transform_17, window_bounds = array<i64: 64, 64>}, {pipeline_mode = #tpu.pipeline_mode<synchronous>, transform_indices = @transform_18, window_bounds = array<i64: 1, 64>}, {pipeline_mode = #tpu.pipeline_mode<synchronous>, transform_indices = @transform_19, window_bounds = array<i64: 2, 64>}, {pipeline_mode = #tpu.pipeline_mode<synchronous>, transform_indices = @transform_20, window_bounds = array<i64: 64, 128>}, {pipeline_mode = #tpu.pipeline_mode<synchronous>, transform_indices = @transform_21, window_bounds = array<i64: 1, 128>}, {pipeline_mode = #tpu.pipeline_mode<synchronous>, transform_indices = @transform_22, window_bounds = array<i64: 128, 64>}, {pipeline_mode = #tpu.pipeline_mode<synchronous>, transform_indices = @transform_23, window_bounds = array<i64: 1, 64>}, {pipeline_mode = #tpu.pipeline_mode<synchronous>, transform_indices = @transform_24, window_bounds = array<i64: 2, 64>}, {pipeline_mode = #tpu.pipeline_mode<synchronous>, transform_indices = @transform_25, window_bounds = array<i64: 64, 4>}, {pipeline_mode = #tpu.pipeline_mode<synchronous>, transform_indices = @transform_26, window_bounds = array<i64: 1, 4>}, {pipeline_mode = #tpu.pipeline_mode<synchronous>, transform_indices = @transform_27, window_bounds = array<i64: 2, 4>}]} {
    %cst = arith.constant 0.000000e+00 : f32
    %0 = vector.broadcast %cst : f32 to vector<2x18x72xf32>
    %c0 = arith.constant 0 : index
    %c0_0 = arith.constant 0 : index
    %c0_1 = arith.constant 0 : index
    %1 = vector.load %arg29[%c0, %c0_0, %c0_1] : memref<2x18x72xf32, #tpu.memory_space<vmem>>, vector<2x18x72xf32>
    tpu.vector_store %arg29[%c0, %c0_0, %c0_1], %0 {strides = array<i32>} : memref<2x18x72xf32, #tpu.memory_space<vmem>>, vector<2x18x72xf32>,
    %cst_2 = arith.constant 0.000000e+00 : f32
    %2 = vector.broadcast %cst_2 : f32 to vector<2x18x144xf32>
    %c0_3 = arith.constant 0 : index
    %c0_4 = arith.constant 0 : index
    %c0_5 = arith.constant 0 : index
    %3 = vector.load %arg30[%c0_3, %c0_4, %c0_5] : memref<2x18x144xf32, #tpu.memory_space<vmem>>, vector<2x18x144xf32>
    tpu.vector_store %arg30[%c0_3, %c0_4, %c0_5], %2 {strides = array<i32>} : memref<2x18x144xf32, #tpu.memory_space<vmem>>, vector<2x18x144xf32>,
    %c0_6 = arith.constant 0 : index
    %c0_7 = arith.constant 0 : index
    %c0_8 = arith.constant 0 : index
    %4 = vector.load %arg1[%c0_6, %c0_7, %c0_8] : memref<2x16x64xf32, #tpu.memory_space<vmem>>, vector<2x16x64xf32>
    %c0_9 = arith.constant 0 : index
    %c1 = arith.constant 1 : index
    %c4 = arith.constant 4 : index
    %5 = vector.load %arg29[%c0_9, %c1, %c4] : memref<2x18x72xf32, #tpu.memory_space<vmem>>, vector<2x16x64xf32>
    tpu.vector_store %arg29[%c0_9, %c1, %c4], %4 {strides = array<i32>} : memref<2x18x72xf32, #tpu.memory_space<vmem>>, vector<2x16x64xf32>,
    %cst_10 = arith.constant 0.000000e+00 : f32
    %6 = vector.broadcast %cst_10 : f32 to vector<32x128xf32>
    %c0_11 = arith.constant 0 : index
    %c0_12 = arith.constant 0 : index
    %c0_13 = arith.constant 0 : index
    %7 = vector.load %arg29[%c0_11, %c0_12, %c0_13] : memref<2x18x72xf32, #tpu.memory_space<vmem>>, vector<2x16x72xf32>
    %8 = vector.shape_cast %7 : vector<2x16x72xf32> to vector<32x72xf32>
    %c0_14 = arith.constant 0 : index
    %c0_15 = arith.constant 0 : index
    %c0_16 = arith.constant 0 : index
    %9 = vector.load %arg2[%c0_14, %c0_15, %c0_16] : memref<3x72x128xf32, #tpu.memory_space<vmem>>, vector<1x72x128xf32>
    %10 = vector.shape_cast %9 : vector<1x72x128xf32> to vector<72x128xf32>
    %cst_17 = arith.constant dense<0.000000e+00> : vector<32x128xf32>
    %11 = tpu.matmul %8, %10, %cst_17 {dimension_numbers = #tpu.dot_dimension_numbers<[1], [0], [0], [1], [0, 0, 1, 1], [], []>} : vector<32x72xf32>, vector<72x128xf32>, vector<32x128xf32> -> vector<32x128xf32>
    %12 = arith.addf %6, %11 : vector<32x128xf32>
    %c0_18 = arith.constant 0 : index
    %c1_19 = arith.constant 1 : index
    %c0_20 = arith.constant 0 : index
    %13 = vector.load %arg29[%c0_18, %c1_19, %c0_20] : memref<2x18x72xf32, #tpu.memory_space<vmem>>, vector<2x16x72xf32>
    %14 = vector.shape_cast %13 : vector<2x16x72xf32> to vector<32x72xf32>
    %c1_21 = arith.constant 1 : index
    %c0_22 = arith.constant 0 : index
    %c0_23 = arith.constant 0 : index
    %15 = vector.load %arg2[%c1_21, %c0_22, %c0_23] : memref<3x72x128xf32, #tpu.memory_space<vmem>>, vector<1x72x128xf32>
    %16 = vector.shape_cast %15 : vector<1x72x128xf32> to vector<72x128xf32>
    %cst_24 = arith.constant dense<0.000000e+00> : vector<32x128xf32>
    %17 = tpu.matmul %14, %16, %cst_24 {dimension_numbers = #tpu.dot_dimension_numbers<[1], [0], [0], [1], [0, 0, 1, 1], [], []>} : vector<32x72xf32>, vector<72x128xf32>, vector<32x128xf32> -> vector<32x128xf32>
    %18 = arith.addf %12, %17 : vector<32x128xf32>
    %c0_25 = arith.constant 0 : index
    %c2 = arith.constant 2 : index
    %c0_26 = arith.constant 0 : index
    %19 = vector.load %arg29[%c0_25, %c2, %c0_26] : memref<2x18x72xf32, #tpu.memory_space<vmem>>, vector<2x16x72xf32>
    %20 = vector.shape_cast %19 : vector<2x16x72xf32> to vector<32x72xf32>
    %c2_27 = arith.constant 2 : index
    %c0_28 = arith.constant 0 : index
    %c0_29 = arith.constant 0 : index
    %21 = vector.load %arg2[%c2_27, %c0_28, %c0_29] : memref<3x72x128xf32, #tpu.memory_space<vmem>>, vector<1x72x128xf32>
    %22 = vector.shape_cast %21 : vector<1x72x128xf32> to vector<72x128xf32>
    %cst_30 = arith.constant dense<0.000000e+00> : vector<32x128xf32>
    %23 = tpu.matmul %20, %22, %cst_30 {dimension_numbers = #tpu.dot_dimension_numbers<[1], [0], [0], [1], [0, 0, 1, 1], [], []>} : vector<32x72xf32>, vector<72x128xf32>, vector<32x128xf32> -> vector<32x128xf32>
    %24 = arith.addf %18, %23 : vector<32x128xf32>
    %c0_31 = arith.constant 0 : index
    %c0_32 = arith.constant 0 : index
    %25 = vector.load %arg3[%c0_31, %c0_32] : memref<1x128xf32, #tpu.memory_space<vmem>>, vector<1x128xf32>
    %26 = vector.broadcast %25 : vector<1x128xf32> to vector<32x128xf32>
    %27 = arith.addf %24, %26 : vector<32x128xf32>
    %cst_33 = arith.constant 0.000000e+00 : f32
    %28 = vector.broadcast %cst_33 : f32 to vector<32x128xf32>
    %29 = arith.maximumf %27, %28 : vector<32x128xf32>
    %30 = vector.shape_cast %29 : vector<32x128xf32> to vector<2x16x128xf32>
    %c0_34 = arith.constant 0 : index
    %c1_35 = arith.constant 1 : index
    %c8 = arith.constant 8 : index
    %31 = vector.load %arg30[%c0_34, %c1_35, %c8] : memref<2x18x144xf32, #tpu.memory_space<vmem>>, vector<2x16x128xf32>
    tpu.vector_store %arg30[%c0_34, %c1_35, %c8], %30 {strides = array<i32>} : memref<2x18x144xf32, #tpu.memory_space<vmem>>, vector<2x16x128xf32>,
    %cst_36 = arith.constant 0.000000e+00 : f32
    %32 = vector.broadcast %cst_36 : f32 to vector<32x128xf32>
    %c0_37 = arith.constant 0 : index
    %c0_38 = arith.constant 0 : index
    %c0_39 = arith.constant 0 : index
    %33 = vector.load %arg30[%c0_37, %c0_38, %c0_39] : memref<2x18x144xf32, #tpu.memory_space<vmem>>, vector<2x16x144xf32>
    %34 = vector.shape_cast %33 : vector<2x16x144xf32> to vector<32x144xf32>
    %c0_40 = arith.constant 0 : index
    %c0_41 = arith.constant 0 : index
    %c0_42 = arith.constant 0 : index
    %35 = vector.load %arg4[%c0_40, %c0_41, %c0_42] : memref<3x144x128xf32, #tpu.memory_space<vmem>>, vector<1x144x128xf32>
    %36 = vector.shape_cast %35 : vector<1x144x128xf32> to vector<144x128xf32>
    %cst_43 = arith.constant dense<0.000000e+00> : vector<32x128xf32>
    %37 = tpu.matmul %34, %36, %cst_43 {dimension_numbers = #tpu.dot_dimension_numbers<[1], [0], [0], [1], [0, 0, 1, 1], [], []>} : vector<32x144xf32>, vector<144x128xf32>, vector<32x128xf32> -> vector<32x128xf32>
    %38 = arith.addf %32, %37 : vector<32x128xf32>
    %c0_44 = arith.constant 0 : index
    %c1_45 = arith.constant 1 : index
    %c0_46 = arith.constant 0 : index
    %39 = vector.load %arg30[%c0_44, %c1_45, %c0_46] : memref<2x18x144xf32, #tpu.memory_space<vmem>>, vector<2x16x144xf32>
    %40 = vector.shape_cast %39 : vector<2x16x144xf32> to vector<32x144xf32>
    %c1_47 = arith.constant 1 : index
    %c0_48 = arith.constant 0 : index
    %c0_49 = arith.constant 0 : index
    %41 = vector.load %arg4[%c1_47, %c0_48, %c0_49] : memref<3x144x128xf32, #tpu.memory_space<vmem>>, vector<1x144x128xf32>
    %42 = vector.shape_cast %41 : vector<1x144x128xf32> to vector<144x128xf32>
    %cst_50 = arith.constant dense<0.000000e+00> : vector<32x128xf32>
    %43 = tpu.matmul %40, %42, %cst_50 {dimension_numbers = #tpu.dot_dimension_numbers<[1], [0], [0], [1], [0, 0, 1, 1], [], []>} : vector<32x144xf32>, vector<144x128xf32>, vector<32x128xf32> -> vector<32x128xf32>
    %44 = arith.addf %38, %43 : vector<32x128xf32>
    %c0_51 = arith.constant 0 : index
    %c2_52 = arith.constant 2 : index
    %c0_53 = arith.constant 0 : index
    %45 = vector.load %arg30[%c0_51, %c2_52, %c0_53] : memref<2x18x144xf32, #tpu.memory_space<vmem>>, vector<2x16x144xf32>
    %46 = vector.shape_cast %45 : vector<2x16x144xf32> to vector<32x144xf32>
    %c2_54 = arith.constant 2 : index
    %c0_55 = arith.constant 0 : index
    %c0_56 = arith.constant 0 : index
    %47 = vector.load %arg4[%c2_54, %c0_55, %c0_56] : memref<3x144x128xf32, #tpu.memory_space<vmem>>, vector<1x144x128xf32>
    %48 = vector.shape_cast %47 : vector<1x144x128xf32> to vector<144x128xf32>
    %cst_57 = arith.constant dense<0.000000e+00> : vector<32x128xf32>
    %49 = tpu.matmul %46, %48, %cst_57 {dimension_numbers = #tpu.dot_dimension_numbers<[1], [0], [0], [1], [0, 0, 1, 1], [], []>} : vector<32x144xf32>, vector<144x128xf32>, vector<32x128xf32> -> vector<32x128xf32>
    %50 = arith.addf %44, %49 : vector<32x128xf32>
    %c0_58 = arith.constant 0 : index
    %c0_59 = arith.constant 0 : index
    %51 = vector.load %arg5[%c0_58, %c0_59] : memref<1x128xf32, #tpu.memory_space<vmem>>, vector<1x128xf32>
    %52 = vector.broadcast %51 : vector<1x128xf32> to vector<32x128xf32>
    %53 = arith.addf %50, %52 : vector<32x128xf32>
    %cst_60 = arith.constant 0.000000e+00 : f32
    %54 = vector.broadcast %cst_60 : f32 to vector<32x128xf32>
    %55 = arith.maximumf %53, %54 : vector<32x128xf32>
    %56 = vector.shape_cast %55 : vector<32x128xf32> to vector<2x16x128xf32>
    %c0_61 = arith.constant 0 : index
    %c1_62 = arith.constant 1 : index
    %c8_63 = arith.constant 8 : index
    %57 = vector.load %arg30[%c0_61, %c1_62, %c8_63] : memref<2x18x144xf32, #tpu.memory_space<vmem>>, vector<2x16x128xf32>
    tpu.vector_store %arg30[%c0_61, %c1_62, %c8_63], %56 {strides = array<i32>} : memref<2x18x144xf32, #tpu.memory_space<vmem>>, vector<2x16x128xf32>,
    %cst_64 = arith.constant 0.000000e+00 : f32
    %58 = vector.broadcast %cst_64 : f32 to vector<32x128xf32>
    %c0_65 = arith.constant 0 : index
    %c0_66 = arith.constant 0 : index
    %c0_67 = arith.constant 0 : index
    %59 = vector.load %arg30[%c0_65, %c0_66, %c0_67] : memref<2x18x144xf32, #tpu.memory_space<vmem>>, vector<2x16x144xf32>
    %60 = vector.shape_cast %59 : vector<2x16x144xf32> to vector<32x144xf32>
    %c0_68 = arith.constant 0 : index
    %c0_69 = arith.constant 0 : index
    %c0_70 = arith.constant 0 : index
    %61 = vector.load %arg6[%c0_68, %c0_69, %c0_70] : memref<3x144x128xf32, #tpu.memory_space<vmem>>, vector<1x144x128xf32>
    %62 = vector.shape_cast %61 : vector<1x144x128xf32> to vector<144x128xf32>
    %cst_71 = arith.constant dense<0.000000e+00> : vector<32x128xf32>
    %63 = tpu.matmul %60, %62, %cst_71 {dimension_numbers = #tpu.dot_dimension_numbers<[1], [0], [0], [1], [0, 0, 1, 1], [], []>} : vector<32x144xf32>, vector<144x128xf32>, vector<32x128xf32> -> vector<32x128xf32>
    %64 = arith.addf %58, %63 : vector<32x128xf32>
    %c0_72 = arith.constant 0 : index
    %c1_73 = arith.constant 1 : index
    %c0_74 = arith.constant 0 : index
    %65 = vector.load %arg30[%c0_72, %c1_73, %c0_74] : memref<2x18x144xf32, #tpu.memory_space<vmem>>, vector<2x16x144xf32>
    %66 = vector.shape_cast %65 : vector<2x16x144xf32> to vector<32x144xf32>
    %c1_75 = arith.constant 1 : index
    %c0_76 = arith.constant 0 : index
    %c0_77 = arith.constant 0 : index
    %67 = vector.load %arg6[%c1_75, %c0_76, %c0_77] : memref<3x144x128xf32, #tpu.memory_space<vmem>>, vector<1x144x128xf32>
    %68 = vector.shape_cast %67 : vector<1x144x128xf32> to vector<144x128xf32>
    %cst_78 = arith.constant dense<0.000000e+00> : vector<32x128xf32>
    %69 = tpu.matmul %66, %68, %cst_78 {dimension_numbers = #tpu.dot_dimension_numbers<[1], [0], [0], [1], [0, 0, 1, 1], [], []>} : vector<32x144xf32>, vector<144x128xf32>, vector<32x128xf32> -> vector<32x128xf32>
    %70 = arith.addf %64, %69 : vector<32x128xf32>
    %c0_79 = arith.constant 0 : index
    %c2_80 = arith.constant 2 : index
    %c0_81 = arith.constant 0 : index
    %71 = vector.load %arg30[%c0_79, %c2_80, %c0_81] : memref<2x18x144xf32, #tpu.memory_space<vmem>>, vector<2x16x144xf32>
    %72 = vector.shape_cast %71 : vector<2x16x144xf32> to vector<32x144xf32>
    %c2_82 = arith.constant 2 : index
    %c0_83 = arith.constant 0 : index
    %c0_84 = arith.constant 0 : index
    %73 = vector.load %arg6[%c2_82, %c0_83, %c0_84] : memref<3x144x128xf32, #tpu.memory_space<vmem>>, vector<1x144x128xf32>
    %74 = vector.shape_cast %73 : vector<1x144x128xf32> to vector<144x128xf32>
    %cst_85 = arith.constant dense<0.000000e+00> : vector<32x128xf32>
    %75 = tpu.matmul %72, %74, %cst_85 {dimension_numbers = #tpu.dot_dimension_numbers<[1], [0], [0], [1], [0, 0, 1, 1], [], []>} : vector<32x144xf32>, vector<144x128xf32>, vector<32x128xf32> -> vector<32x128xf32>
    %76 = arith.addf %70, %75 : vector<32x128xf32>
    %c0_86 = arith.constant 0 : index
    %c0_87 = arith.constant 0 : index
    %77 = vector.load %arg7[%c0_86, %c0_87] : memref<1x128xf32, #tpu.memory_space<vmem>>, vector<1x128xf32>
    %78 = vector.broadcast %77 : vector<1x128xf32> to vector<32x128xf32>
    %79 = arith.addf %76, %78 : vector<32x128xf32>
    %80 = arith.addf %79, %29 : vector<32x128xf32>
    %cst_88 = arith.constant 0.000000e+00 : f32
    %81 = vector.broadcast %cst_88 : f32 to vector<32x128xf32>
    %82 = arith.maximumf %80, %81 : vector<32x128xf32>
    %83 = vector.shape_cast %82 : vector<32x128xf32> to vector<2x16x128xf32>
    %cst_89 = arith.constant dense<0.000000e+00> : vector<2x128xf32>
    %84 = vector.multi_reduction <add>, %83, %cst_89 [1] : vector<2x16x128xf32> to vector<2x128xf32>
    %c0_90 = arith.constant 0 : index
    %c0_91 = arith.constant 0 : index
    %85 = vector.load %arg8[%c0_90, %c0_91] : memref<128x64xf32, #tpu.memory_space<vmem>>, vector<128x64xf32>
    %cst_92 = arith.constant dense<0.000000e+00> : vector<2x64xf32>
    %86 = tpu.matmul %84, %85, %cst_92 {dimension_numbers = #tpu.dot_dimension_numbers<[1], [0], [0], [1], [0, 0, 1, 1], [], []>} : vector<2x128xf32>, vector<128x64xf32>, vector<2x64xf32> -> vector<2x64xf32>
    %c0_93 = arith.constant 0 : index
    %c0_94 = arith.constant 0 : index
    %c0_95 = arith.constant 0 : index
    %87 = vector.load %arg9[%c0_93, %c0_94, %c0_95] : memref<2x8x16xf32, #tpu.memory_space<vmem>>, vector<2x8x16xf32>
    %88 = vector.shape_cast %87 : vector<2x8x16xf32> to vector<16x16xf32>
    %c0_96 = arith.constant 0 : index
    %c0_97 = arith.constant 0 : index
    %89 = vector.load %arg10[%c0_96, %c0_97] : memref<16x128xf32, #tpu.memory_space<vmem>>, vector<16x128xf32>
    %cst_98 = arith.constant dense<0.000000e+00> : vector<16x128xf32>
    %90 = tpu.matmul %88, %89, %cst_98 {dimension_numbers = #tpu.dot_dimension_numbers<[1], [0], [0], [1], [0, 0, 1, 1], [], []>} : vector<16x16xf32>, vector<16x128xf32>, vector<16x128xf32> -> vector<16x128xf32>
    %91 = vector.shape_cast %90 : vector<16x128xf32> to vector<2x8x128xf32>
    %c0_99 = arith.constant 0 : index
    %c0_100 = arith.constant 0 : index
    %92 = vector.load %arg11[%c0_99, %c0_100] : memref<16x128xf32, #tpu.memory_space<vmem>>, vector<16x128xf32>
    %cst_101 = arith.constant dense<0.000000e+00> : vector<16x128xf32>
    %93 = tpu.matmul %88, %92, %cst_101 {dimension_numbers = #tpu.dot_dimension_numbers<[1], [0], [0], [1], [0, 0, 1, 1], [], []>} : vector<16x16xf32>, vector<16x128xf32>, vector<16x128xf32> -> vector<16x128xf32>
    %94 = vector.shape_cast %93 : vector<16x128xf32> to vector<2x8x128xf32>
    %cst_102 = arith.constant 0.000000e+00 : f32
    %95 = vector.broadcast %cst_102 : f32 to vector<2x32xf32>
    %cst_103 = arith.constant 0.000000e+00 : f32
    %96 = vector.broadcast %cst_103 : f32 to vector<2x32xf32>
    %97 = vector.extract_strided_slice %91 {offsets = [0, 0, 0], sizes = [2, 1, 128], strides = [1, 1, 1]} : vector<2x8x128xf32> to vector<2x1x128xf32>
    %98 = vector.shape_cast %97 : vector<2x1x128xf32> to vector<2x128xf32>
    %99 = vector.extract_strided_slice %94 {offsets = [0, 7, 0], sizes = [2, 1, 128], strides = [1, 1, 1]} : vector<2x8x128xf32> to vector<2x1x128xf32>
    %100 = vector.shape_cast %99 : vector<2x1x128xf32> to vector<2x128xf32>
    %101 = arith.addf %98, %100 : vector<2x128xf32>
    %c0_104 = arith.constant 0 : index
    %c0_105 = arith.constant 0 : index
    %102 = vector.load %arg12[%c0_104, %c0_105] : memref<1x128xf32, #tpu.memory_space<vmem>>, vector<1x128xf32>
    %103 = vector.broadcast %102 : vector<1x128xf32> to vector<2x128xf32>
    %104 = arith.addf %101, %103 : vector<2x128xf32>
    %c0_106 = arith.constant 0 : index
    %c0_107 = arith.constant 0 : index
    %105 = vector.load %arg13[%c0_106, %c0_107] : memref<32x128xf32, #tpu.memory_space<vmem>>, vector<32x128xf32>
    %cst_108 = arith.constant dense<0.000000e+00> : vector<2x128xf32>
    %106 = tpu.matmul %95, %105, %cst_108 {dimension_numbers = #tpu.dot_dimension_numbers<[1], [0], [0], [1], [0, 0, 1, 1], [], []>} : vector<2x32xf32>, vector<32x128xf32>, vector<2x128xf32> -> vector<2x128xf32>
    %107 = arith.addf %104, %106 : vector<2x128xf32>
    %108 = vector.extract_strided_slice %107 {offsets = [0, 0], sizes = [2, 32], strides = [1, 1]} : vector<2x128xf32> to vector<2x32xf32>
    %109 = arith.negf %108 : vector<2x32xf32>
    %110 = math.exp %109 : vector<2x32xf32>
    %cst_109 = arith.constant 1.000000e+00 : f32
    %111 = vector.broadcast %cst_109 : f32 to vector<2x32xf32>
    %112 = arith.addf %111, %110 : vector<2x32xf32>
    %113 = arith.divf %111, %112 : vector<2x32xf32>
    %114 = vector.extract_strided_slice %107 {offsets = [0, 32], sizes = [2, 32], strides = [1, 1]} : vector<2x128xf32> to vector<2x32xf32>
    %115 = arith.negf %114 : vector<2x32xf32>
    %116 = math.exp %115 : vector<2x32xf32>
    %cst_110 = arith.constant 1.000000e+00 : f32
    %117 = vector.broadcast %cst_110 : f32 to vector<2x32xf32>
    %118 = arith.addf %117, %116 : vector<2x32xf32>
    %119 = arith.divf %117, %118 : vector<2x32xf32>
    %120 = vector.extract_strided_slice %107 {offsets = [0, 64], sizes = [2, 32], strides = [1, 1]} : vector<2x128xf32> to vector<2x32xf32>
    %121 = math.tanh %120 : vector<2x32xf32>
    %122 = vector.extract_strided_slice %107 {offsets = [0, 96], sizes = [2, 32], strides = [1, 1]} : vector<2x128xf32> to vector<2x32xf32>
    %123 = arith.negf %122 : vector<2x32xf32>
    %124 = math.exp %123 : vector<2x32xf32>
    %cst_111 = arith.constant 1.000000e+00 : f32
    %125 = vector.broadcast %cst_111 : f32 to vector<2x32xf32>
    %126 = arith.addf %125, %124 : vector<2x32xf32>
    %127 = arith.divf %125, %126 : vector<2x32xf32>
    %128 = arith.mulf %119, %96 : vector<2x32xf32>
    %129 = arith.mulf %113, %121 : vector<2x32xf32>
    %130 = arith.addf %128, %129 : vector<2x32xf32>
    %131 = math.tanh %130 : vector<2x32xf32>
    %132 = arith.mulf %127, %131 : vector<2x32xf32>
    %133 = vector.extract_strided_slice %91 {offsets = [0, 1, 0], sizes = [2, 1, 128], strides = [1, 1, 1]} : vector<2x8x128xf32> to vector<2x1x128xf32>
    %134 = vector.shape_cast %133 : vector<2x1x128xf32> to vector<2x128xf32>
    %135 = vector.extract_strided_slice %94 {offsets = [0, 6, 0], sizes = [2, 1, 128], strides = [1, 1, 1]} : vector<2x8x128xf32> to vector<2x1x128xf32>
    %136 = vector.shape_cast %135 : vector<2x1x128xf32> to vector<2x128xf32>
    %137 = arith.addf %134, %136 : vector<2x128xf32>
    %c0_112 = arith.constant 0 : index
    %c0_113 = arith.constant 0 : index
    %138 = vector.load %arg12[%c0_112, %c0_113] : memref<1x128xf32, #tpu.memory_space<vmem>>, vector<1x128xf32>
    %139 = vector.broadcast %138 : vector<1x128xf32> to vector<2x128xf32>
    %140 = arith.addf %137, %139 : vector<2x128xf32>
    %c0_114 = arith.constant 0 : index
    %c0_115 = arith.constant 0 : index
    %141 = vector.load %arg13[%c0_114, %c0_115] : memref<32x128xf32, #tpu.memory_space<vmem>>, vector<32x128xf32>
    %cst_116 = arith.constant dense<0.000000e+00> : vector<2x128xf32>
    %142 = tpu.matmul %132, %141, %cst_116 {dimension_numbers = #tpu.dot_dimension_numbers<[1], [0], [0], [1], [0, 0, 1, 1], [], []>} : vector<2x32xf32>, vector<32x128xf32>, vector<2x128xf32> -> vector<2x128xf32>
    %143 = arith.addf %140, %142 : vector<2x128xf32>
    %144 = vector.extract_strided_slice %143 {offsets = [0, 0], sizes = [2, 32], strides = [1, 1]} : vector<2x128xf32> to vector<2x32xf32>
    %145 = arith.negf %144 : vector<2x32xf32>
    %146 = math.exp %145 : vector<2x32xf32>
    %cst_117 = arith.constant 1.000000e+00 : f32
    %147 = vector.broadcast %cst_117 : f32 to vector<2x32xf32>
    %148 = arith.addf %147, %146 : vector<2x32xf32>
    %149 = arith.divf %147, %148 : vector<2x32xf32>
    %150 = vector.extract_strided_slice %143 {offsets = [0, 32], sizes = [2, 32], strides = [1, 1]} : vector<2x128xf32> to vector<2x32xf32>
    %151 = arith.negf %150 : vector<2x32xf32>
    %152 = math.exp %151 : vector<2x32xf32>
    %cst_118 = arith.constant 1.000000e+00 : f32
    %153 = vector.broadcast %cst_118 : f32 to vector<2x32xf32>
    %154 = arith.addf %153, %152 : vector<2x32xf32>
    %155 = arith.divf %153, %154 : vector<2x32xf32>
    %156 = vector.extract_strided_slice %143 {offsets = [0, 64], sizes = [2, 32], strides = [1, 1]} : vector<2x128xf32> to vector<2x32xf32>
    %157 = math.tanh %156 : vector<2x32xf32>
    %158 = vector.extract_strided_slice %143 {offsets = [0, 96], sizes = [2, 32], strides = [1, 1]} : vector<2x128xf32> to vector<2x32xf32>
    %159 = arith.negf %158 : vector<2x32xf32>
    %160 = math.exp %159 : vector<2x32xf32>
    %cst_119 = arith.constant 1.000000e+00 : f32
    %161 = vector.broadcast %cst_119 : f32 to vector<2x32xf32>
    %162 = arith.addf %161, %160 : vector<2x32xf32>
    %163 = arith.divf %161, %162 : vector<2x32xf32>
    %164 = arith.mulf %155, %130 : vector<2x32xf32>
    %165 = arith.mulf %149, %157 : vector<2x32xf32>
    %166 = arith.addf %164, %165 : vector<2x32xf32>
    %167 = math.tanh %166 : vector<2x32xf32>
    %168 = arith.mulf %163, %167 : vector<2x32xf32>
    %169 = vector.extract_strided_slice %91 {offsets = [0, 2, 0], sizes = [2, 1, 128], strides = [1, 1, 1]} : vector<2x8x128xf32> to vector<2x1x128xf32>
    %170 = vector.shape_cast %169 : vector<2x1x128xf32> to vector<2x128xf32>
    %171 = vector.extract_strided_slice %94 {offsets = [0, 5, 0], sizes = [2, 1, 128], strides = [1, 1, 1]} : vector<2x8x128xf32> to vector<2x1x128xf32>
    %172 = vector.shape_cast %171 : vector<2x1x128xf32> to vector<2x128xf32>
    %173 = arith.addf %170, %172 : vector<2x128xf32>
    %c0_120 = arith.constant 0 : index
    %c0_121 = arith.constant 0 : index
    %174 = vector.load %arg12[%c0_120, %c0_121] : memref<1x128xf32, #tpu.memory_space<vmem>>, vector<1x128xf32>
    %175 = vector.broadcast %174 : vector<1x128xf32> to vector<2x128xf32>
    %176 = arith.addf %173, %175 : vector<2x128xf32>
    %c0_122 = arith.constant 0 : index
    %c0_123 = arith.constant 0 : index
    %177 = vector.load %arg13[%c0_122, %c0_123] : memref<32x128xf32, #tpu.memory_space<vmem>>, vector<32x128xf32>
    %cst_124 = arith.constant dense<0.000000e+00> : vector<2x128xf32>
    %178 = tpu.matmul %168, %177, %cst_124 {dimension_numbers = #tpu.dot_dimension_numbers<[1], [0], [0], [1], [0, 0, 1, 1], [], []>} : vector<2x32xf32>, vector<32x128xf32>, vector<2x128xf32> -> vector<2x128xf32>
    %179 = arith.addf %176, %178 : vector<2x128xf32>
    %180 = vector.extract_strided_slice %179 {offsets = [0, 0], sizes = [2, 32], strides = [1, 1]} : vector<2x128xf32> to vector<2x32xf32>
    %181 = arith.negf %180 : vector<2x32xf32>
    %182 = math.exp %181 : vector<2x32xf32>
    %cst_125 = arith.constant 1.000000e+00 : f32
    %183 = vector.broadcast %cst_125 : f32 to vector<2x32xf32>
    %184 = arith.addf %183, %182 : vector<2x32xf32>
    %185 = arith.divf %183, %184 : vector<2x32xf32>
    %186 = vector.extract_strided_slice %179 {offsets = [0, 32], sizes = [2, 32], strides = [1, 1]} : vector<2x128xf32> to vector<2x32xf32>
    %187 = arith.negf %186 : vector<2x32xf32>
    %188 = math.exp %187 : vector<2x32xf32>
    %cst_126 = arith.constant 1.000000e+00 : f32
    %189 = vector.broadcast %cst_126 : f32 to vector<2x32xf32>
    %190 = arith.addf %189, %188 : vector<2x32xf32>
    %191 = arith.divf %189, %190 : vector<2x32xf32>
    %192 = vector.extract_strided_slice %179 {offsets = [0, 64], sizes = [2, 32], strides = [1, 1]} : vector<2x128xf32> to vector<2x32xf32>
    %193 = math.tanh %192 : vector<2x32xf32>
    %194 = vector.extract_strided_slice %179 {offsets = [0, 96], sizes = [2, 32], strides = [1, 1]} : vector<2x128xf32> to vector<2x32xf32>
    %195 = arith.negf %194 : vector<2x32xf32>
    %196 = math.exp %195 : vector<2x32xf32>
    %cst_127 = arith.constant 1.000000e+00 : f32
    %197 = vector.broadcast %cst_127 : f32 to vector<2x32xf32>
    %198 = arith.addf %197, %196 : vector<2x32xf32>
    %199 = arith.divf %197, %198 : vector<2x32xf32>
    %200 = arith.mulf %191, %166 : vector<2x32xf32>
    %201 = arith.mulf %185, %193 : vector<2x32xf32>
    %202 = arith.addf %200, %201 : vector<2x32xf32>
    %203 = math.tanh %202 : vector<2x32xf32>
    %204 = arith.mulf %199, %203 : vector<2x32xf32>
    %205 = vector.extract_strided_slice %91 {offsets = [0, 3, 0], sizes = [2, 1, 128], strides = [1, 1, 1]} : vector<2x8x128xf32> to vector<2x1x128xf32>
    %206 = vector.shape_cast %205 : vector<2x1x128xf32> to vector<2x128xf32>
    %207 = vector.extract_strided_slice %94 {offsets = [0, 4, 0], sizes = [2, 1, 128], strides = [1, 1, 1]} : vector<2x8x128xf32> to vector<2x1x128xf32>
    %208 = vector.shape_cast %207 : vector<2x1x128xf32> to vector<2x128xf32>
    %209 = arith.addf %206, %208 : vector<2x128xf32>
    %c0_128 = arith.constant 0 : index
    %c0_129 = arith.constant 0 : index
    %210 = vector.load %arg12[%c0_128, %c0_129] : memref<1x128xf32, #tpu.memory_space<vmem>>, vector<1x128xf32>
    %211 = vector.broadcast %210 : vector<1x128xf32> to vector<2x128xf32>
    %212 = arith.addf %209, %211 : vector<2x128xf32>
    %c0_130 = arith.constant 0 : index
    %c0_131 = arith.constant 0 : index
    %213 = vector.load %arg13[%c0_130, %c0_131] : memref<32x128xf32, #tpu.memory_space<vmem>>, vector<32x128xf32>
    %cst_132 = arith.constant dense<0.000000e+00> : vector<2x128xf32>
    %214 = tpu.matmul %204, %213, %cst_132 {dimension_numbers = #tpu.dot_dimension_numbers<[1], [0], [0], [1], [0, 0, 1, 1], [], []>} : vector<2x32xf32>, vector<32x128xf32>, vector<2x128xf32> -> vector<2x128xf32>
    %215 = arith.addf %212, %214 : vector<2x128xf32>
    %216 = vector.extract_strided_slice %215 {offsets = [0, 0], sizes = [2, 32], strides = [1, 1]} : vector<2x128xf32> to vector<2x32xf32>
    %217 = arith.negf %216 : vector<2x32xf32>
    %218 = math.exp %217 : vector<2x32xf32>
    %cst_133 = arith.constant 1.000000e+00 : f32
    %219 = vector.broadcast %cst_133 : f32 to vector<2x32xf32>
    %220 = arith.addf %219, %218 : vector<2x32xf32>
    %221 = arith.divf %219, %220 : vector<2x32xf32>
    %222 = vector.extract_strided_slice %215 {offsets = [0, 32], sizes = [2, 32], strides = [1, 1]} : vector<2x128xf32> to vector<2x32xf32>
    %223 = arith.negf %222 : vector<2x32xf32>
    %224 = math.exp %223 : vector<2x32xf32>
    %cst_134 = arith.constant 1.000000e+00 : f32
    %225 = vector.broadcast %cst_134 : f32 to vector<2x32xf32>
    %226 = arith.addf %225, %224 : vector<2x32xf32>
    %227 = arith.divf %225, %226 : vector<2x32xf32>
    %228 = vector.extract_strided_slice %215 {offsets = [0, 64], sizes = [2, 32], strides = [1, 1]} : vector<2x128xf32> to vector<2x32xf32>
    %229 = math.tanh %228 : vector<2x32xf32>
    %230 = vector.extract_strided_slice %215 {offsets = [0, 96], sizes = [2, 32], strides = [1, 1]} : vector<2x128xf32> to vector<2x32xf32>
    %231 = arith.negf %230 : vector<2x32xf32>
    %232 = math.exp %231 : vector<2x32xf32>
    %cst_135 = arith.constant 1.000000e+00 : f32
    %233 = vector.broadcast %cst_135 : f32 to vector<2x32xf32>
    %234 = arith.addf %233, %232 : vector<2x32xf32>
    %235 = arith.divf %233, %234 : vector<2x32xf32>
    %236 = arith.mulf %227, %202 : vector<2x32xf32>
    %237 = arith.mulf %221, %229 : vector<2x32xf32>
    %238 = arith.addf %236, %237 : vector<2x32xf32>
    %239 = math.tanh %238 : vector<2x32xf32>
    %240 = arith.mulf %235, %239 : vector<2x32xf32>
    %241 = vector.extract_strided_slice %91 {offsets = [0, 4, 0], sizes = [2, 1, 128], strides = [1, 1, 1]} : vector<2x8x128xf32> to vector<2x1x128xf32>
    %242 = vector.shape_cast %241 : vector<2x1x128xf32> to vector<2x128xf32>
    %243 = vector.extract_strided_slice %94 {offsets = [0, 3, 0], sizes = [2, 1, 128], strides = [1, 1, 1]} : vector<2x8x128xf32> to vector<2x1x128xf32>
    %244 = vector.shape_cast %243 : vector<2x1x128xf32> to vector<2x128xf32>
    %245 = arith.addf %242, %244 : vector<2x128xf32>
    %c0_136 = arith.constant 0 : index
    %c0_137 = arith.constant 0 : index
    %246 = vector.load %arg12[%c0_136, %c0_137] : memref<1x128xf32, #tpu.memory_space<vmem>>, vector<1x128xf32>
    %247 = vector.broadcast %246 : vector<1x128xf32> to vector<2x128xf32>
    %248 = arith.addf %245, %247 : vector<2x128xf32>
    %c0_138 = arith.constant 0 : index
    %c0_139 = arith.constant 0 : index
    %249 = vector.load %arg13[%c0_138, %c0_139] : memref<32x128xf32, #tpu.memory_space<vmem>>, vector<32x128xf32>
    %cst_140 = arith.constant dense<0.000000e+00> : vector<2x128xf32>
    %250 = tpu.matmul %240, %249, %cst_140 {dimension_numbers = #tpu.dot_dimension_numbers<[1], [0], [0], [1], [0, 0, 1, 1], [], []>} : vector<2x32xf32>, vector<32x128xf32>, vector<2x128xf32> -> vector<2x128xf32>
    %251 = arith.addf %248, %250 : vector<2x128xf32>
    %252 = vector.extract_strided_slice %251 {offsets = [0, 0], sizes = [2, 32], strides = [1, 1]} : vector<2x128xf32> to vector<2x32xf32>
    %253 = arith.negf %252 : vector<2x32xf32>
    %254 = math.exp %253 : vector<2x32xf32>
    %cst_141 = arith.constant 1.000000e+00 : f32
    %255 = vector.broadcast %cst_141 : f32 to vector<2x32xf32>
    %256 = arith.addf %255, %254 : vector<2x32xf32>
    %257 = arith.divf %255, %256 : vector<2x32xf32>
    %258 = vector.extract_strided_slice %251 {offsets = [0, 32], sizes = [2, 32], strides = [1, 1]} : vector<2x128xf32> to vector<2x32xf32>
    %259 = arith.negf %258 : vector<2x32xf32>
    %260 = math.exp %259 : vector<2x32xf32>
    %cst_142 = arith.constant 1.000000e+00 : f32
    %261 = vector.broadcast %cst_142 : f32 to vector<2x32xf32>
    %262 = arith.addf %261, %260 : vector<2x32xf32>
    %263 = arith.divf %261, %262 : vector<2x32xf32>
    %264 = vector.extract_strided_slice %251 {offsets = [0, 64], sizes = [2, 32], strides = [1, 1]} : vector<2x128xf32> to vector<2x32xf32>
    %265 = math.tanh %264 : vector<2x32xf32>
    %266 = vector.extract_strided_slice %251 {offsets = [0, 96], sizes = [2, 32], strides = [1, 1]} : vector<2x128xf32> to vector<2x32xf32>
    %267 = arith.negf %266 : vector<2x32xf32>
    %268 = math.exp %267 : vector<2x32xf32>
    %cst_143 = arith.constant 1.000000e+00 : f32
    %269 = vector.broadcast %cst_143 : f32 to vector<2x32xf32>
    %270 = arith.addf %269, %268 : vector<2x32xf32>
    %271 = arith.divf %269, %270 : vector<2x32xf32>
    %272 = arith.mulf %263, %238 : vector<2x32xf32>
    %273 = arith.mulf %257, %265 : vector<2x32xf32>
    %274 = arith.addf %272, %273 : vector<2x32xf32>
    %275 = math.tanh %274 : vector<2x32xf32>
    %276 = arith.mulf %271, %275 : vector<2x32xf32>
    %277 = vector.extract_strided_slice %91 {offsets = [0, 5, 0], sizes = [2, 1, 128], strides = [1, 1, 1]} : vector<2x8x128xf32> to vector<2x1x128xf32>
    %278 = vector.shape_cast %277 : vector<2x1x128xf32> to vector<2x128xf32>
    %279 = vector.extract_strided_slice %94 {offsets = [0, 2, 0], sizes = [2, 1, 128], strides = [1, 1, 1]} : vector<2x8x128xf32> to vector<2x1x128xf32>
    %280 = vector.shape_cast %279 : vector<2x1x128xf32> to vector<2x128xf32>
    %281 = arith.addf %278, %280 : vector<2x128xf32>
    %c0_144 = arith.constant 0 : index
    %c0_145 = arith.constant 0 : index
    %282 = vector.load %arg12[%c0_144, %c0_145] : memref<1x128xf32, #tpu.memory_space<vmem>>, vector<1x128xf32>
    %283 = vector.broadcast %282 : vector<1x128xf32> to vector<2x128xf32>
    %284 = arith.addf %281, %283 : vector<2x128xf32>
    %c0_146 = arith.constant 0 : index
    %c0_147 = arith.constant 0 : index
    %285 = vector.load %arg13[%c0_146, %c0_147] : memref<32x128xf32, #tpu.memory_space<vmem>>, vector<32x128xf32>
    %cst_148 = arith.constant dense<0.000000e+00> : vector<2x128xf32>
    %286 = tpu.matmul %276, %285, %cst_148 {dimension_numbers = #tpu.dot_dimension_numbers<[1], [0], [0], [1], [0, 0, 1, 1], [], []>} : vector<2x32xf32>, vector<32x128xf32>, vector<2x128xf32> -> vector<2x128xf32>
    %287 = arith.addf %284, %286 : vector<2x128xf32>
    %288 = vector.extract_strided_slice %287 {offsets = [0, 0], sizes = [2, 32], strides = [1, 1]} : vector<2x128xf32> to vector<2x32xf32>
    %289 = arith.negf %288 : vector<2x32xf32>
    %290 = math.exp %289 : vector<2x32xf32>
    %cst_149 = arith.constant 1.000000e+00 : f32
    %291 = vector.broadcast %cst_149 : f32 to vector<2x32xf32>
    %292 = arith.addf %291, %290 : vector<2x32xf32>
    %293 = arith.divf %291, %292 : vector<2x32xf32>
    %294 = vector.extract_strided_slice %287 {offsets = [0, 32], sizes = [2, 32], strides = [1, 1]} : vector<2x128xf32> to vector<2x32xf32>
    %295 = arith.negf %294 : vector<2x32xf32>
    %296 = math.exp %295 : vector<2x32xf32>
    %cst_150 = arith.constant 1.000000e+00 : f32
    %297 = vector.broadcast %cst_150 : f32 to vector<2x32xf32>
    %298 = arith.addf %297, %296 : vector<2x32xf32>
    %299 = arith.divf %297, %298 : vector<2x32xf32>
    %300 = vector.extract_strided_slice %287 {offsets = [0, 64], sizes = [2, 32], strides = [1, 1]} : vector<2x128xf32> to vector<2x32xf32>
    %301 = math.tanh %300 : vector<2x32xf32>
    %302 = vector.extract_strided_slice %287 {offsets = [0, 96], sizes = [2, 32], strides = [1, 1]} : vector<2x128xf32> to vector<2x32xf32>
    %303 = arith.negf %302 : vector<2x32xf32>
    %304 = math.exp %303 : vector<2x32xf32>
    %cst_151 = arith.constant 1.000000e+00 : f32
    %305 = vector.broadcast %cst_151 : f32 to vector<2x32xf32>
    %306 = arith.addf %305, %304 : vector<2x32xf32>
    %307 = arith.divf %305, %306 : vector<2x32xf32>
    %308 = arith.mulf %299, %274 : vector<2x32xf32>
    %309 = arith.mulf %293, %301 : vector<2x32xf32>
    %310 = arith.addf %308, %309 : vector<2x32xf32>
    %311 = math.tanh %310 : vector<2x32xf32>
    %312 = arith.mulf %307, %311 : vector<2x32xf32>
    %313 = vector.extract_strided_slice %91 {offsets = [0, 6, 0], sizes = [2, 1, 128], strides = [1, 1, 1]} : vector<2x8x128xf32> to vector<2x1x128xf32>
    %314 = vector.shape_cast %313 : vector<2x1x128xf32> to vector<2x128xf32>
    %315 = vector.extract_strided_slice %94 {offsets = [0, 1, 0], sizes = [2, 1, 128], strides = [1, 1, 1]} : vector<2x8x128xf32> to vector<2x1x128xf32>
    %316 = vector.shape_cast %315 : vector<2x1x128xf32> to vector<2x128xf32>
    %317 = arith.addf %314, %316 : vector<2x128xf32>
    %c0_152 = arith.constant 0 : index
    %c0_153 = arith.constant 0 : index
    %318 = vector.load %arg12[%c0_152, %c0_153] : memref<1x128xf32, #tpu.memory_space<vmem>>, vector<1x128xf32>
    %319 = vector.broadcast %318 : vector<1x128xf32> to vector<2x128xf32>
    %320 = arith.addf %317, %319 : vector<2x128xf32>
    %c0_154 = arith.constant 0 : index
    %c0_155 = arith.constant 0 : index
    %321 = vector.load %arg13[%c0_154, %c0_155] : memref<32x128xf32, #tpu.memory_space<vmem>>, vector<32x128xf32>
    %cst_156 = arith.constant dense<0.000000e+00> : vector<2x128xf32>
    %322 = tpu.matmul %312, %321, %cst_156 {dimension_numbers = #tpu.dot_dimension_numbers<[1], [0], [0], [1], [0, 0, 1, 1], [], []>} : vector<2x32xf32>, vector<32x128xf32>, vector<2x128xf32> -> vector<2x128xf32>
    %323 = arith.addf %320, %322 : vector<2x128xf32>
    %324 = vector.extract_strided_slice %323 {offsets = [0, 0], sizes = [2, 32], strides = [1, 1]} : vector<2x128xf32> to vector<2x32xf32>
    %325 = arith.negf %324 : vector<2x32xf32>
    %326 = math.exp %325 : vector<2x32xf32>
    %cst_157 = arith.constant 1.000000e+00 : f32
    %327 = vector.broadcast %cst_157 : f32 to vector<2x32xf32>
    %328 = arith.addf %327, %326 : vector<2x32xf32>
    %329 = arith.divf %327, %328 : vector<2x32xf32>
    %330 = vector.extract_strided_slice %323 {offsets = [0, 32], sizes = [2, 32], strides = [1, 1]} : vector<2x128xf32> to vector<2x32xf32>
    %331 = arith.negf %330 : vector<2x32xf32>
    %332 = math.exp %331 : vector<2x32xf32>
    %cst_158 = arith.constant 1.000000e+00 : f32
    %333 = vector.broadcast %cst_158 : f32 to vector<2x32xf32>
    %334 = arith.addf %333, %332 : vector<2x32xf32>
    %335 = arith.divf %333, %334 : vector<2x32xf32>
    %336 = vector.extract_strided_slice %323 {offsets = [0, 64], sizes = [2, 32], strides = [1, 1]} : vector<2x128xf32> to vector<2x32xf32>
    %337 = math.tanh %336 : vector<2x32xf32>
    %338 = vector.extract_strided_slice %323 {offsets = [0, 96], sizes = [2, 32], strides = [1, 1]} : vector<2x128xf32> to vector<2x32xf32>
    %339 = arith.negf %338 : vector<2x32xf32>
    %340 = math.exp %339 : vector<2x32xf32>
    %cst_159 = arith.constant 1.000000e+00 : f32
    %341 = vector.broadcast %cst_159 : f32 to vector<2x32xf32>
    %342 = arith.addf %341, %340 : vector<2x32xf32>
    %343 = arith.divf %341, %342 : vector<2x32xf32>
    %344 = arith.mulf %335, %310 : vector<2x32xf32>
    %345 = arith.mulf %329, %337 : vector<2x32xf32>
    %346 = arith.addf %344, %345 : vector<2x32xf32>
    %347 = math.tanh %346 : vector<2x32xf32>
    %348 = arith.mulf %343, %347 : vector<2x32xf32>
    %349 = vector.extract_strided_slice %91 {offsets = [0, 7, 0], sizes = [2, 1, 128], strides = [1, 1, 1]} : vector<2x8x128xf32> to vector<2x1x128xf32>
    %350 = vector.shape_cast %349 : vector<2x1x128xf32> to vector<2x128xf32>
    %351 = vector.extract_strided_slice %94 {offsets = [0, 0, 0], sizes = [2, 1, 128], strides = [1, 1, 1]} : vector<2x8x128xf32> to vector<2x1x128xf32>
    %352 = vector.shape_cast %351 : vector<2x1x128xf32> to vector<2x128xf32>
    %353 = arith.addf %350, %352 : vector<2x128xf32>
    %c0_160 = arith.constant 0 : index
    %c0_161 = arith.constant 0 : index
    %354 = vector.load %arg12[%c0_160, %c0_161] : memref<1x128xf32, #tpu.memory_space<vmem>>, vector<1x128xf32>
    %355 = vector.broadcast %354 : vector<1x128xf32> to vector<2x128xf32>
    %356 = arith.addf %353, %355 : vector<2x128xf32>
    %c0_162 = arith.constant 0 : index
    %c0_163 = arith.constant 0 : index
    %357 = vector.load %arg13[%c0_162, %c0_163] : memref<32x128xf32, #tpu.memory_space<vmem>>, vector<32x128xf32>
    %cst_164 = arith.constant dense<0.000000e+00> : vector<2x128xf32>
    %358 = tpu.matmul %348, %357, %cst_164 {dimension_numbers = #tpu.dot_dimension_numbers<[1], [0], [0], [1], [0, 0, 1, 1], [], []>} : vector<2x32xf32>, vector<32x128xf32>, vector<2x128xf32> -> vector<2x128xf32>
    %359 = arith.addf %356, %358 : vector<2x128xf32>
    %360 = vector.extract_strided_slice %359 {offsets = [0, 0], sizes = [2, 32], strides = [1, 1]} : vector<2x128xf32> to vector<2x32xf32>
    %361 = arith.negf %360 : vector<2x32xf32>
    %362 = math.exp %361 : vector<2x32xf32>
    %cst_165 = arith.constant 1.000000e+00 : f32
    %363 = vector.broadcast %cst_165 : f32 to vector<2x32xf32>
    %364 = arith.addf %363, %362 : vector<2x32xf32>
    %365 = arith.divf %363, %364 : vector<2x32xf32>
    %366 = vector.extract_strided_slice %359 {offsets = [0, 32], sizes = [2, 32], strides = [1, 1]} : vector<2x128xf32> to vector<2x32xf32>
    %367 = arith.negf %366 : vector<2x32xf32>
    %368 = math.exp %367 : vector<2x32xf32>
    %cst_166 = arith.constant 1.000000e+00 : f32
    %369 = vector.broadcast %cst_166 : f32 to vector<2x32xf32>
    %370 = arith.addf %369, %368 : vector<2x32xf32>
    %371 = arith.divf %369, %370 : vector<2x32xf32>
    %372 = vector.extract_strided_slice %359 {offsets = [0, 64], sizes = [2, 32], strides = [1, 1]} : vector<2x128xf32> to vector<2x32xf32>
    %373 = math.tanh %372 : vector<2x32xf32>
    %374 = vector.extract_strided_slice %359 {offsets = [0, 96], sizes = [2, 32], strides = [1, 1]} : vector<2x128xf32> to vector<2x32xf32>
    %375 = arith.negf %374 : vector<2x32xf32>
    %376 = math.exp %375 : vector<2x32xf32>
    %cst_167 = arith.constant 1.000000e+00 : f32
    %377 = vector.broadcast %cst_167 : f32 to vector<2x32xf32>
    %378 = arith.addf %377, %376 : vector<2x32xf32>
    %379 = arith.divf %377, %378 : vector<2x32xf32>
    %380 = arith.mulf %371, %346 : vector<2x32xf32>
    %381 = arith.mulf %365, %373 : vector<2x32xf32>
    %382 = arith.addf %380, %381 : vector<2x32xf32>
    %383 = math.tanh %382 : vector<2x32xf32>
    %384 = arith.mulf %379, %383 : vector<2x32xf32>
    %c0_168 = arith.constant 0 : index
    %c0_169 = arith.constant 0 : index
    %385 = vector.load %arg14[%c0_168, %c0_169] : memref<32x64xf32, #tpu.memory_space<vmem>>, vector<32x64xf32>
    %cst_170 = arith.constant dense<0.000000e+00> : vector<2x64xf32>
    %386 = tpu.matmul %384, %385, %cst_170 {dimension_numbers = #tpu.dot_dimension_numbers<[1], [0], [0], [1], [0, 0, 1, 1], [], []>} : vector<2x32xf32>, vector<32x64xf32>, vector<2x64xf32> -> vector<2x64xf32>
    %387 = arith.addf %86, %386 : vector<2x64xf32>
    %c0_171 = arith.constant 0 : index
    %c0_172 = arith.constant 0 : index
    %388 = vector.load %arg15[%c0_171, %c0_172] : memref<1x64xf32, #tpu.memory_space<vmem>>, vector<1x64xf32>
    %389 = vector.broadcast %388 : vector<1x64xf32> to vector<2x64xf32>
    %390 = arith.addf %387, %389 : vector<2x64xf32>
    %c0_173 = arith.constant 0 : index
    %c0_174 = arith.constant 0 : index
    %391 = vector.load %arg16[%c0_173, %c0_174] : memref<64x64xf32, #tpu.memory_space<vmem>>, vector<64x64xf32>
    %cst_175 = arith.constant dense<0.000000e+00> : vector<2x64xf32>
    %392 = tpu.matmul %390, %391, %cst_175 {dimension_numbers = #tpu.dot_dimension_numbers<[1], [0], [0], [1], [0, 0, 1, 1], [], []>} : vector<2x64xf32>, vector<64x64xf32>, vector<2x64xf32> -> vector<2x64xf32>
    %c0_176 = arith.constant 0 : index
    %c0_177 = arith.constant 0 : index
    %393 = vector.load %arg17[%c0_176, %c0_177] : memref<1x64xf32, #tpu.memory_space<vmem>>, vector<1x64xf32>
    %394 = vector.broadcast %393 : vector<1x64xf32> to vector<2x64xf32>
    %395 = arith.addf %392, %394 : vector<2x64xf32>
    %c0_178 = arith.constant 0 : index
    %c0_179 = arith.constant 0 : index
    %396 = vector.load %arg18[%c0_178, %c0_179] : memref<64x64xf32, #tpu.memory_space<vmem>>, vector<64x64xf32>
    %cst_180 = arith.constant dense<0.000000e+00> : vector<2x64xf32>
    %397 = tpu.matmul %395, %396, %cst_180 {dimension_numbers = #tpu.dot_dimension_numbers<[1], [0], [0], [1], [0, 0, 1, 1], [], []>} : vector<2x64xf32>, vector<64x64xf32>, vector<2x64xf32> -> vector<2x64xf32>
    %c0_181 = arith.constant 0 : index
    %c0_182 = arith.constant 0 : index
    %398 = vector.load %arg19[%c0_181, %c0_182] : memref<1x64xf32, #tpu.memory_space<vmem>>, vector<1x64xf32>
    %399 = vector.broadcast %398 : vector<1x64xf32> to vector<2x64xf32>
    %400 = arith.addf %397, %399 : vector<2x64xf32>
    %401 = arith.addf %390, %400 : vector<2x64xf32>
    %cst_183 = arith.constant dense<0.000000e+00> : vector<2xf32>
    %402 = vector.multi_reduction <add>, %401, %cst_183 [1] : vector<2x64xf32> to vector<2xf32>
    %403 = vector.shape_cast %402 : vector<2xf32> to vector<2x1xf32>
    %cst_184 = arith.constant 6.400000e+01 : f32
    %404 = vector.broadcast %cst_184 : f32 to vector<2x1xf32>
    %405 = arith.divf %403, %404 : vector<2x1xf32>
    %406 = vector.broadcast %405 : vector<2x1xf32> to vector<2x64xf32>
    %407 = arith.subf %401, %406 : vector<2x64xf32>
    %408 = arith.mulf %407, %407 : vector<2x64xf32>
    %cst_185 = arith.constant dense<0.000000e+00> : vector<2xf32>
    %409 = vector.multi_reduction <add>, %408, %cst_185 [1] : vector<2x64xf32> to vector<2xf32>
    %410 = vector.shape_cast %409 : vector<2xf32> to vector<2x1xf32>
    %cst_186 = arith.constant 6.400000e+01 : f32
    %411 = vector.broadcast %cst_186 : f32 to vector<2x1xf32>
    %412 = arith.divf %410, %411 : vector<2x1xf32>
    %413 = vector.broadcast %405 : vector<2x1xf32> to vector<2x64xf32>
    %414 = arith.subf %401, %413 : vector<2x64xf32>
    %cst_187 = arith.constant 9.99999974E-6 : f32
    %415 = vector.broadcast %cst_187 : f32 to vector<2x1xf32>
    %416 = arith.addf %412, %415 : vector<2x1xf32>
    %417 = math.rsqrt %416 : vector<2x1xf32>
    %418 = vector.broadcast %417 : vector<2x1xf32> to vector<2x64xf32>
    %419 = arith.mulf %414, %418 : vector<2x64xf32>
    %c0_188 = arith.constant 0 : index
    %c0_189 = arith.constant 0 : index
    %420 = vector.load %arg20[%c0_188, %c0_189] : memref<2x64xf32, #tpu.memory_space<vmem>>, vector<1x64xf32>
    %421 = vector.broadcast %420 : vector<1x64xf32> to vector<2x64xf32>
    %422 = arith.mulf %419, %421 : vector<2x64xf32>
    %c1_190 = arith.constant 1 : index
    %c0_191 = arith.constant 0 : index
    %423 = vector.load %arg20[%c1_190, %c0_191] : memref<2x64xf32, #tpu.memory_space<vmem>>, vector<1x64xf32>
    %424 = vector.broadcast %423 : vector<1x64xf32> to vector<2x64xf32>
    %425 = arith.addf %422, %424 : vector<2x64xf32>
    %c0_192 = arith.constant 0 : index
    %c0_193 = arith.constant 0 : index
    %426 = vector.load %arg21[%c0_192, %c0_193] : memref<64x128xf32, #tpu.memory_space<vmem>>, vector<64x128xf32>
    %cst_194 = arith.constant dense<0.000000e+00> : vector<2x128xf32>
    %427 = tpu.matmul %425, %426, %cst_194 {dimension_numbers = #tpu.dot_dimension_numbers<[1], [0], [0], [1], [0, 0, 1, 1], [], []>} : vector<2x64xf32>, vector<64x128xf32>, vector<2x128xf32> -> vector<2x128xf32>
    %c0_195 = arith.constant 0 : index
    %c0_196 = arith.constant 0 : index
    %428 = vector.load %arg22[%c0_195, %c0_196] : memref<1x128xf32, #tpu.memory_space<vmem>>, vector<1x128xf32>
    %429 = vector.broadcast %428 : vector<1x128xf32> to vector<2x128xf32>
    %430 = arith.addf %427, %429 : vector<2x128xf32>
    %cst_197 = arith.constant 0.000000e+00 : f32
    %431 = vector.broadcast %cst_197 : f32 to vector<2x128xf32>
    %432 = arith.maximumf %430, %431 : vector<2x128xf32>
    %c0_198 = arith.constant 0 : index
    %c0_199 = arith.constant 0 : index
    %433 = vector.load %arg23[%c0_198, %c0_199] : memref<128x64xf32, #tpu.memory_space<vmem>>, vector<128x64xf32>
    %cst_200 = arith.constant dense<0.000000e+00> : vector<2x64xf32>
    %434 = tpu.matmul %432, %433, %cst_200 {dimension_numbers = #tpu.dot_dimension_numbers<[1], [0], [0], [1], [0, 0, 1, 1], [], []>} : vector<2x128xf32>, vector<128x64xf32>, vector<2x64xf32> -> vector<2x64xf32>
    %c0_201 = arith.constant 0 : index
    %c0_202 = arith.constant 0 : index
    %435 = vector.load %arg24[%c0_201, %c0_202] : memref<1x64xf32, #tpu.memory_space<vmem>>, vector<1x64xf32>
    %436 = vector.broadcast %435 : vector<1x64xf32> to vector<2x64xf32>
    %437 = arith.addf %434, %436 : vector<2x64xf32>
    %438 = arith.addf %425, %437 : vector<2x64xf32>
    %cst_203 = arith.constant dense<0.000000e+00> : vector<2xf32>
    %439 = vector.multi_reduction <add>, %438, %cst_203 [1] : vector<2x64xf32> to vector<2xf32>
    %440 = vector.shape_cast %439 : vector<2xf32> to vector<2x1xf32>
    %cst_204 = arith.constant 6.400000e+01 : f32
    %441 = vector.broadcast %cst_204 : f32 to vector<2x1xf32>
    %442 = arith.divf %440, %441 : vector<2x1xf32>
    %443 = vector.broadcast %442 : vector<2x1xf32> to vector<2x64xf32>
    %444 = arith.subf %438, %443 : vector<2x64xf32>
    %445 = arith.mulf %444, %444 : vector<2x64xf32>
    %cst_205 = arith.constant dense<0.000000e+00> : vector<2xf32>
    %446 = vector.multi_reduction <add>, %445, %cst_205 [1] : vector<2x64xf32> to vector<2xf32>
    %447 = vector.shape_cast %446 : vector<2xf32> to vector<2x1xf32>
    %cst_206 = arith.constant 6.400000e+01 : f32
    %448 = vector.broadcast %cst_206 : f32 to vector<2x1xf32>
    %449 = arith.divf %447, %448 : vector<2x1xf32>
    %450 = vector.broadcast %442 : vector<2x1xf32> to vector<2x64xf32>
    %451 = arith.subf %438, %450 : vector<2x64xf32>
    %cst_207 = arith.constant 9.99999974E-6 : f32
    %452 = vector.broadcast %cst_207 : f32 to vector<2x1xf32>
    %453 = arith.addf %449, %452 : vector<2x1xf32>
    %454 = math.rsqrt %453 : vector<2x1xf32>
    %455 = vector.broadcast %454 : vector<2x1xf32> to vector<2x64xf32>
    %456 = arith.mulf %451, %455 : vector<2x64xf32>
    %c0_208 = arith.constant 0 : index
    %c0_209 = arith.constant 0 : index
    %457 = vector.load %arg25[%c0_208, %c0_209] : memref<2x64xf32, #tpu.memory_space<vmem>>, vector<1x64xf32>
    %458 = vector.broadcast %457 : vector<1x64xf32> to vector<2x64xf32>
    %459 = arith.mulf %456, %458 : vector<2x64xf32>
    %c1_210 = arith.constant 1 : index
    %c0_211 = arith.constant 0 : index
    %460 = vector.load %arg25[%c1_210, %c0_211] : memref<2x64xf32, #tpu.memory_space<vmem>>, vector<1x64xf32>
    %461 = vector.broadcast %460 : vector<1x64xf32> to vector<2x64xf32>
    %462 = arith.addf %459, %461 : vector<2x64xf32>
    %c0_212 = arith.constant 0 : index
    %c0_213 = arith.constant 0 : index
    %463 = vector.load %arg26[%c0_212, %c0_213] : memref<64x4xf32, #tpu.memory_space<vmem>>, vector<64x4xf32>
    %cst_214 = arith.constant dense<0.000000e+00> : vector<2x4xf32>
    %464 = tpu.matmul %462, %463, %cst_214 {dimension_numbers = #tpu.dot_dimension_numbers<[1], [0], [0], [1], [0, 0, 1, 1], [], []>} : vector<2x64xf32>, vector<64x4xf32>, vector<2x4xf32> -> vector<2x4xf32>
    %c0_215 = arith.constant 0 : index
    %c0_216 = arith.constant 0 : index
    %465 = vector.load %arg27[%c0_215, %c0_216] : memref<1x4xf32, #tpu.memory_space<vmem>>, vector<1x4xf32>
    %466 = vector.broadcast %465 : vector<1x4xf32> to vector<2x4xf32>
    %467 = arith.addf %464, %466 : vector<2x4xf32>
    %c0_217 = arith.constant 0 : index
    %c0_218 = arith.constant 0 : index
    %468 = vector.load %arg28[%c0_217, %c0_218] : memref<2x4xf32, #tpu.memory_space<vmem>>, vector<2x4xf32>
    tpu.vector_store %arg28[%c0_217, %c0_218], %467 {strides = array<i32>} : memref<2x4xf32, #tpu.memory_space<vmem>>, vector<2x4xf32>,
    return
  }
  func.func @transform_0(%arg0: i32) -> (i32, i32, i32) {
    %c0_i32 = arith.constant 0 : i32
    %c0_i32_0 = arith.constant 0 : i32
    %c0_i32_1 = arith.constant 0 : i32
    %c0_i32_2 = arith.constant 0 : i32
    return %c0_i32, %c0_i32_0, %c0_i32_1 : i32, i32, i32
  }
  func.func @transform_1(%arg0: i32) -> (i32, i32, i32) {
    %c0_i32 = arith.constant 0 : i32
    %c0_i32_0 = arith.constant 0 : i32
    %c0_i32_1 = arith.constant 0 : i32
    %c0_i32_2 = arith.constant 0 : i32
    return %c0_i32, %c0_i32_0, %c0_i32_1 : i32, i32, i32
  }
  func.func @transform_2(%arg0: i32) -> (i32, i32) {
    %c0_i32 = arith.constant 0 : i32
    %c0_i32_0 = arith.constant 0 : i32
    %c0_i32_1 = arith.constant 0 : i32
    return %c0_i32, %c0_i32_0 : i32, i32
  }
  func.func @transform_3(%arg0: i32) -> (i32, i32, i32) {
    %c0_i32 = arith.constant 0 : i32
    %c0_i32_0 = arith.constant 0 : i32
    %c0_i32_1 = arith.constant 0 : i32
    %c0_i32_2 = arith.constant 0 : i32
    return %c0_i32, %c0_i32_0, %c0_i32_1 : i32, i32, i32
  }
  func.func @transform_4(%arg0: i32) -> (i32, i32) {
    %c0_i32 = arith.constant 0 : i32
    %c0_i32_0 = arith.constant 0 : i32
    %c0_i32_1 = arith.constant 0 : i32
    return %c0_i32, %c0_i32_0 : i32, i32
  }
  func.func @transform_5(%arg0: i32) -> (i32, i32, i32) {
    %c0_i32 = arith.constant 0 : i32
    %c0_i32_0 = arith.constant 0 : i32
    %c0_i32_1 = arith.constant 0 : i32
    %c0_i32_2 = arith.constant 0 : i32
    return %c0_i32, %c0_i32_0, %c0_i32_1 : i32, i32, i32
  }
  func.func @transform_6(%arg0: i32) -> (i32, i32) {
    %c0_i32 = arith.constant 0 : i32
    %c0_i32_0 = arith.constant 0 : i32
    %c0_i32_1 = arith.constant 0 : i32
    return %c0_i32, %c0_i32_0 : i32, i32
  }
  func.func @transform_7(%arg0: i32) -> (i32, i32) {
    %c0_i32 = arith.constant 0 : i32
    %c0_i32_0 = arith.constant 0 : i32
    %c0_i32_1 = arith.constant 0 : i32
    return %c0_i32, %c0_i32_0 : i32, i32
  }
  func.func @transform_8(%arg0: i32) -> (i32, i32, i32) {
    %c0_i32 = arith.constant 0 : i32
    %c0_i32_0 = arith.constant 0 : i32
    %c0_i32_1 = arith.constant 0 : i32
    %c0_i32_2 = arith.constant 0 : i32
    return %c0_i32, %c0_i32_0, %c0_i32_1 : i32, i32, i32
  }
  func.func @transform_9(%arg0: i32) -> (i32, i32) {
    %c0_i32 = arith.constant 0 : i32
    %c0_i32_0 = arith.constant 0 : i32
    %c0_i32_1 = arith.constant 0 : i32
    return %c0_i32, %c0_i32_0 : i32, i32
  }
  func.func @transform_10(%arg0: i32) -> (i32, i32) {
    %c0_i32 = arith.constant 0 : i32
    %c0_i32_0 = arith.constant 0 : i32
    %c0_i32_1 = arith.constant 0 : i32
    return %c0_i32, %c0_i32_0 : i32, i32
  }
  func.func @transform_11(%arg0: i32) -> (i32, i32) {
    %c0_i32 = arith.constant 0 : i32
    %c0_i32_0 = arith.constant 0 : i32
    %c0_i32_1 = arith.constant 0 : i32
    return %c0_i32, %c0_i32_0 : i32, i32
  }
  func.func @transform_12(%arg0: i32) -> (i32, i32) {
    %c0_i32 = arith.constant 0 : i32
    %c0_i32_0 = arith.constant 0 : i32
    %c0_i32_1 = arith.constant 0 : i32
    return %c0_i32, %c0_i32_0 : i32, i32
  }
  func.func @transform_13(%arg0: i32) -> (i32, i32) {
    %c0_i32 = arith.constant 0 : i32
    %c0_i32_0 = arith.constant 0 : i32
    %c0_i32_1 = arith.constant 0 : i32
    return %c0_i32, %c0_i32_0 : i32, i32
  }
  func.func @transform_14(%arg0: i32) -> (i32, i32) {
    %c0_i32 = arith.constant 0 : i32
    %c0_i32_0 = arith.constant 0 : i32
    %c0_i32_1 = arith.constant 0 : i32
    return %c0_i32, %c0_i32_0 : i32, i32
  }
  func.func @transform_15(%arg0: i32) -> (i32, i32) {
    %c0_i32 = arith.constant 0 : i32
    %c0_i32_0 = arith.constant 0 : i32
    %c0_i32_1 = arith.constant 0 : i32
    return %c0_i32, %c0_i32_0 : i32, i32
  }
  func.func @transform_16(%arg0: i32) -> (i32, i32) {
    %c0_i32 = arith.constant 0 : i32
    %c0_i32_0 = arith.constant 0 : i32
    %c0_i32_1 = arith.constant 0 : i32
    return %c0_i32, %c0_i32_0 : i32, i32
  }
  func.func @transform_17(%arg0: i32) -> (i32, i32) {
    %c0_i32 = arith.constant 0 : i32
    %c0_i32_0 = arith.constant 0 : i32
    %c0_i32_1 = arith.constant 0 : i32
    return %c0_i32, %c0_i32_0 : i32, i32
  }
  func.func @transform_18(%arg0: i32) -> (i32, i32) {
    %c0_i32 = arith.constant 0 : i32
    %c0_i32_0 = arith.constant 0 : i32
    %c0_i32_1 = arith.constant 0 : i32
    return %c0_i32, %c0_i32_0 : i32, i32
  }
  func.func @transform_19(%arg0: i32) -> (i32, i32) {
    %c0_i32 = arith.constant 0 : i32
    %c0_i32_0 = arith.constant 0 : i32
    %c0_i32_1 = arith.constant 0 : i32
    return %c0_i32, %c0_i32_0 : i32, i32
  }
  func.func @transform_20(%arg0: i32) -> (i32, i32) {
    %c0_i32 = arith.constant 0 : i32
    %c0_i32_0 = arith.constant 0 : i32
    %c0_i32_1 = arith.constant 0 : i32
    return %c0_i32, %c0_i32_0 : i32, i32
  }
  func.func @transform_21(%arg0: i32) -> (i32, i32) {
    %c0_i32 = arith.constant 0 : i32
    %c0_i32_0 = arith.constant 0 : i32
    %c0_i32_1 = arith.constant 0 : i32
    return %c0_i32, %c0_i32_0 : i32, i32
  }
  func.func @transform_22(%arg0: i32) -> (i32, i32) {
    %c0_i32 = arith.constant 0 : i32
    %c0_i32_0 = arith.constant 0 : i32
    %c0_i32_1 = arith.constant 0 : i32
    return %c0_i32, %c0_i32_0 : i32, i32
  }
  func.func @transform_23(%arg0: i32) -> (i32, i32) {
    %c0_i32 = arith.constant 0 : i32
    %c0_i32_0 = arith.constant 0 : i32
    %c0_i32_1 = arith.constant 0 : i32
    return %c0_i32, %c0_i32_0 : i32, i32
  }
  func.func @transform_24(%arg0: i32) -> (i32, i32) {
    %c0_i32 = arith.constant 0 : i32
    %c0_i32_0 = arith.constant 0 : i32
    %c0_i32_1 = arith.constant 0 : i32
    return %c0_i32, %c0_i32_0 : i32, i32
  }
  func.func @transform_25(%arg0: i32) -> (i32, i32) {
    %c0_i32 = arith.constant 0 : i32
    %c0_i32_0 = arith.constant 0 : i32
    %c0_i32_1 = arith.constant 0 : i32
    return %c0_i32, %c0_i32_0 : i32, i32
  }
  func.func @transform_26(%arg0: i32) -> (i32, i32) {
    %c0_i32 = arith.constant 0 : i32
    %c0_i32_0 = arith.constant 0 : i32
    %c0_i32_1 = arith.constant 0 : i32
    return %c0_i32, %c0_i32_0 : i32, i32
  }
  func.func @transform_27(%arg0: i32) -> (i32, i32) {
    %c0_i32 = arith.constant 0 : i32
    %c0_i32_0 = arith.constant 0 : i32
    %c0_i32_1 = arith.constant 0 : i32
    return %c0_i32, %c0_i32_0 : i32, i32
  }
}

</mosaic_0001>

<llo_original>
// kernel: mmltf_forward.1
$region0: #{mmltf_forward.1}
  #allocation0 [shape = 'u32[]', space=smem, size = 0x4, offset = 0x4, fixed_abs, tag = 'smem constant byte address 0x4 - core index']
  #allocation1 [shape = 'u32[144,128]{1,0:T(1,128)}', space=vmem, size = 0x12000, scoped, tag = 'internal scratch']
  #allocation2 [shape = 'f32[2,18,72]{2,1,0:T(8,128)}', space=vmem, size = 0x6000, scoped, tag = 'scratch operand']
  #allocation3 [shape = 'f32[2,18,144]{2,1,0:T(8,128)}', space=vmem, size = 0xc000, scoped, tag = 'scratch operand']
  %s0 = inlined_call_operand.vmem [shape: f32[2,16,64], index: 0, kind: input, shape index: {}]
  %s1 = inlined_call_operand.vmem [shape: f32[3,72,128], index: 1, kind: input, shape index: {}]
  %s2 = inlined_call_operand.hbm [shape: f32[1,128], index: 2, kind: input, shape index: {}]
  %s3 = inlined_call_operand.vmem [shape: f32[3,144,128], index: 3, kind: input, shape index: {}]
  %s4 = inlined_call_operand.hbm [shape: f32[1,128], index: 4, kind: input, shape index: {}]
  %s5 = inlined_call_operand.vmem [shape: f32[3,144,128], index: 5, kind: input, shape index: {}]
  %s6 = inlined_call_operand.hbm [shape: f32[1,128], index: 6, kind: input, shape index: {}]
  %s7 = inlined_call_operand.vmem [shape: f32[128,64], index: 7, kind: input, shape index: {}]
  %s8 = inlined_call_operand.vmem [shape: f32[2,8,16], index: 8, kind: input, shape index: {}]
  %s9 = inlined_call_operand.hbm [shape: f32[16,128], index: 9, kind: input, shape index: {}]
  %s10 = inlined_call_operand.hbm [shape: f32[16,128], index: 10, kind: input, shape index: {}]
  %s11 = inlined_call_operand.hbm [shape: f32[1,128], index: 11, kind: input, shape index: {}]
  %s12 = inlined_call_operand.hbm [shape: f32[32,128], index: 12, kind: input, shape index: {}]
  %s13 = inlined_call_operand.hbm [shape: f32[32,64], index: 13, kind: input, shape index: {}]
  %s14 = inlined_call_operand.hbm [shape: f32[1,64], index: 14, kind: input, shape index: {}]
  %s15 = inlined_call_operand.hbm [shape: f32[64,64], index: 15, kind: input, shape index: {}]
  %s16 = inlined_call_operand.hbm [shape: f32[1,64], index: 16, kind: input, shape index: {}]
  %s17 = inlined_call_operand.hbm [shape: f32[64,64], index: 17, kind: input, shape index: {}]
  %s18 = inlined_call_operand.hbm [shape: f32[1,64], index: 18, kind: input, shape index: {}]
  %s19 = inlined_call_operand.hbm [shape: f32[2,64], index: 19, kind: input, shape index: {}]
  %s20 = inlined_call_operand.hbm [shape: f32[64,128], index: 20, kind: input, shape index: {}]
  %s21 = inlined_call_operand.hbm [shape: f32[1,128], index: 21, kind: input, shape index: {}]
  %s22 = inlined_call_operand.vmem [shape: f32[128,64], index: 22, kind: input, shape index: {}]
  %s23 = inlined_call_operand.hbm [shape: f32[1,64], index: 23, kind: input, shape index: {}]
  %s24 = inlined_call_operand.hbm [shape: f32[2,64], index: 24, kind: input, shape index: {}]
  %s25 = inlined_call_operand.vmem [shape: f32[64,4], index: 25, kind: input, shape index: {}]
  %s26 = inlined_call_operand.hbm [shape: f32[1,4], index: 26, kind: input, shape index: {}]
  %s27 = inlined_call_operand.hbm [shape: f32[2,4], index: 27, kind: output, shape index: {}]
  %s28 = sld [smem:[#allocation0]]
  $region194: #{mmltf_forward.1} parent=0
    _
  %s30 = ssub.s32 1, %s28
  %s31 = scalar_select 0, %s30, %s28
  $region1: #{mmltf_forward.1} parent=0
    #allocation4 [shape = 'u8[512]{0}', space=vmem, size = 0x400, scoped, tag = 'input window, operand 2, single buffered']
    #allocation5 [shape = 's32[1]{0}', space=sflag, size = 0x4, scoped, tag = 'scoped memory for mmltf_forward.1']
    #allocation6 [shape = 's32[1]{0}', space=sflag, size = 0x4, scoped, tag = 'scoped memory for mmltf_forward.1']
    #allocation7 [shape = 'u8[512]{0}', space=vmem, size = 0x400, scoped, tag = 'input window, operand 4, single buffered']
    #allocation8 [shape = 's32[1]{0}', space=sflag, size = 0x4, scoped, tag = 'scoped memory for mmltf_forward.1']
    #allocation9 [shape = 'u8[512]{0}', space=vmem, size = 0x400, scoped, tag = 'input window, operand 6, single buffered']
    #allocation10 [shape = 'u8[8192]{0}', space=vmem, size = 0x2000, scoped, tag = 'input window, operand 9, single buffered']
    #allocation11 [shape = 's32[1]{0}', space=sflag, size = 0x4, scoped, tag = 'scoped memory for mmltf_forward.1']
    #allocation12 [shape = 'u8[8192]{0}', space=vmem, size = 0x2000, scoped, tag = 'input window, operand 10, single buffered']
    #allocation13 [shape = 'u8[512]{0}', space=vmem, size = 0x400, scoped, tag = 'input window, operand 11, single buffered']
    #allocation14 [shape = 's32[1]{0}', space=sflag, size = 0x4, scoped, tag = 'scoped memory for mmltf_forward.1']
    #allocation15 [shape = 'u8[16384]{0}', space=vmem, size = 0x4000, scoped, tag = 'input window, operand 12, single buffered']
    #allocation16 [shape = 'u8[16384]{0}', space=vmem, size = 0x4000, scoped, tag = 'input window, operand 13, single buffered']
    #allocation17 [shape = 's32[1]{0}', space=sflag, size = 0x4, scoped, tag = 'scoped memory for mmltf_forward.1']
    #allocation18 [shape = 'u8[512]{0}', space=vmem, size = 0x400, scoped, tag = 'input window, operand 14, single buffered']
    #allocation19 [shape = 'u8[32768]{0}', space=vmem, size = 0x8000, scoped, tag = 'input window, operand 15, single buffered']
    #allocation20 [shape = 's32[1]{0}', space=sflag, size = 0x4, scoped, tag = 'scoped memory for mmltf_forward.1']
    #allocation21 [shape = 'u8[512]{0}', space=vmem, size = 0x400, scoped, tag = 'input window, operand 16, single buffered']
    #allocation22 [shape = 'u8[32768]{0}', space=vmem, size = 0x8000, scoped, tag = 'input window, operand 17, single buffered']
    #allocation23 [shape = 's32[1]{0}', space=sflag, size = 0x4, scoped, tag = 'scoped memory for mmltf_forward.1']
    #allocation24 [shape = 'u8[512]{0}', space=vmem, size = 0x400, scoped, tag = 'input window, operand 18, single buffered']
    #allocation25 [shape = 'u8[1024]{0}', space=vmem, size = 0x400, scoped, tag = 'input window, operand 19, single buffered']
    #allocation26 [shape = 's32[1]{0}', space=sflag, size = 0x4, scoped, tag = 'scoped memory for mmltf_forward.1']
    #allocation27 [shape = 'u8[32768]{0}', space=vmem, size = 0x8000, scoped, tag = 'input window, operand 20, single buffered']
    #allocation28 [shape = 'u8[512]{0}', space=vmem, size = 0x400, scoped, tag = 'input window, operand 21, single buffered']
    #allocation29 [shape = 's32[1]{0}', space=sflag, size = 0x4, scoped, tag = 'scoped memory for mmltf_forward.1']
    #allocation30 [shape = 'u8[512]{0}', space=vmem, size = 0x400, scoped, tag = 'input window, operand 23, single buffered']
    #allocation31 [shape = 'u8[1024]{0}', space=vmem, size = 0x400, scoped, tag = 'input window, operand 24, single buffered']
    #allocation32 [shape = 's32[1]{0}', space=sflag, size = 0x4, scoped, tag = 'scoped memory for mmltf_forward.1']
    #allocation33 [shape = 'u8[512]{0}', space=vmem, size = 0x400, scoped, tag = 'input window, operand 26, single buffered']
    #allocation34 [shape = 'u8[1024]{0}', space=vmem, size = 0x400, scoped, tag = 'output window, operand 0, single buffered']
    %32 = vsyncpa [#allocation5], 0
    %33 = vsyncpa [#allocation8], 0
    %34 = vsyncpa [#allocation11], 0
    %35 = vsyncpa [#allocation14], 0
    %36 = vsyncpa [#allocation17], 0
    %37 = vsyncpa [#allocation20], 0
    %38 = vsyncpa [#allocation23], 0
    %39 = vsyncpa [#allocation26], 0
    %40 = vsyncpa [#allocation29], 0
    %41 = vsyncpa [#allocation32], 0
    %42 = vsyncpa [#allocation6], 0
    // Predicated region
    $region2: #{mmltf_forward.1} parent=1 // pred_check
      _
    $region3: #{mmltf_forward.1} parent=1 // pred_check_branch
      %44 = sbr.rel (0) target = $region5
    $region4: #{mmltf_forward.1} parent=1 // pred_region
      _
    $region5: #{mmltf_forward.1} parent=1 // pred_fallthru
      _
    // Predicated region
    $region6: #{mmltf_forward.1} parent=1 // pred_check
      _
    $region7: #{mmltf_forward.1} parent=1 // pred_check_branch
      %46 = sbr.rel (0) target = $region9
    $region8: #{mmltf_forward.1} parent=1 // pred_region
      _
    $region9: #{mmltf_forward.1} parent=1 // pred_fallthru
      _
    // Predicated region
    $region10: #{mmltf_forward.1} parent=1 // pred_check
      _
    $region11: #{mmltf_forward.1} parent=1 // pred_check_branch
      %48 = sbr.rel (0) target = $region13
    $region12: #{mmltf_forward.1} parent=1 // pred_region
      %s50 = ssub.s32 16, 16
      %51 = vsyncadd [#allocation5], %s50
      %s53 = sshll.u32 [#allocation4], 4
      %s54 = int_to_ptr.vmem [resolvable:$true] %s53
      %56 = dma.hbm_to_vmem [thread:$0]  %s2, 16, %s54, [#allocation5]
    $region13: #{mmltf_forward.1} parent=1 // pred_fallthru
      _
    // Predicated region
    $region14: #{mmltf_forward.1} parent=1 // pred_check
      _
    $region15: #{mmltf_forward.1} parent=1 // pred_check_branch
      %58 = sbr.rel (0) target = $region17
    $region16: #{mmltf_forward.1} parent=1 // pred_region
      _
    $region17: #{mmltf_forward.1} parent=1 // pred_fallthru
      _
    // Predicated region
    $region18: #{mmltf_forward.1} parent=1 // pred_check
      _
    $region19: #{mmltf_forward.1} parent=1 // pred_check_branch
      %60 = sbr.rel (0) target = $region21
    $region20: #{mmltf_forward.1} parent=1 // pred_region
      %s62 = ssub.s32 16, 16
      %63 = vsyncadd [#allocation8], %s62
      %s65 = sshll.u32 [#allocation7], 4
      %s66 = int_to_ptr.vmem [resolvable:$true] %s65
      %68 = dma.hbm_to_vmem [thread:$0]  %s4, 16, %s66, [#allocation8]
    $region21: #{mmltf_forward.1} parent=1 // pred_fallthru
      _
    // Predicated region
    $region22: #{mmltf_forward.1} parent=1 // pred_check
      _
    $region23: #{mmltf_forward.1} parent=1 // pred_check_branch
      %70 = sbr.rel (0) target = $region25
    $region24: #{mmltf_forward.1} parent=1 // pred_region
      _
    $region25: #{mmltf_forward.1} parent=1 // pred_fallthru
      _
    // Predicated region
    $region26: #{mmltf_forward.1} parent=1 // pred_check
      _
    $region27: #{mmltf_forward.1} parent=1 // pred_check_branch
      %72 = sbr.rel (0) target = $region29
    $region28: #{mmltf_forward.1} parent=1 // pred_region
      %s74 = ssub.s32 16, 16
      %75 = vsyncadd [#allocation8], %s74
      %s77 = sshll.u32 [#allocation9], 4
      %s78 = int_to_ptr.vmem [resolvable:$true] %s77
      %80 = dma.hbm_to_vmem [thread:$0]  %s6, 16, %s78, [#allocation8]
    $region29: #{mmltf_forward.1} parent=1 // pred_fallthru
      _
    // Predicated region
    $region30: #{mmltf_forward.1} parent=1 // pred_check
      _
    $region31: #{mmltf_forward.1} parent=1 // pred_check_branch
      %82 = sbr.rel (0) target = $region33
    $region32: #{mmltf_forward.1} parent=1 // pred_region
      _
    $region33: #{mmltf_forward.1} parent=1 // pred_fallthru
      _
    // Predicated region
    $region34: #{mmltf_forward.1} parent=1 // pred_check
      _
    $region35: #{mmltf_forward.1} parent=1 // pred_check_branch
      %84 = sbr.rel (0) target = $region37
    $region36: #{mmltf_forward.1} parent=1 // pred_region
      _
    $region37: #{mmltf_forward.1} parent=1 // pred_fallthru
      _
    // Predicated region
    $region38: #{mmltf_forward.1} parent=1 // pred_check
      _
    $region39: #{mmltf_forward.1} parent=1 // pred_check_branch
      %86 = sbr.rel (0) target = $region41
    $region40: #{mmltf_forward.1} parent=1 // pred_region
      %s88 = ssub.s32 256, 256
      %89 = vsyncadd [#allocation11], %s88
      %s90 = sshll.u32 [#allocation10], 4
      %s91 = int_to_ptr.vmem [resolvable:$true] %s90
      %96 = dma.hbm_to_vmem [thread:$0]  %s9, 256, %s91, [#allocation11], 128, 128, 8
    $region41: #{mmltf_forward.1} parent=1 // pred_fallthru
      _
    // Predicated region
    $region42: #{mmltf_forward.1} parent=1 // pred_check
      _
    $region43: #{mmltf_forward.1} parent=1 // pred_check_branch
      %98 = sbr.rel (0) target = $region45
    $region44: #{mmltf_forward.1} parent=1 // pred_region
      %s100 = ssub.s32 256, 256
      %101 = vsyncadd [#allocation11], %s100
      %s102 = sshll.u32 [#allocation12], 4
      %s103 = int_to_ptr.vmem [resolvable:$true] %s102
      %108 = dma.hbm_to_vmem [thread:$0]  %s10, 256, %s103, [#allocation11], 128, 128, 8
    $region45: #{mmltf_forward.1} parent=1 // pred_fallthru
      _
    // Predicated region
    $region46: #{mmltf_forward.1} parent=1 // pred_check
      _
    $region47: #{mmltf_forward.1} parent=1 // pred_check_branch
      %110 = sbr.rel (0) target = $region49
    $region48: #{mmltf_forward.1} parent=1 // pred_region
      %s112 = ssub.s32 16, 16
      %113 = vsyncadd [#allocation14], %s112
      %s115 = sshll.u32 [#allocation13], 4
      %s116 = int_to_ptr.vmem [resolvable:$true] %s115
      %118 = dma.hbm_to_vmem [thread:$0]  %s11, 16, %s116, [#allocation14]
    $region49: #{mmltf_forward.1} parent=1 // pred_fallthru
      _
    // Predicated region
    $region50: #{mmltf_forward.1} parent=1 // pred_check
      _
    $region51: #{mmltf_forward.1} parent=1 // pred_check_branch
      %120 = sbr.rel (0) target = $region53
    $region52: #{mmltf_forward.1} parent=1 // pred_region
      %s122 = ssub.s32 512, 512
      %123 = vsyncadd [#allocation14], %s122
      %s124 = sshll.u32 [#allocation15], 4
      %s125 = int_to_ptr.vmem [resolvable:$true] %s124
      %130 = dma.hbm_to_vmem [thread:$0]  %s12, 512, %s125, [#allocation14], 128, 128, 8
    $region53: #{mmltf_forward.1} parent=1 // pred_fallthru
      _
    // Predicated region
    $region54: #{mmltf_forward.1} parent=1 // pred_check
      _
    $region55: #{mmltf_forward.1} parent=1 // pred_check_branch
      %132 = sbr.rel (0) target = $region57
    $region56: #{mmltf_forward.1} parent=1 // pred_region
      %s134 = ssub.s32 512, 512
      %135 = vsyncadd [#allocation17], %s134
      %s136 = sshll.u32 [#allocation16], 4
      %s137 = int_to_ptr.vmem [resolvable:$true] %s136
      %142 = dma.hbm_to_vmem [thread:$0]  %s13, 512, %s137, [#allocation17], 128, 128, 8
    $region57: #{mmltf_forward.1} parent=1 // pred_fallthru
      _
    // Predicated region
    $region58: #{mmltf_forward.1} parent=1 // pred_check
      _
    $region59: #{mmltf_forward.1} parent=1 // pred_check_branch
      %144 = sbr.rel (0) target = $region61
    $region60: #{mmltf_forward.1} parent=1 // pred_region
      %s146 = ssub.s32 16, 16
      %147 = vsyncadd [#allocation17], %s146
      %s149 = sshll.u32 [#allocation18], 4
      %s150 = int_to_ptr.vmem [resolvable:$true] %s149
      %152 = dma.hbm_to_vmem [thread:$0]  %s14, 16, %s150, [#allocation17]
    $region61: #{mmltf_forward.1} parent=1 // pred_fallthru
      _
    // Predicated region
    $region62: #{mmltf_forward.1} parent=1 // pred_check
      _
    $region63: #{mmltf_forward.1} parent=1 // pred_check_branch
      %154 = sbr.rel (0) target = $region65
    $region64: #{mmltf_forward.1} parent=1 // pred_region
      %s156 = ssub.s32 1024, 1024
      %157 = vsyncadd [#allocation20], %s156
      %s158 = sshll.u32 [#allocation19], 4
      %s159 = int_to_ptr.vmem [resolvable:$true] %s158
      %164 = dma.hbm_to_vmem [thread:$0]  %s15, 1024, %s159, [#allocation20], 128, 128, 8
    $region65: #{mmltf_forward.1} parent=1 // pred_fallthru
      _
    // Predicated region
    $region66: #{mmltf_forward.1} parent=1 // pred_check
      _
    $region67: #{mmltf_forward.1} parent=1 // pred_check_branch
      %166 = sbr.rel (0) target = $region69
    $region68: #{mmltf_forward.1} parent=1 // pred_region
      %s168 = ssub.s32 16, 16
      %169 = vsyncadd [#allocation20], %s168
      %s171 = sshll.u32 [#allocation21], 4
      %s172 = int_to_ptr.vmem [resolvable:$true] %s171
      %174 = dma.hbm_to_vmem [thread:$0]  %s16, 16, %s172, [#allocation20]
    $region69: #{mmltf_forward.1} parent=1 // pred_fallthru
      _
    // Predicated region
    $region70: #{mmltf_forward.1} parent=1 // pred_check
      _
    $region71: #{mmltf_forward.1} parent=1 // pred_check_branch
      %176 = sbr.rel (0) target = $region73
    $region72: #{mmltf_forward.1} parent=1 // pred_region
      %s178 = ssub.s32 1024, 1024
      %179 = vsyncadd [#allocation23], %s178
      %s180 = sshll.u32 [#allocation22], 4
      %s181 = int_to_ptr.vmem [resolvable:$true] %s180
      %186 = dma.hbm_to_vmem [thread:$0]  %s17, 1024, %s181, [#allocation23], 128, 128, 8
    $region73: #{mmltf_forward.1} parent=1 // pred_fallthru
      _
    // Predicated region
    $region74: #{mmltf_forward.1} parent=1 // pred_check
      _
    $region75: #{mmltf_forward.1} parent=1 // pred_check_branch
      %188 = sbr.rel (0) target = $region77
    $region76: #{mmltf_forward.1} parent=1 // pred_region
      %s190 = ssub.s32 16, 16
      %191 = vsyncadd [#allocation23], %s190
      %s193 = sshll.u32 [#allocation24], 4
      %s194 = int_to_ptr.vmem [resolvable:$true] %s193
      %196 = dma.hbm_to_vmem [thread:$0]  %s18, 16, %s194, [#allocation23]
    $region77: #{mmltf_forward.1} parent=1 // pred_fallthru
      _
    // Predicated region
    $region78: #{mmltf_forward.1} parent=1 // pred_check
      _
    $region79: #{mmltf_forward.1} parent=1 // pred_check_branch
      %198 = sbr.rel (0) target = $region81
    $region80: #{mmltf_forward.1} parent=1 // pred_region
      %s200 = ssub.s32 32, 32
      %201 = vsyncadd [#allocation26], %s200
      %s203 = sshll.u32 [#allocation25], 4
      %s204 = int_to_ptr.vmem [resolvable:$true] %s203
      %206 = dma.hbm_to_vmem [thread:$0]  %s19, 32, %s204, [#allocation26]
    $region81: #{mmltf_forward.1} parent=1 // pred_fallthru
      _
    // Predicated region
    $region82: #{mmltf_forward.1} parent=1 // pred_check
      _
    $region83: #{mmltf_forward.1} parent=1 // pred_check_branch
      %208 = sbr.rel (0) target = $region85
    $region84: #{mmltf_forward.1} parent=1 // pred_region
      %s210 = ssub.s32 1024, 1024
      %211 = vsyncadd [#allocation26], %s210
      %s212 = sshll.u32 [#allocation27], 4
      %s213 = int_to_ptr.vmem [resolvable:$true] %s212
      %218 = dma.hbm_to_vmem [thread:$0]  %s20, 1024, %s213, [#allocation26], 128, 128, 8
    $region85: #{mmltf_forward.1} parent=1 // pred_fallthru
      _
    // Predicated region
    $region86: #{mmltf_forward.1} parent=1 // pred_check
      _
    $region87: #{mmltf_forward.1} parent=1 // pred_check_branch
      %220 = sbr.rel (0) target = $region89
    $region88: #{mmltf_forward.1} parent=1 // pred_region
      %s222 = ssub.s32 16, 16
      %223 = vsyncadd [#allocation29], %s222
      %s225 = sshll.u32 [#allocation28], 4
      %s226 = int_to_ptr.vmem [resolvable:$true] %s225
      %228 = dma.hbm_to_vmem [thread:$0]  %s21, 16, %s226, [#allocation29]
    $region89: #{mmltf_forward.1} parent=1 // pred_fallthru
      _
    // Predicated region
    $region90: #{mmltf_forward.1} parent=1 // pred_check
      _
    $region91: #{mmltf_forward.1} parent=1 // pred_check_branch
      %230 = sbr.rel (0) target = $region93
    $region92: #{mmltf_forward.1} parent=1 // pred_region
      _
    $region93: #{mmltf_forward.1} parent=1 // pred_fallthru
      _
    // Predicated region
    $region94: #{mmltf_forward.1} parent=1 // pred_check
      _
    $region95: #{mmltf_forward.1} parent=1 // pred_check_branch
      %232 = sbr.rel (0) target = $region97
    $region96: #{mmltf_forward.1} parent=1 // pred_region
      %s234 = ssub.s32 16, 16
      %235 = vsyncadd [#allocation29], %s234
      %s237 = sshll.u32 [#allocation30], 4
      %s238 = int_to_ptr.vmem [resolvable:$true] %s237
      %240 = dma.hbm_to_vmem [thread:$0]  %s23, 16, %s238, [#allocation29]
    $region97: #{mmltf_forward.1} parent=1 // pred_fallthru
      _
    // Predicated region
    $region98: #{mmltf_forward.1} parent=1 // pred_check
      _
    $region99: #{mmltf_forward.1} parent=1 // pred_check_branch
      %242 = sbr.rel (0) target = $region101
    $region100: #{mmltf_forward.1} parent=1 // pred_region
      %s244 = ssub.s32 32, 32
      %245 = vsyncadd [#allocation32], %s244
      %s247 = sshll.u32 [#allocation31], 4
      %s248 = int_to_ptr.vmem [resolvable:$true] %s247
      %250 = dma.hbm_to_vmem [thread:$0]  %s24, 32, %s248, [#allocation32]
    $region101: #{mmltf_forward.1} parent=1 // pred_fallthru
      _
    // Predicated region
    $region102: #{mmltf_forward.1} parent=1 // pred_check
      _
    $region103: #{mmltf_forward.1} parent=1 // pred_check_branch
      %252 = sbr.rel (0) target = $region105
    $region104: #{mmltf_forward.1} parent=1 // pred_region
      _
    $region105: #{mmltf_forward.1} parent=1 // pred_fallthru
      _
    // Predicated region
    $region106: #{mmltf_forward.1} parent=1 // pred_check
      _
    $region107: #{mmltf_forward.1} parent=1 // pred_check_branch
      %254 = sbr.rel (0) target = $region109
    $region108: #{mmltf_forward.1} parent=1 // pred_region
      %s256 = ssub.s32 16, 16
      %257 = vsyncadd [#allocation32], %s256
      %s259 = sshll.u32 [#allocation33], 4
      %s260 = int_to_ptr.vmem [resolvable:$true] %s259
      %262 = dma.hbm_to_vmem [thread:$0]  %s26, 16, %s260, [#allocation32]
    $region109: #{mmltf_forward.1} parent=1 // pred_fallthru
      _
    // Predicated region
    $region110: #{mmltf_forward.1} parent=1 // pred_check
      _
    $region111: #{mmltf_forward.1} parent=1 // pred_check_branch
      %264 = sbr.rel (0) target = $region113
    $region112: #{mmltf_forward.1} parent=1 // pred_region
      %265 = dma.done [#allocation5], 16
    $region113: #{mmltf_forward.1} parent=1 // pred_fallthru
      _
    // Predicated region
    $region114: #{mmltf_forward.1} parent=1 // pred_check
      _
    $region115: #{mmltf_forward.1} parent=1 // pred_check_branch
      %267 = sbr.rel (0) target = $region117
    $region116: #{mmltf_forward.1} parent=1 // pred_region
      %268 = dma.done [#allocation8], 16
    $region117: #{mmltf_forward.1} parent=1 // pred_fallthru
      _
    // Predicated region
    $region118: #{mmltf_forward.1} parent=1 // pred_check
      _
    $region119: #{mmltf_forward.1} parent=1 // pred_check_branch
      %270 = sbr.rel (0) target = $region121
    $region120: #{mmltf_forward.1} parent=1 // pred_region
      %271 = dma.done [#allocation8], 16
    $region121: #{mmltf_forward.1} parent=1 // pred_fallthru
      _
    // Predicated region
    $region122: #{mmltf_forward.1} parent=1 // pred_check
      _
    $region123: #{mmltf_forward.1} parent=1 // pred_check_branch
      %273 = sbr.rel (0) target = $region125
    $region124: #{mmltf_forward.1} parent=1 // pred_region
      %274 = dma.done [#allocation11], 256
    $region125: #{mmltf_forward.1} parent=1 // pred_fallthru
      _
    // Predicated region
    $region126: #{mmltf_forward.1} parent=1 // pred_check
      _
    $region127: #{mmltf_forward.1} parent=1 // pred_check_branch
      %276 = sbr.rel (0) target = $region129
    $region128: #{mmltf_forward.1} parent=1 // pred_region
      %277 = dma.done [#allocation11], 256
    $region129: #{mmltf_forward.1} parent=1 // pred_fallthru
      _
    // Predicated region
    $region130: #{mmltf_forward.1} parent=1 // pred_check
      _
    $region131: #{mmltf_forward.1} parent=1 // pred_check_branch
      %279 = sbr.rel (0) target = $region133
    $region132: #{mmltf_forward.1} parent=1 // pred_region
      %280 = dma.done [#allocation14], 16
    $region133: #{mmltf_forward.1} parent=1 // pred_fallthru
      _
    // Predicated region
    $region134: #{mmltf_forward.1} parent=1 // pred_check
      _
    $region135: #{mmltf_forward.1} parent=1 // pred_check_branch
      %282 = sbr.rel (0) target = $region137
    $region136: #{mmltf_forward.1} parent=1 // pred_region
      %283 = dma.done [#allocation14], 512
    $region137: #{mmltf_forward.1} parent=1 // pred_fallthru
      _
    // Predicated region
    $region138: #{mmltf_forward.1} parent=1 // pred_check
      _
    $region139: #{mmltf_forward.1} parent=1 // pred_check_branch
      %285 = sbr.rel (0) target = $region141
    $region140: #{mmltf_forward.1} parent=1 // pred_region
      %286 = dma.done [#allocation17], 512
    $region141: #{mmltf_forward.1} parent=1 // pred_fallthru
      _
    // Predicated region
    $region142: #{mmltf_forward.1} parent=1 // pred_check
      _
    $region143: #{mmltf_forward.1} parent=1 // pred_check_branch
      %288 = sbr.rel (0) target = $region145
    $region144: #{mmltf_forward.1} parent=1 // pred_region
      %289 = dma.done [#allocation17], 16
    $region145: #{mmltf_forward.1} parent=1 // pred_fallthru
      _
    // Predicated region
    $region146: #{mmltf_forward.1} parent=1 // pred_check
      _
    $region147: #{mmltf_forward.1} parent=1 // pred_check_branch
      %291 = sbr.rel (0) target = $region149
    $region148: #{mmltf_forward.1} parent=1 // pred_region
      %292 = dma.done [#allocation20], 1024
    $region149: #{mmltf_forward.1} parent=1 // pred_fallthru
      _
    // Predicated region
    $region150: #{mmltf_forward.1} parent=1 // pred_check
      _
    $region151: #{mmltf_forward.1} parent=1 // pred_check_branch
      %294 = sbr.rel (0) target = $region153
    $region152: #{mmltf_forward.1} parent=1 // pred_region
      %295 = dma.done [#allocation20], 16
    $region153: #{mmltf_forward.1} parent=1 // pred_fallthru
      _
    // Predicated region
    $region154: #{mmltf_forward.1} parent=1 // pred_check
      _
    $region155: #{mmltf_forward.1} parent=1 // pred_check_branch
      %297 = sbr.rel (0) target = $region157
    $region156: #{mmltf_forward.1} parent=1 // pred_region
      %298 = dma.done [#allocation23], 1024
    $region157: #{mmltf_forward.1} parent=1 // pred_fallthru
      _
    // Predicated region
    $region158: #{mmltf_forward.1} parent=1 // pred_check
      _
    $region159: #{mmltf_forward.1} parent=1 // pred_check_branch
      %300 = sbr.rel (0) target = $region161
    $region160: #{mmltf_forward.1} parent=1 // pred_region
      %301 = dma.done [#allocation23], 16
    $region161: #{mmltf_forward.1} parent=1 // pred_fallthru
      _
    // Predicated region
    $region162: #{mmltf_forward.1} parent=1 // pred_check
      _
    $region163: #{mmltf_forward.1} parent=1 // pred_check_branch
      %303 = sbr.rel (0) target = $region165
    $region164: #{mmltf_forward.1} parent=1 // pred_region
      %304 = dma.done [#allocation26], 32
    $region165: #{mmltf_forward.1} parent=1 // pred_fallthru
      _
    // Predicated region
    $region166: #{mmltf_forward.1} parent=1 // pred_check
      _
    $region167: #{mmltf_forward.1} parent=1 // pred_check_branch
      %306 = sbr.rel (0) target = $region169
    $region168: #{mmltf_forward.1} parent=1 // pred_region
      %307 = dma.done [#allocation26], 1024
    $region169: #{mmltf_forward.1} parent=1 // pred_fallthru
      _
    // Predicated region
    $region170: #{mmltf_forward.1} parent=1 // pred_check
      _
    $region171: #{mmltf_forward.1} parent=1 // pred_check_branch
      %309 = sbr.rel (0) target = $region173
    $region172: #{mmltf_forward.1} parent=1 // pred_region
      %310 = dma.done [#allocation29], 16
    $region173: #{mmltf_forward.1} parent=1 // pred_fallthru
      _
    // Predicated region
    $region174: #{mmltf_forward.1} parent=1 // pred_check
      _
    $region175: #{mmltf_forward.1} parent=1 // pred_check_branch
      %312 = sbr.rel (0) target = $region177
    $region176: #{mmltf_forward.1} parent=1 // pred_region
      %313 = dma.done [#allocation29], 16
    $region177: #{mmltf_forward.1} parent=1 // pred_fallthru
      _
    // Predicated region
    $region178: #{mmltf_forward.1} parent=1 // pred_check
      _
    $region179: #{mmltf_forward.1} parent=1 // pred_check_branch
      %315 = sbr.rel (0) target = $region181
    $region180: #{mmltf_forward.1} parent=1 // pred_region
      %316 = dma.done [#allocation32], 32
    $region181: #{mmltf_forward.1} parent=1 // pred_fallthru
      _
    // Predicated region
    $region182: #{mmltf_forward.1} parent=1 // pred_check
      _
    $region183: #{mmltf_forward.1} parent=1 // pred_check_branch
      %318 = sbr.rel (0) target = $region185
    $region184: #{mmltf_forward.1} parent=1 // pred_region
      %319 = dma.done [#allocation32], 16
    $region185: #{mmltf_forward.1} parent=1 // pred_fallthru
      _
    %vm320 = vcmask 588800
    %321 = vst.msk [vmem:[#allocation2] sm:$0xff] %vm320, 0.0
    %322 = vst.msk [vmem:[#allocation2 + $0x8] sm:$0xff] %vm320, 0.0
    %vm323 = vcmask 582656
    %324 = vst.msk [vmem:[#allocation2 + $0x10] sm:$0x3] %vm323, 0.0
    %325 = vst.msk [vmem:[#allocation2 + $0x18] sm:$0xff] %vm320, 0.0
    %326 = vst.msk [vmem:[#allocation2 + $0x20] sm:$0xff] %vm320, 0.0
    %327 = vst.msk [vmem:[#allocation2 + $0x28] sm:$0x3] %vm323, 0.0
    %328 = vst [vmem:[#allocation3] sm:$0xff] 0.0
    %vm329 = vcmask 130048
    %330 = vst.msk [vmem:[#allocation3 + $0x8] sm:$0xff] %vm329, 0.0
    %331 = vst [vmem:[#allocation3 + $0x10] sm:$0xff] 0.0
    %332 = vst.msk [vmem:[#allocation3 + $0x18] sm:$0xff] %vm329, 0.0
    %333 = vst [vmem:[#allocation3 + $0x20] sm:$0x3] 0.0
    %vm334 = vcmask 123904
    %335 = vst.msk [vmem:[#allocation3 + $0x28] sm:$0x3] %vm334, 0.0
    %336 = vst [vmem:[#allocation3 + $0x30] sm:$0xff] 0.0
    %337 = vst.msk [vmem:[#allocation3 + $0x38] sm:$0xff] %vm329, 0.0
    %338 = vst [vmem:[#allocation3 + $0x40] sm:$0xff] 0.0
    %339 = vst.msk [vmem:[#allocation3 + $0x48] sm:$0xff] %vm329, 0.0
    %340 = vst [vmem:[#allocation3 + $0x50] sm:$0x3] 0.0
    %341 = vst.msk [vmem:[#allocation3 + $0x58] sm:$0x3] %vm334, 0.0
    %v342 = vld [vmem:[%s0] sm:$0xff]
    %v343 = vld [vmem:[%s0 + $0x8] sm:$0xff]
    %v344 = vld [vmem:[%s0 + $0x10] sm:$0xff]
    %v345 = vld [vmem:[%s0 + $0x18] sm:$0xff]
    %350 = vrot.lane.b32.xlu0 %v342, 4
    %v351 = vpop.permute.xlu0 %350
    %352 = vrot.lane.b32.xlu0 %v343, 4
    %v353 = vpop.permute.xlu0 %352
    %354 = vrot.lane.b32.xlu0 %v344, 4
    %v355 = vpop.permute.xlu0 %354
    %356 = vrot.lane.b32.xlu0 %v345, 4
    %v357 = vpop.permute.xlu0 %356
    %vm362 = vcmask 556064
    %363 = vst.msk [vmem:[#allocation2 + $0x1] sm:$0xff] %vm362, %v351
    %364 = vst.msk [vmem:[#allocation2 + $0x9] sm:$0xff] %vm362, %v353
    %365 = vst.msk [vmem:[#allocation2 + $0x19] sm:$0xff] %vm362, %v355
    %366 = vst.msk [vmem:[#allocation2 + $0x21] sm:$0xff] %vm362, %v357
    %v367 = vld [vmem:[#allocation2] sm:$0xff]
    %v368 = vld [vmem:[#allocation2 + $0x8] sm:$0xff]
    %v369 = vld [vmem:[#allocation2 + $0x18] sm:$0xff]
    %v370 = vld [vmem:[#allocation2 + $0x20] sm:$0xff]
    %v371 = vld [vmem:[%s1] sm:$0xff]
    %v372 = vld [vmem:[%s1 + $0x8] sm:$0xff]
    %v373 = vld [vmem:[%s1 + $0x10] sm:$0xff]
    %v374 = vld [vmem:[%s1 + $0x18] sm:$0xff]
    %v375 = vld [vmem:[%s1 + $0x20] sm:$0xff]
    %v376 = vld [vmem:[%s1 + $0x28] sm:$0xff]
    %v377 = vld [vmem:[%s1 + $0x30] sm:$0xff]
    %v378 = vld [vmem:[%s1 + $0x38] sm:$0xff]
    %v379 = vld [vmem:[%s1 + $0x40] sm:$0xff]
    %v380 = vld [vmem:[#allocation2 + $0x1] sm:$0xff]
    %v381 = vld [vmem:[#allocation2 + $0x9] sm:$0xff]
    %v382 = vld [vmem:[#allocation2 + $0x19] sm:$0xff]
    %v383 = vld [vmem:[#allocation2 + $0x21] sm:$0xff]
    %s384 = scalar_lea.vmem %s1, 72
    %v385 = vld [vmem:[%s384] sm:$0xff]
    %v386 = vld [vmem:[%s384 + $0x8] sm:$0xff]
    %v387 = vld [vmem:[%s384 + $0x10] sm:$0xff]
    %v388 = vld [vmem:[%s384 + $0x18] sm:$0xff]
    %v389 = vld [vmem:[%s384 + $0x20] sm:$0xff]
    %v390 = vld [vmem:[%s384 + $0x28] sm:$0xff]
    %v391 = vld [vmem:[%s384 + $0x30] sm:$0xff]
    %v392 = vld [vmem:[%s384 + $0x38] sm:$0xff]
    %v393 = vld [vmem:[%s384 + $0x40] sm:$0xff]
    %v395 = vsel %vm320, %v380, 0
    %v398 = vsel %vm320, %v381, 0
    %v401 = vsel %vm320, %v382, 0
    %v404 = vsel %vm320, %v383, 0
    %406 = vmatprep.subr.mxu0 0.0
    %407 = vmatpush1.msra.mxu0 0.0
    %408 = vmatprep.subr.mxu0 0.0
    %409 = vmatpush1.msra.mxu0 0.0
    %410 = vmatprep.subr.mxu0 0.0
    %411 = vmatpush1.msra.mxu0 0.0
    %412 = vmatprep.subr.mxu0 0.0
    %413 = vmatpush1.msra.mxu0 0.0
    %414 = vmatprep.subr.mxu0 0.0
    %415 = vmatpush1.msra.mxu0 0.0
    %416 = vmatprep.subr.mxu0 0.0
    %417 = vmatpush1.msra.mxu0 0.0
    %418 = vmatprep.subr.mxu0 0.0
    %419 = vmatpush1.msra.mxu0 0.0
    %420 = vmatprep.subr.mxu0 0.0
    %421 = vmatpush1.msra.mxu0 %v393
    %422 = vmatprep.subr.mxu0 0.0
    %423 = vmatpush1.msra.mxu0 %v392
    %424 = vmatprep.subr.mxu0 0.0
    %425 = vmatpush1.msra.mxu0 %v391
    %426 = vmatprep.subr.mxu0 0.0
    %427 = vmatpush1.msra.mxu0 %v390
    %428 = vmatprep.subr.mxu0 0.0
    %429 = vmatpush1.msra.mxu0 %v389
    %430 = vmatprep.subr.mxu0 0.0
    %431 = vmatpush1.msra.mxu0 %v388
    %432 = vmatprep.subr.mxu0 0.0
    %433 = vmatpush1.msra.mxu0 %v387
    %434 = vmatprep.subr.mxu0 0.0
    %435 = vmatpush1.msra.mxu0 %v386
    %436 = vmatprep.subr.mxu0 0.0
    %437 = vmatpush1.msra.mxu0 %v385
    %438 = vmatprep.subr.mxu0 0.0
    %439 = vmatpush2.msra.mxu0 0.0
    %440 = vmatprep.subr.mxu0 0.0
    %441 = vmatpush2.msra.mxu0 0.0
    %442 = vmatprep.subr.mxu0 0.0
    %443 = vmatpush2.msra.mxu0 0.0
    %444 = vmatprep.subr.mxu0 0.0
    %445 = vmatpush2.msra.mxu0 0.0
    %446 = vmatprep.subr.mxu0 0.0
    %447 = vmatpush2.msra.mxu0 0.0
    %448 = vmatprep.subr.mxu0 0.0
    %449 = vmatpush2.msra.mxu0 0.0
    %450 = vmatprep.subr.mxu0 0.0
    %451 = vmatpush2.msra.mxu0 0.0
    %452 = vmatprep.subr.mxu0 0.0
    %453 = vmatpush2.msra.mxu0 0.0
    %454 = vmatprep.subr.mxu0 0.0
    %455 = vmatpush2.msra.mxu0 0.0
    %456 = vmatprep.subr.mxu0 0.0
    %457 = vmatpush2.msra.mxu0 0.0
    %458 = vmatprep.subr.mxu0 0.0
    %459 = vmatpush2.msra.mxu0 0.0
    %460 = vmatprep.subr.mxu0 0.0
    %461 = vmatpush2.msra.mxu0 0.0
    %462 = vmatprep.subr.mxu0 0.0
    %463 = vmatpush2.msra.mxu0 0.0
    %464 = vmatprep.subr.mxu0 0.0
    %465 = vmatpush2.msra.mxu0 0.0
    %466 = vmatprep.subr.mxu0 0.0
    %467 = vmatpush2.msra.mxu0 0.0
    %468 = vmatprep.subr.mxu0 0.0
    %469 = vmatpush2.msra.mxu0 0.0
    %470 = vmatprep.mubr.f32.mxu0 0.0
    %471 = vmatmul.mubr.f32.gmra.mxu0 %v395
    %v472 = vpop.f32.mrf.mxu0
    %v473 = vadd.f32 0.0, %v472
    %v474 = vpop.f32.mrf.mxu0
    %475 = vmatprep.mubr.f32.mxu0 0.0
    %476 = vmatmul.mubr.f32.gmra.mxu0 %v398
    %v477 = vpop.f32.mrf.mxu0
    %v478 = vadd.f32 0.0, %v477
    %v479 = vpop.f32.mrf.mxu0
    %480 = vmatprep.mubr.f32.mxu0 0.0
    %481 = vmatmul.mubr.f32.gmra.mxu0 %v401
    %v482 = vpop.f32.mrf.mxu0
    %v483 = vadd.f32 0.0, %v482
    %v484 = vpop.f32.mrf.mxu0
    %485 = vmatprep.mubr.f32.mxu0 0.0
    %486 = vmatmul.mubr.f32.gmra.mxu0 %v404
    %v487 = vpop.f32.mrf.mxu0
    %v488 = vadd.f32 0.0, %v487
    %v489 = vpop.f32.mrf.mxu0
    %490 = vdwg.mxu0
    %v492 = vsel %vm320, %v367, 0
    %v495 = vsel %vm320, %v368, 0
    %v498 = vsel %vm320, %v369, 0
    %v501 = vsel %vm320, %v370, 0
    %503 = vmatprep.subr.mxu0 0.0
    %504 = vmatpush1.msra.mxu0 0.0
    %505 = vmatprep.subr.mxu0 0.0
    %506 = vmatpush1.msra.mxu0 0.0
    %507 = vmatprep.subr.mxu0 0.0
    %508 = vmatpush1.msra.mxu0 0.0
    %509 = vmatprep.subr.mxu0 0.0
    %510 = vmatpush1.msra.mxu0 0.0
    %511 = vmatprep.subr.mxu0 0.0
    %512 = vmatpush1.msra.mxu0 0.0
    %513 = vmatprep.subr.mxu0 0.0
    %514 = vmatpush1.msra.mxu0 0.0
    %515 = vmatprep.subr.mxu0 0.0
    %516 = vmatpush1.msra.mxu0 0.0
    %517 = vmatprep.subr.mxu0 0.0
    %518 = vmatpush1.msra.mxu0 %v379
    %519 = vmatprep.subr.mxu0 0.0
    %520 = vmatpush1.msra.mxu0 %v378
    %521 = vmatprep.subr.mxu0 0.0
    %522 = vmatpush1.msra.mxu0 %v377
    %523 = vmatprep.subr.mxu0 0.0
    %524 = vmatpush1.msra.mxu0 %v376
    %525 = vmatprep.subr.mxu0 0.0
    %526 = vmatpush1.msra.mxu0 %v375
    %527 = vmatprep.subr.mxu0 0.0
    %528 = vmatpush1.msra.mxu0 %v374
    %529 = vmatprep.subr.mxu0 0.0
    %530 = vmatpush1.msra.mxu0 %v373
    %531 = vmatprep.subr.mxu0 0.0
    %532 = vmatpush1.msra.mxu0 %v372
    %533 = vmatprep.subr.mxu0 0.0
    %534 = vmatpush1.msra.mxu0 %v371
    %535 = vmatprep.subr.mxu0 0.0
    %536 = vmatpush2.msra.mxu0 0.0
    %537 = vmatprep.subr.mxu0 0.0
    %538 = vmatpush2.msra.mxu0 0.0
    %539 = vmatprep.subr.mxu0 0.0
    %540 = vmatpush2.msra.mxu0 0.0
    %541 = vmatprep.subr.mxu0 0.0
    %542 = vmatpush2.msra.mxu0 0.0
    %543 = vmatprep.subr.mxu0 0.0
    %544 = vmatpush2.msra.mxu0 0.0
    %545 = vmatprep.subr.mxu0 0.0
    %546 = vmatpush2.msra.mxu0 0.0
    %547 = vmatprep.subr.mxu0 0.0
    %548 = vmatpush2.msra.mxu0 0.0
    %549 = vmatprep.subr.mxu0 0.0
    %550 = vmatpush2.msra.mxu0 0.0
    %551 = vmatprep.subr.mxu0 0.0
    %552 = vmatpush2.msra.mxu0 0.0
    %553 = vmatprep.subr.mxu0 0.0
    %554 = vmatpush2.msra.mxu0 0.0
    %555 = vmatprep.subr.mxu0 0.0
    %556 = vmatpush2.msra.mxu0 0.0
    %557 = vmatprep.subr.mxu0 0.0
    %558 = vmatpush2.msra.mxu0 0.0
    %559 = vmatprep.subr.mxu0 0.0
    %560 = vmatpush2.msra.mxu0 0.0
    %561 = vmatprep.subr.mxu0 0.0
    %562 = vmatpush2.msra.mxu0 0.0
    %563 = vmatprep.subr.mxu0 0.0
    %564 = vmatpush2.msra.mxu0 0.0
    %565 = vmatprep.subr.mxu0 0.0
    %566 = vmatpush2.msra.mxu0 0.0
    %567 = vmatprep.mubr.f32.mxu0 0.0
    %568 = vmatmul.mubr.f32.gmra.mxu0 %v492
    %v569 = vpop.f32.mrf.mxu0
    %v570 = vadd.f32 %v473, %v569
    %v571 = vpop.f32.mrf.mxu0
    %572 = vmatprep.mubr.f32.mxu0 0.0
    %573 = vmatmul.mubr.f32.gmra.mxu0 %v495
    %v574 = vpop.f32.mrf.mxu0
    %v575 = vadd.f32 %v478, %v574
    %v576 = vpop.f32.mrf.mxu0
    %577 = vmatprep.mubr.f32.mxu0 0.0
    %578 = vmatmul.mubr.f32.gmra.mxu0 %v498
    %v579 = vpop.f32.mrf.mxu0
    %v580 = vadd.f32 %v483, %v579
    %v581 = vpop.f32.mrf.mxu0
    %582 = vmatprep.mubr.f32.mxu0 0.0
    %583 = vmatmul.mubr.f32.gmra.mxu0 %v501
    %v584 = vpop.f32.mrf.mxu0
    %v585 = vadd.f32 %v488, %v584
    %v586 = vpop.f32.mrf.mxu0
    %587 = vdwg.mxu0
    %v588 = vld [vmem:[#allocation2 + $0x2] sm:$0xff]
    %v589 = vld [vmem:[#allocation2 + $0xa] sm:$0xff]
    %v590 = vld [vmem:[#allocation2 + $0x1a] sm:$0xff]
    %v591 = vld [vmem:[#allocation2 + $0x22] sm:$0xff]
    %s592 = scalar_lea.vmem %s1, 144
    %v593 = vld [vmem:[%s592] sm:$0xff]
    %v594 = vld [vmem:[%s592 + $0x8] sm:$0xff]
    %v595 = vld [vmem:[%s592 + $0x10] sm:$0xff]
    %v596 = vld [vmem:[%s592 + $0x18] sm:$0xff]
    %v597 = vld [vmem:[%s592 + $0x20] sm:$0xff]
    %v598 = vld [vmem:[%s592 + $0x28] sm:$0xff]
    %v599 = vld [vmem:[%s592 + $0x30] sm:$0xff]
    %v600 = vld [vmem:[%s592 + $0x38] sm:$0xff]
    %v601 = vld [vmem:[%s592 + $0x40] sm:$0xff]
    %v603 = vsel %vm320, %v588, 0
    %v606 = vsel %vm320, %v589, 0
    %v609 = vsel %vm320, %v590, 0
    %v612 = vsel %vm320, %v591, 0
    %614 = vmatprep.subr.mxu0 0.0
    %615 = vmatpush1.msra.mxu0 0.0
    %616 = vmatprep.subr.mxu0 0.0
    %617 = vmatpush1.msra.mxu0 0.0
    %618 = vmatprep.subr.mxu0 0.0
    %619 = vmatpush1.msra.mxu0 0.0
    %620 = vmatprep.subr.mxu0 0.0
    %621 = vmatpush1.msra.mxu0 0.0
    %622 = vmatprep.subr.mxu0 0.0
    %623 = vmatpush1.msra.mxu0 0.0
    %624 = vmatprep.subr.mxu0 0.0
    %625 = vmatpush1.msra.mxu0 0.0
    %626 = vmatprep.subr.mxu0 0.0
    %627 = vmatpush1.msra.mxu0 0.0
    %628 = vmatprep.subr.mxu0 0.0
    %629 = vmatpush1.msra.mxu0 %v601
    %630 = vmatprep.subr.mxu0 0.0
    %631 = vmatpush1.msra.mxu0 %v600
    %632 = vmatprep.subr.mxu0 0.0
    %633 = vmatpush1.msra.mxu0 %v599
    %634 = vmatprep.subr.mxu0 0.0
    %635 = vmatpush1.msra.mxu0 %v598
    %636 = vmatprep.subr.mxu0 0.0
    %637 = vmatpush1.msra.mxu0 %v597
    %638 = vmatprep.subr.mxu0 0.0
    %639 = vmatpush1.msra.mxu0 %v596
    %640 = vmatprep.subr.mxu0 0.0
    %641 = vmatpush1.msra.mxu0 %v595
    %642 = vmatprep.subr.mxu0 0.0
    %643 = vmatpush1.msra.mxu0 %v594
    %644 = vmatprep.subr.mxu0 0.0
    %645 = vmatpush1.msra.mxu0 %v593
    %646 = vmatprep.subr.mxu0 0.0
    %647 = vmatpush2.msra.mxu0 0.0
    %648 = vmatprep.subr.mxu0 0.0
    %649 = vmatpush2.msra.mxu0 0.0
    %650 = vmatprep.subr.mxu0 0.0
    %651 = vmatpush2.msra.mxu0 0.0
    %652 = vmatprep.subr.mxu0 0.0
    %653 = vmatpush2.msra.mxu0 0.0
    %654 = vmatprep.subr.mxu0 0.0
    %655 = vmatpush2.msra.mxu0 0.0
    %656 = vmatprep.subr.mxu0 0.0
    %657 = vmatpush2.msra.mxu0 0.0
    %658 = vmatprep.subr.mxu0 0.0
    %659 = vmatpush2.msra.mxu0 0.0
    %660 = vmatprep.subr.mxu0 0.0
    %661 = vmatpush2.msra.mxu0 0.0
    %662 = vmatprep.subr.mxu0 0.0
    %663 = vmatpush2.msra.mxu0 0.0
    %664 = vmatprep.subr.mxu0 0.0
    %665 = vmatpush2.msra.mxu0 0.0
    %666 = vmatprep.subr.mxu0 0.0
    %667 = vmatpush2.msra.mxu0 0.0
    %668 = vmatprep.subr.mxu0 0.0
    %669 = vmatpush2.msra.mxu0 0.0
    %670 = vmatprep.subr.mxu0 0.0
    %671 = vmatpush2.msra.mxu0 0.0
    %672 = vmatprep.subr.mxu0 0.0
    %673 = vmatpush2.msra.mxu0 0.0
    %674 = vmatprep.subr.mxu0 0.0
    %675 = vmatpush2.msra.mxu0 0.0
    %676 = vmatprep.subr.mxu0 0.0
    %677 = vmatpush2.msra.mxu0 0.0
    %678 = vmatprep.mubr.f32.mxu0 0.0
    %679 = vmatmul.mubr.f32.gmra.mxu0 %v603
    %v680 = vpop.f32.mrf.mxu0
    %v681 = vadd.f32 0.0, %v680
    %v682 = vpop.f32.mrf.mxu0
    %683 = vmatprep.mubr.f32.mxu0 0.0
    %684 = vmatmul.mubr.f32.gmra.mxu0 %v606
    %v685 = vpop.f32.mrf.mxu0
    %v686 = vadd.f32 0.0, %v685
    %v687 = vpop.f32.mrf.mxu0
    %688 = vmatprep.mubr.f32.mxu0 0.0
    %689 = vmatmul.mubr.f32.gmra.mxu0 %v609
    %v690 = vpop.f32.mrf.mxu0
    %v691 = vadd.f32 0.0, %v690
    %v692 = vpop.f32.mrf.mxu0
    %693 = vmatprep.mubr.f32.mxu0 0.0
    %694 = vmatmul.mubr.f32.gmra.mxu0 %v612
    %v695 = vpop.f32.mrf.mxu0
    %v696 = vadd.f32 0.0, %v695
    %v697 = vpop.f32.mrf.mxu0
    %698 = vdwg.mxu0
    %v699 = vadd.f32 %v570, %v681
    %v700 = vadd.f32 %v575, %v686
    %v701 = vadd.f32 %v580, %v691
    %v702 = vadd.f32 %v585, %v696
    %v703 = vld [vmem:[#allocation4] sm:$0x1]
    %v705 = vlaneseq
    %v706 = vshrl.u32 %v705, 7
    %v707 = vsub.s32 0, %v706
    %v708 = vrot.slane %v703, %v707
    %v710 = vadd.f32 %v699, %v708
    %v711 = vadd.f32 %v700, %v708
    %v712 = vadd.f32 %v701, %v708
    %v713 = vadd.f32 %v702, %v708
    %v714 = vmax.f32 %v710, 0.0
    %v715 = vmax.f32 %v711, 0.0
    %v716 = vmax.f32 %v712, 0.0
    %v717 = vmax.f32 %v713, 0.0
    %vm722 = vcmask 1040384
    %v723 = vrot.slane %v714, 7
    %v724 = vrot.slane %v715, 7
    %v725 = vsel %vm722, %v723, %v724
    %v726 = vrot.slane %v716, 7
    %v727 = vrot.slane %v717, 7
    %v728 = vsel %vm722, %v726, %v727
    %729 = vrot.lane.b32.xlu0 %v723, 8
    %v730 = vpop.permute.xlu0 %729
    %731 = vrot.lane.b32.xlu0 %v725, 8
    %v732 = vpop.permute.xlu0 %731
    %733 = vrot.lane.b32.xlu0 %v724, 8
    %v734 = vpop.permute.xlu0 %733
    %735 = vrot.lane.b32.xlu0 %v726, 8
    %v736 = vpop.permute.xlu0 %735
    %737 = vrot.lane.b32.xlu0 %v728, 8
    %v738 = vpop.permute.xlu0 %737
    %739 = vrot.lane.b32.xlu0 %v727, 8
    %v740 = vpop.permute.xlu0 %739
    %vm747 = vcmask 1047617
    %748 = vst.msk [vmem:[#allocation3] sm:$0xfe] %vm747, %v730
    %vm749 = vcmask 64513
    %750 = vst.msk [vmem:[#allocation3 + $0x8] sm:$0xfe] %vm749, %v730
    %vm751 = vcmask 1047616
    %752 = vst.msk [vmem:[#allocation3 + $0x10] sm:$0xff] %vm751, %v732
    %vm753 = vcmask 64512
    %754 = vst.msk [vmem:[#allocation3 + $0x18] sm:$0xff] %vm753, %v732
    %vm755 = vcmask 1040448
    %756 = vst.msk [vmem:[#allocation3 + $0x20] sm:$0x1] %vm755, %v734
    %vm757 = vcmask 57344
    %758 = vst.msk [vmem:[#allocation3 + $0x28] sm:$0x1] %vm757, %v734
    %759 = vst.msk [vmem:[#allocation3 + $0x30] sm:$0xfe] %vm747, %v736
    %760 = vst.msk [vmem:[#allocation3 + $0x38] sm:$0xfe] %vm749, %v736
    %761 = vst.msk [vmem:[#allocation3 + $0x40] sm:$0xff] %vm751, %v738
    %762 = vst.msk [vmem:[#allocation3 + $0x48] sm:$0xff] %vm753, %v738
    %763 = vst.msk [vmem:[#allocation3 + $0x50] sm:$0x1] %vm755, %v740
    %764 = vst.msk [vmem:[#allocation3 + $0x58] sm:$0x1] %vm757, %v740
    %v765 = vld [vmem:[#allocation3] sm:$0xff]
    %v766 = vld [vmem:[#allocation3 + $0x8] sm:$0xff]
    %v767 = vld [vmem:[#allocation3 + $0x10] sm:$0xff]
    %v768 = vld [vmem:[#allocation3 + $0x18] sm:$0xff]
    %v769 = vld [vmem:[#allocation3 + $0x30] sm:$0xff]
    %v770 = vld [vmem:[#allocation3 + $0x38] sm:$0xff]
    %v771 = vld [vmem:[#allocation3 + $0x40] sm:$0xff]
    %v772 = vld [vmem:[#allocation3 + $0x48] sm:$0xff]
    %v773 = vld [vmem:[%s3] sm:$0xff]
    %v774 = vld [vmem:[%s3 + $0x8] sm:$0xff]
    %v775 = vld [vmem:[%s3 + $0x10] sm:$0xff]
    %v776 = vld [vmem:[%s3 + $0x18] sm:$0xff]
    %v777 = vld [vmem:[%s3 + $0x20] sm:$0xff]
    %v778 = vld [vmem:[%s3 + $0x28] sm:$0xff]
    %v779 = vld [vmem:[%s3 + $0x30] sm:$0xff]
    %v780 = vld [vmem:[%s3 + $0x38] sm:$0xff]
    %v781 = vld [vmem:[%s3 + $0x40] sm:$0xff]
    %v782 = vld [vmem:[%s3 + $0x48] sm:$0xff]
    %v783 = vld [vmem:[%s3 + $0x50] sm:$0xff]
    %v784 = vld [vmem:[%s3 + $0x58] sm:$0xff]
    %v785 = vld [vmem:[%s3 + $0x60] sm:$0xff]
    %v786 = vld [vmem:[%s3 + $0x68] sm:$0xff]
    %v787 = vld [vmem:[%s3 + $0x70] sm:$0xff]
    %v788 = vld [vmem:[%s3 + $0x78] sm:$0xff]
    %v789 = vld [vmem:[%s3 + $0x80] sm:$0xff]
    %v790 = vld [vmem:[%s3 + $0x88] sm:$0xff]
    %v791 = vld [vmem:[#allocation3] sm:$0xfe]
    %v792 = vld [vmem:[#allocation3 + $0x8] sm:$0xfe]
    %v793 = vld [vmem:[#allocation3 + $0x20] sm:$0x1]
    %v794 = vld [vmem:[#allocation3 + $0x28] sm:$0x1]
    %v795 = vld [vmem:[#allocation3 + $0x30] sm:$0xfe]
    %v796 = vld [vmem:[#allocation3 + $0x38] sm:$0xfe]
    %v797 = vld [vmem:[#allocation3 + $0x50] sm:$0x1]
    %v798 = vld [vmem:[#allocation3 + $0x58] sm:$0x1]
    %vm811 = vcmask 1046528
    %v812 = vrot.slane %v791, 1
    %v813 = vrot.slane %v767, 1
    %v814 = vsel %vm811, %v812, %v813
    %v815 = vrot.slane %v792, 1
    %v816 = vrot.slane %v768, 1
    %v817 = vsel %vm811, %v815, %v816
    %v818 = vrot.slane %v793, 1
    %v819 = vsel %vm811, %v813, %v818
    %v820 = vrot.slane %v794, 1
    %v821 = vsel %vm811, %v816, %v820
    %v822 = vrot.slane %v795, 1
    %v823 = vrot.slane %v771, 1
    %v824 = vsel %vm811, %v822, %v823
    %v825 = vrot.slane %v796, 1
    %v826 = vrot.slane %v772, 1
    %v827 = vsel %vm811, %v825, %v826
    %v828 = vrot.slane %v797, 1
    %v829 = vsel %vm811, %v823, %v828
    %v830 = vrot.slane %v798, 1
    %v831 = vsel %vm811, %v826, %v830
    %s836 = scalar_lea.vmem %s3, 144
    %v837 = vld [vmem:[%s836] sm:$0xff]
    %v838 = vld [vmem:[%s836 + $0x8] sm:$0xff]
    %v839 = vld [vmem:[%s836 + $0x10] sm:$0xff]
    %v840 = vld [vmem:[%s836 + $0x18] sm:$0xff]
    %v841 = vld [vmem:[%s836 + $0x20] sm:$0xff]
    %v842 = vld [vmem:[%s836 + $0x28] sm:$0xff]
    %v843 = vld [vmem:[%s836 + $0x30] sm:$0xff]
    %v844 = vld [vmem:[%s836 + $0x38] sm:$0xff]
    %v845 = vld [vmem:[%s836 + $0x40] sm:$0xff]
    %v846 = vld [vmem:[%s836 + $0x48] sm:$0xff]
    %v847 = vld [vmem:[%s836 + $0x50] sm:$0xff]
    %v848 = vld [vmem:[%s836 + $0x58] sm:$0xff]
    %v849 = vld [vmem:[%s836 + $0x60] sm:$0xff]
    %v850 = vld [vmem:[%s836 + $0x68] sm:$0xff]
    %v851 = vld [vmem:[%s836 + $0x70] sm:$0xff]
    %v852 = vld [vmem:[%s836 + $0x78] sm:$0xff]
    %v853 = vld [vmem:[%s836 + $0x80] sm:$0xff]
    %v854 = vld [vmem:[%s836 + $0x88] sm:$0xff]
    %v855 = vsel %vm329, %v817, 0
    %v857 = vsel %vm329, %v821, 0
    %v859 = vsel %vm329, %v827, 0
    %v861 = vsel %vm329, %v831, 0
    %863 = vmatprep.subr.mxu0 0.0
    %864 = vmatpush1.msra.mxu0 %v852
    %865 = vmatprep.subr.mxu0 0.0
    %866 = vmatpush1.msra.mxu0 %v851
    %867 = vmatprep.subr.mxu0 0.0
    %868 = vmatpush1.msra.mxu0 %v850
    %869 = vmatprep.subr.mxu0 0.0
    %870 = vmatpush1.msra.mxu0 %v849
    %871 = vmatprep.subr.mxu0 0.0
    %872 = vmatpush1.msra.mxu0 %v848
    %873 = vmatprep.subr.mxu0 0.0
    %874 = vmatpush1.msra.mxu0 %v847
    %875 = vmatprep.subr.mxu0 0.0
    %876 = vmatpush1.msra.mxu0 %v846
    %877 = vmatprep.subr.mxu0 0.0
    %878 = vmatpush1.msra.mxu0 %v845
    %879 = vmatprep.subr.mxu0 0.0
    %880 = vmatpush1.msra.mxu0 %v844
    %881 = vmatprep.subr.mxu0 0.0
    %882 = vmatpush1.msra.mxu0 %v843
    %883 = vmatprep.subr.mxu0 0.0
    %884 = vmatpush1.msra.mxu0 %v842
    %885 = vmatprep.subr.mxu0 0.0
    %886 = vmatpush1.msra.mxu0 %v841
    %887 = vmatprep.subr.mxu0 0.0
    %888 = vmatpush1.msra.mxu0 %v840
    %889 = vmatprep.subr.mxu0 0.0
    %890 = vmatpush1.msra.mxu0 %v839
    %891 = vmatprep.subr.mxu0 0.0
    %892 = vmatpush1.msra.mxu0 %v838
    %893 = vmatprep.subr.mxu0 0.0
    %894 = vmatpush1.msra.mxu0 %v837
    %895 = vmatprep.subr.mxu0 0.0
    %896 = vmatpush2.msra.mxu0 0.0
    %897 = vmatprep.subr.mxu0 0.0
    %898 = vmatpush2.msra.mxu0 0.0
    %899 = vmatprep.subr.mxu0 0.0
    %900 = vmatpush2.msra.mxu0 0.0
    %901 = vmatprep.subr.mxu0 0.0
    %902 = vmatpush2.msra.mxu0 0.0
    %903 = vmatprep.subr.mxu0 0.0
    %904 = vmatpush2.msra.mxu0 0.0
    %905 = vmatprep.subr.mxu0 0.0
    %906 = vmatpush2.msra.mxu0 0.0
    %907 = vmatprep.subr.mxu0 0.0
    %908 = vmatpush2.msra.mxu0 0.0
    %909 = vmatprep.subr.mxu0 0.0
    %910 = vmatpush2.msra.mxu0 0.0
    %911 = vmatprep.subr.mxu0 0.0
    %912 = vmatpush2.msra.mxu0 0.0
    %913 = vmatprep.subr.mxu0 0.0
    %914 = vmatpush2.msra.mxu0 0.0
    %915 = vmatprep.subr.mxu0 0.0
    %916 = vmatpush2.msra.mxu0 0.0
    %917 = vmatprep.subr.mxu0 0.0
    %918 = vmatpush2.msra.mxu0 0.0
    %919 = vmatprep.subr.mxu0 0.0
    %920 = vmatpush2.msra.mxu0 0.0
    %921 = vmatprep.subr.mxu0 0.0
    %922 = vmatpush2.msra.mxu0 0.0
    %923 = vmatprep.subr.mxu0 0.0
    %924 = vmatpush2.msra.mxu0 %v854
    %925 = vmatprep.subr.mxu0 0.0
    %926 = vmatpush2.msra.mxu0 %v853
    %927 = vmatprep.mubr.f32.mxu0 %v855
    %928 = vmatmul.mubr.f32.gmra.mxu0 %v814
    %v929 = vpop.f32.mrf.mxu0
    %v930 = vadd.f32 0.0, %v929
    %v931 = vpop.f32.mrf.mxu0
    %932 = vmatprep.mubr.f32.mxu0 %v857
    %933 = vmatmul.mubr.f32.gmra.mxu0 %v819
    %v934 = vpop.f32.mrf.mxu0
    %v935 = vadd.f32 0.0, %v934
    %v936 = vpop.f32.mrf.mxu0
    %937 = vmatprep.mubr.f32.mxu0 %v859
    %938 = vmatmul.mubr.f32.gmra.mxu0 %v824
    %v939 = vpop.f32.mrf.mxu0
    %v940 = vadd.f32 0.0, %v939
    %v941 = vpop.f32.mrf.mxu0
    %942 = vmatprep.mubr.f32.mxu0 %v861
    %943 = vmatmul.mubr.f32.gmra.mxu0 %v829
    %v944 = vpop.f32.mrf.mxu0
    %v945 = vadd.f32 0.0, %v944
    %v946 = vpop.f32.mrf.mxu0
    %947 = vdwg.mxu0
    %v949 = vsel %vm329, %v766, 0
    %v951 = vsel %vm329, %v768, 0
    %v954 = vsel %vm329, %v770, 0
    %v956 = vsel %vm329, %v772, 0
    %958 = vmatprep.subr.mxu0 0.0
    %959 = vmatpush1.msra.mxu0 %v788
    %960 = vmatprep.subr.mxu0 0.0
    %961 = vmatpush1.msra.mxu0 %v787
    %962 = vmatprep.subr.mxu0 0.0
    %963 = vmatpush1.msra.mxu0 %v786
    %964 = vmatprep.subr.mxu0 0.0
    %965 = vmatpush1.msra.mxu0 %v785
    %966 = vmatprep.subr.mxu0 0.0
    %967 = vmatpush1.msra.mxu0 %v784
    %968 = vmatprep.subr.mxu0 0.0
    %969 = vmatpush1.msra.mxu0 %v783
    %970 = vmatprep.subr.mxu0 0.0
    %971 = vmatpush1.msra.mxu0 %v782
    %972 = vmatprep.subr.mxu0 0.0
    %973 = vmatpush1.msra.mxu0 %v781
    %974 = vmatprep.subr.mxu0 0.0
    %975 = vmatpush1.msra.mxu0 %v780
    %976 = vmatprep.subr.mxu0 0.0
    %977 = vmatpush1.msra.mxu0 %v779
    %978 = vmatprep.subr.mxu0 0.0
    %979 = vmatpush1.msra.mxu0 %v778
    %980 = vmatprep.subr.mxu0 0.0
    %981 = vmatpush1.msra.mxu0 %v777
    %982 = vmatprep.subr.mxu0 0.0
    %983 = vmatpush1.msra.mxu0 %v776
    %984 = vmatprep.subr.mxu0 0.0
    %985 = vmatpush1.msra.mxu0 %v775
    %986 = vmatprep.subr.mxu0 0.0
    %987 = vmatpush1.msra.mxu0 %v774
    %988 = vmatprep.subr.mxu0 0.0
    %989 = vmatpush1.msra.mxu0 %v773
    %990 = vmatprep.subr.mxu0 0.0
    %991 = vmatpush2.msra.mxu0 0.0
    %992 = vmatprep.subr.mxu0 0.0
    %993 = vmatpush2.msra.mxu0 0.0
    %994 = vmatprep.subr.mxu0 0.0
    %995 = vmatpush2.msra.mxu0 0.0
    %996 = vmatprep.subr.mxu0 0.0
    %997 = vmatpush2.msra.mxu0 0.0
    %998 = vmatprep.subr.mxu0 0.0
    %999 = vmatpush2.msra.mxu0 0.0
    %1000 = vmatprep.subr.mxu0 0.0
    %1001 = vmatpush2.msra.mxu0 0.0
    %1002 = vmatprep.subr.mxu0 0.0
    %1003 = vmatpush2.msra.mxu0 0.0
    %1004 = vmatprep.subr.mxu0 0.0
    %1005 = vmatpush2.msra.mxu0 0.0
    %1006 = vmatprep.subr.mxu0 0.0
    %1007 = vmatpush2.msra.mxu0 0.0
    %1008 = vmatprep.subr.mxu0 0.0
    %1009 = vmatpush2.msra.mxu0 0.0
    %1010 = vmatprep.subr.mxu0 0.0
    %1011 = vmatpush2.msra.mxu0 0.0
    %1012 = vmatprep.subr.mxu0 0.0
    %1013 = vmatpush2.msra.mxu0 0.0
    %1014 = vmatprep.subr.mxu0 0.0
    %1015 = vmatpush2.msra.mxu0 0.0
    %1016 = vmatprep.subr.mxu0 0.0
    %1017 = vmatpush2.msra.mxu0 0.0
    %1018 = vmatprep.subr.mxu0 0.0
    %1019 = vmatpush2.msra.mxu0 %v790
    %1020 = vmatprep.subr.mxu0 0.0
    %1021 = vmatpush2.msra.mxu0 %v789
    %1022 = vmatprep.mubr.f32.mxu0 %v949
    %1023 = vmatmul.mubr.f32.gmra.mxu0 %v765
    %v1024 = vpop.f32.mrf.mxu0
    %v1025 = vadd.f32 %v930, %v1024
    %v1026 = vpop.f32.mrf.mxu0
    %1027 = vmatprep.mubr.f32.mxu0 %v951
    %1028 = vmatmul.mubr.f32.gmra.mxu0 %v767
    %v1029 = vpop.f32.mrf.mxu0
    %v1030 = vadd.f32 %v935, %v1029
    %v1031 = vpop.f32.mrf.mxu0
    %1032 = vmatprep.mubr.f32.mxu0 %v954
    %1033 = vmatmul.mubr.f32.gmra.mxu0 %v769
    %v1034 = vpop.f32.mrf.mxu0
    %v1035 = vadd.f32 %v940, %v1034
    %v1036 = vpop.f32.mrf.mxu0
    %1037 = vmatprep.mubr.f32.mxu0 %v956
    %1038 = vmatmul.mubr.f32.gmra.mxu0 %v771
    %v1039 = vpop.f32.mrf.mxu0
    %v1040 = vadd.f32 %v945, %v1039
    %v1041 = vpop.f32.mrf.mxu0
    %1042 = vdwg.mxu0
    %v1043 = vld [vmem:[#allocation3] sm:$0xfc]
    %v1044 = vld [vmem:[#allocation3 + $0x8] sm:$0xfc]
    %v1045 = vld [vmem:[#allocation3 + $0x20] sm:$0x3]
    %v1046 = vld [vmem:[#allocation3 + $0x28] sm:$0x3]
    %v1047 = vld [vmem:[#allocation3 + $0x30] sm:$0xfc]
    %v1048 = vld [vmem:[#allocation3 + $0x38] sm:$0xfc]
    %v1049 = vld [vmem:[#allocation3 + $0x50] sm:$0x3]
    %v1050 = vld [vmem:[#allocation3 + $0x58] sm:$0x3]
    %vm1059 = vcmask 1045504
    %v1060 = vrot.slane %v1043, 2
    %v1061 = vrot.slane %v767, 2
    %v1062 = vsel %vm1059, %v1060, %v1061
    %v1063 = vrot.slane %v1044, 2
    %v1064 = vrot.slane %v768, 2
    %v1065 = vsel %vm1059, %v1063, %v1064
    %v1066 = vrot.slane %v1045, 2
    %v1067 = vsel %vm1059, %v1061, %v1066
    %v1068 = vrot.slane %v1046, 2
    %v1069 = vsel %vm1059, %v1064, %v1068
    %v1070 = vrot.slane %v1047, 2
    %v1071 = vrot.slane %v771, 2
    %v1072 = vsel %vm1059, %v1070, %v1071
    %v1073 = vrot.slane %v1048, 2
    %v1074 = vrot.slane %v772, 2
    %v1075 = vsel %vm1059, %v1073, %v1074
    %v1076 = vrot.slane %v1049, 2
    %v1077 = vsel %vm1059, %v1071, %v1076
    %v1078 = vrot.slane %v1050, 2
    %v1079 = vsel %vm1059, %v1074, %v1078
    %s1084 = scalar_lea.vmem %s3, 288
    %v1085 = vld [vmem:[%s1084] sm:$0xff]
    %v1086 = vld [vmem:[%s1084 + $0x8] sm:$0xff]
    %v1087 = vld [vmem:[%s1084 + $0x10] sm:$0xff]
    %v1088 = vld [vmem:[%s1084 + $0x18] sm:$0xff]
    %v1089 = vld [vmem:[%s1084 + $0x20] sm:$0xff]
    %v1090 = vld [vmem:[%s1084 + $0x28] sm:$0xff]
    %v1091 = vld [vmem:[%s1084 + $0x30] sm:$0xff]
    %v1092 = vld [vmem:[%s1084 + $0x38] sm:$0xff]
    %v1093 = vld [vmem:[%s1084 + $0x40] sm:$0xff]
    %v1094 = vld [vmem:[%s1084 + $0x48] sm:$0xff]
    %v1095 = vld [vmem:[%s1084 + $0x50] sm:$0xff]
    %v1096 = vld [vmem:[%s1084 + $0x58] sm:$0xff]
    %v1097 = vld [vmem:[%s1084 + $0x60] sm:$0xff]
    %v1098 = vld [vmem:[%s1084 + $0x68] sm:$0xff]
    %v1099 = vld [vmem:[%s1084 + $0x70] sm:$0xff]
    %v1100 = vld [vmem:[%s1084 + $0x78] sm:$0xff]
    %v1101 = vld [vmem:[%s1084 + $0x80] sm:$0xff]
    %v1102 = vld [vmem:[%s1084 + $0x88] sm:$0xff]
    %v1103 = vsel %vm329, %v1065, 0
    %v1105 = vsel %vm329, %v1069, 0
    %v1107 = vsel %vm329, %v1075, 0
    %v1109 = vsel %vm329, %v1079, 0
    %1111 = vmatprep.subr.mxu0 0.0
    %1112 = vmatpush1.msra.mxu0 %v1100
    %1113 = vmatprep.subr.mxu0 0.0
    %1114 = vmatpush1.msra.mxu0 %v1099
    %1115 = vmatprep.subr.mxu0 0.0
    %1116 = vmatpush1.msra.mxu0 %v1098
    %1117 = vmatprep.subr.mxu0 0.0
    %1118 = vmatpush1.msra.mxu0 %v1097
    %1119 = vmatprep.subr.mxu0 0.0
    %1120 = vmatpush1.msra.mxu0 %v1096
    %1121 = vmatprep.subr.mxu0 0.0
    %1122 = vmatpush1.msra.mxu0 %v1095
    %1123 = vmatprep.subr.mxu0 0.0
    %1124 = vmatpush1.msra.mxu0 %v1094
    %1125 = vmatprep.subr.mxu0 0.0
    %1126 = vmatpush1.msra.mxu0 %v1093
    %1127 = vmatprep.subr.mxu0 0.0
    %1128 = vmatpush1.msra.mxu0 %v1092
    %1129 = vmatprep.subr.mxu0 0.0
    %1130 = vmatpush1.msra.mxu0 %v1091
    %1131 = vmatprep.subr.mxu0 0.0
    %1132 = vmatpush1.msra.mxu0 %v1090
    %1133 = vmatprep.subr.mxu0 0.0
    %1134 = vmatpush1.msra.mxu0 %v1089
    %1135 = vmatprep.subr.mxu0 0.0
    %1136 = vmatpush1.msra.mxu0 %v1088
    %1137 = vmatprep.subr.mxu0 0.0
    %1138 = vmatpush1.msra.mxu0 %v1087
    %1139 = vmatprep.subr.mxu0 0.0
    %1140 = vmatpush1.msra.mxu0 %v1086
    %1141 = vmatprep.subr.mxu0 0.0
    %1142 = vmatpush1.msra.mxu0 %v1085
    %1143 = vmatprep.subr.mxu0 0.0
    %1144 = vmatpush2.msra.mxu0 0.0
    %1145 = vmatprep.subr.mxu0 0.0
    %1146 = vmatpush2.msra.mxu0 0.0
    %1147 = vmatprep.subr.mxu0 0.0
    %1148 = vmatpush2.msra.mxu0 0.0
    %1149 = vmatprep.subr.mxu0 0.0
    %1150 = vmatpush2.msra.mxu0 0.0
    %1151 = vmatprep.subr.mxu0 0.0
    %1152 = vmatpush2.msra.mxu0 0.0
    %1153 = vmatprep.subr.mxu0 0.0
    %1154 = vmatpush2.msra.mxu0 0.0
    %1155 = vmatprep.subr.mxu0 0.0
    %1156 = vmatpush2.msra.mxu0 0.0
    %1157 = vmatprep.subr.mxu0 0.0
    %1158 = vmatpush2.msra.mxu0 0.0
    %1159 = vmatprep.subr.mxu0 0.0
    %1160 = vmatpush2.msra.mxu0 0.0
    %1161 = vmatprep.subr.mxu0 0.0
    %1162 = vmatpush2.msra.mxu0 0.0
    %1163 = vmatprep.subr.mxu0 0.0
    %1164 = vmatpush2.msra.mxu0 0.0
    %1165 = vmatprep.subr.mxu0 0.0
    %1166 = vmatpush2.msra.mxu0 0.0
    %1167 = vmatprep.subr.mxu0 0.0
    %1168 = vmatpush2.msra.mxu0 0.0
    %1169 = vmatprep.subr.mxu0 0.0
    %1170 = vmatpush2.msra.mxu0 0.0
    %1171 = vmatprep.subr.mxu0 0.0
    %1172 = vmatpush2.msra.mxu0 %v1102
    %1173 = vmatprep.subr.mxu0 0.0
    %1174 = vmatpush2.msra.mxu0 %v1101
    %1175 = vmatprep.mubr.f32.mxu0 %v1103
    %1176 = vmatmul.mubr.f32.gmra.mxu0 %v1062
    %v1177 = vpop.f32.mrf.mxu0
    %v1178 = vadd.f32 0.0, %v1177
    %v1179 = vpop.f32.mrf.mxu0
    %1180 = vmatprep.mubr.f32.mxu0 %v1105
    %1181 = vmatmul.mubr.f32.gmra.mxu0 %v1067
    %v1182 = vpop.f32.mrf.mxu0
    %v1183 = vadd.f32 0.0, %v1182
    %v1184 = vpop.f32.mrf.mxu0
    %1185 = vmatprep.mubr.f32.mxu0 %v1107
    %1186 = vmatmul.mubr.f32.gmra.mxu0 %v1072
    %v1187 = vpop.f32.mrf.mxu0
    %v1188 = vadd.f32 0.0, %v1187
    %v1189 = vpop.f32.mrf.mxu0
    %1190 = vmatprep.mubr.f32.mxu0 %v1109
    %1191 = vmatmul.mubr.f32.gmra.mxu0 %v1077
    %v1192 = vpop.f32.mrf.mxu0
    %v1193 = vadd.f32 0.0, %v1192
    %v1194 = vpop.f32.mrf.mxu0
    %1195 = vdwg.mxu0
    %v1196 = vadd.f32 %v1025, %v1178
    %v1197 = vadd.f32 %v1030, %v1183
    %v1198 = vadd.f32 %v1035, %v1188
    %v1199 = vadd.f32 %v1040, %v1193
    %v1200 = vld [vmem:[#allocation7] sm:$0x1]
    %v1202 = vlaneseq
    %v1203 = vshrl.u32 %v1202, 7
    %v1204 = vsub.s32 0, %v1203
    %v1205 = vrot.slane %v1200, %v1204
    %v1207 = vadd.f32 %v1196, %v1205
    %v1208 = vadd.f32 %v1197, %v1205
    %v1209 = vadd.f32 %v1198, %v1205
    %v1210 = vadd.f32 %v1199, %v1205
    %v1211 = vmax.f32 %v1207, 0.0
    %v1212 = vmax.f32 %v1208, 0.0
    %v1213 = vmax.f32 %v1209, 0.0
    %v1214 = vmax.f32 %v1210, 0.0
    %v1219 = vrot.slane %v1211, 7
    %v1220 = vrot.slane %v1212, 7
    %v1221 = vsel %vm722, %v1219, %v1220
    %v1222 = vrot.slane %v1213, 7
    %v1223 = vrot.slane %v1214, 7
    %v1224 = vsel %vm722, %v1222, %v1223
    %1225 = vrot.lane.b32.xlu0 %v1219, 8
    %v1226 = vpop.permute.xlu0 %1225
    %1227 = vrot.lane.b32.xlu0 %v1221, 8
    %v1228 = vpop.permute.xlu0 %1227
    %1229 = vrot.lane.b32.xlu0 %v1220, 8
    %v1230 = vpop.permute.xlu0 %1229
    %1231 = vrot.lane.b32.xlu0 %v1222, 8
    %v1232 = vpop.permute.xlu0 %1231
    %1233 = vrot.lane.b32.xlu0 %v1224, 8
    %v1234 = vpop.permute.xlu0 %1233
    %1235 = vrot.lane.b32.xlu0 %v1223, 8
    %v1236 = vpop.permute.xlu0 %1235
    %1243 = vst.msk [vmem:[#allocation3] sm:$0xfe] %vm747, %v1226
    %1244 = vst.msk [vmem:[#allocation3 + $0x8] sm:$0xfe] %vm749, %v1226
    %1245 = vst.msk [vmem:[#allocation3 + $0x10] sm:$0xff] %vm751, %v1228
    %1246 = vst.msk [vmem:[#allocation3 + $0x18] sm:$0xff] %vm753, %v1228
    %1247 = vst.msk [vmem:[#allocation3 + $0x20] sm:$0x1] %vm755, %v1230
    %1248 = vst.msk [vmem:[#allocation3 + $0x28] sm:$0x1] %vm757, %v1230
    %1249 = vst.msk [vmem:[#allocation3 + $0x30] sm:$0xfe] %vm747, %v1232
    %1250 = vst.msk [vmem:[#allocation3 + $0x38] sm:$0xfe] %vm749, %v1232
    %1251 = vst.msk [vmem:[#allocation3 + $0x40] sm:$0xff] %vm751, %v1234
    %1252 = vst.msk [vmem:[#allocation3 + $0x48] sm:$0xff] %vm753, %v1234
    %1253 = vst.msk [vmem:[#allocation3 + $0x50] sm:$0x1] %vm755, %v1236
    %1254 = vst.msk [vmem:[#allocation3 + $0x58] sm:$0x1] %vm757, %v1236
    %v1255 = vld [vmem:[#allocation3] sm:$0xff]
    %v1256 = vld [vmem:[#allocation3 + $0x8] sm:$0xff]
    %v1257 = vld [vmem:[#allocation3 + $0x10] sm:$0xff]
    %v1258 = vld [vmem:[#allocation3 + $0x18] sm:$0xff]
    %v1259 = vld [vmem:[#allocation3 + $0x30] sm:$0xff]
    %v1260 = vld [vmem:[#allocation3 + $0x38] sm:$0xff]
    %v1261 = vld [vmem:[#allocation3 + $0x40] sm:$0xff]
    %v1262 = vld [vmem:[#allocation3 + $0x48] sm:$0xff]
    %v1263 = vld [vmem:[%s5] sm:$0xff]
    %v1264 = vld [vmem:[%s5 + $0x8] sm:$0xff]
    %v1265 = vld [vmem:[%s5 + $0x10] sm:$0xff]
    %v1266 = vld [vmem:[%s5 + $0x18] sm:$0xff]
    %v1267 = vld [vmem:[%s5 + $0x20] sm:$0xff]
    %v1268 = vld [vmem:[%s5 + $0x28] sm:$0xff]
    %v1269 = vld [vmem:[%s5 + $0x30] sm:$0xff]
    %v1270 = vld [vmem:[%s5 + $0x38] sm:$0xff]
    %v1271 = vld [vmem:[%s5 + $0x40] sm:$0xff]
    %v1272 = vld [vmem:[%s5 + $0x48] sm:$0xff]
    %v1273 = vld [vmem:[%s5 + $0x50] sm:$0xff]
    %v1274 = vld [vmem:[%s5 + $0x58] sm:$0xff]
    %v1275 = vld [vmem:[%s5 + $0x60] sm:$0xff]
    %v1276 = vld [vmem:[%s5 + $0x68] sm:$0xff]
    %v1277 = vld [vmem:[%s5 + $0x70] sm:$0xff]
    %v1278 = vld [vmem:[%s5 + $0x78] sm:$0xff]
    %v1279 = vld [vmem:[%s5 + $0x80] sm:$0xff]
    %v1280 = vld [vmem:[%s5 + $0x88] sm:$0xff]
    %v1281 = vld [vmem:[#allocation3] sm:$0xfe]
    %v1282 = vld [vmem:[#allocation3 + $0x8] sm:$0xfe]
    %v1283 = vld [vmem:[#allocation3 + $0x20] sm:$0x1]
    %v1284 = vld [vmem:[#allocation3 + $0x28] sm:$0x1]
    %v1285 = vld [vmem:[#allocation3 + $0x30] sm:$0xfe]
    %v1286 = vld [vmem:[#allocation3 + $0x38] sm:$0xfe]
    %v1287 = vld [vmem:[#allocation3 + $0x50] sm:$0x1]
    %v1288 = vld [vmem:[#allocation3 + $0x58] sm:$0x1]
    %v1301 = vrot.slane %v1281, 1
    %v1302 = vrot.slane %v1257, 1
    %v1303 = vsel %vm811, %v1301, %v1302
    %v1304 = vrot.slane %v1282, 1
    %v1305 = vrot.slane %v1258, 1
    %v1306 = vsel %vm811, %v1304, %v1305
    %v1307 = vrot.slane %v1283, 1
    %v1308 = vsel %vm811, %v1302, %v1307
    %v1309 = vrot.slane %v1284, 1
    %v1310 = vsel %vm811, %v1305, %v1309
    %v1311 = vrot.slane %v1285, 1
    %v1312 = vrot.slane %v1261, 1
    %v1313 = vsel %vm811, %v1311, %v1312
    %v1314 = vrot.slane %v1286, 1
    %v1315 = vrot.slane %v1262, 1
    %v1316 = vsel %vm811, %v1314, %v1315
    %v1317 = vrot.slane %v1287, 1
    %v1318 = vsel %vm811, %v1312, %v1317
    %v1319 = vrot.slane %v1288, 1
    %v1320 = vsel %vm811, %v1315, %v1319
    %s1325 = scalar_lea.vmem %s5, 144
    %v1326 = vld [vmem:[%s1325] sm:$0xff]
    %v1327 = vld [vmem:[%s1325 + $0x8] sm:$0xff]
    %v1328 = vld [vmem:[%s1325 + $0x10] sm:$0xff]
    %v1329 = vld [vmem:[%s1325 + $0x18] sm:$0xff]
    %v1330 = vld [vmem:[%s1325 + $0x20] sm:$0xff]
    %v1331 = vld [vmem:[%s1325 + $0x28] sm:$0xff]
    %v1332 = vld [vmem:[%s1325 + $0x30] sm:$0xff]
    %v1333 = vld [vmem:[%s1325 + $0x38] sm:$0xff]
    %v1334 = vld [vmem:[%s1325 + $0x40] sm:$0xff]
    %v1335 = vld [vmem:[%s1325 + $0x48] sm:$0xff]
    %v1336 = vld [vmem:[%s1325 + $0x50] sm:$0xff]
    %v1337 = vld [vmem:[%s1325 + $0x58] sm:$0xff]
    %v1338 = vld [vmem:[%s1325 + $0x60] sm:$0xff]
    %v1339 = vld [vmem:[%s1325 + $0x68] sm:$0xff]
    %v1340 = vld [vmem:[%s1325 + $0x70] sm:$0xff]
    %v1341 = vld [vmem:[%s1325 + $0x78] sm:$0xff]
    %v1342 = vld [vmem:[%s1325 + $0x80] sm:$0xff]
    %v1343 = vld [vmem:[%s1325 + $0x88] sm:$0xff]
    %v1344 = vsel %vm329, %v1306, 0
    %v1346 = vsel %vm329, %v1310, 0
    %v1348 = vsel %vm329, %v1316, 0
    %v1350 = vsel %vm329, %v1320, 0
    %1352 = vmatprep.subr.mxu0 0.0
    %1353 = vmatpush1.msra.mxu0 %v1341
    %1354 = vmatprep.subr.mxu0 0.0
    %1355 = vmatpush1.msra.mxu0 %v1340
    %1356 = vmatprep.subr.mxu0 0.0
    %1357 = vmatpush1.msra.mxu0 %v1339
    %1358 = vmatprep.subr.mxu0 0.0
    %1359 = vmatpush1.msra.mxu0 %v1338
    %1360 = vmatprep.subr.mxu0 0.0
    %1361 = vmatpush1.msra.mxu0 %v1337
    %1362 = vmatprep.subr.mxu0 0.0
    %1363 = vmatpush1.msra.mxu0 %v1336
    %1364 = vmatprep.subr.mxu0 0.0
    %1365 = vmatpush1.msra.mxu0 %v1335
    %1366 = vmatprep.subr.mxu0 0.0
    %1367 = vmatpush1.msra.mxu0 %v1334
    %1368 = vmatprep.subr.mxu0 0.0
    %1369 = vmatpush1.msra.mxu0 %v1333
    %1370 = vmatprep.subr.mxu0 0.0
    %1371 = vmatpush1.msra.mxu0 %v1332
    %1372 = vmatprep.subr.mxu0 0.0
    %1373 = vmatpush1.msra.mxu0 %v1331
    %1374 = vmatprep.subr.mxu0 0.0
    %1375 = vmatpush1.msra.mxu0 %v1330
    %1376 = vmatprep.subr.mxu0 0.0
    %1377 = vmatpush1.msra.mxu0 %v1329
    %1378 = vmatprep.subr.mxu0 0.0
    %1379 = vmatpush1.msra.mxu0 %v1328
    %1380 = vmatprep.subr.mxu0 0.0
    %1381 = vmatpush1.msra.mxu0 %v1327
    %1382 = vmatprep.subr.mxu0 0.0
    %1383 = vmatpush1.msra.mxu0 %v1326
    %1384 = vmatprep.subr.mxu0 0.0
    %1385 = vmatpush2.msra.mxu0 0.0
    %1386 = vmatprep.subr.mxu0 0.0
    %1387 = vmatpush2.msra.mxu0 0.0
    %1388 = vmatprep.subr.mxu0 0.0
    %1389 = vmatpush2.msra.mxu0 0.0
    %1390 = vmatprep.subr.mxu0 0.0
    %1391 = vmatpush2.msra.mxu0 0.0
    %1392 = vmatprep.subr.mxu0 0.0
    %1393 = vmatpush2.msra.mxu0 0.0
    %1394 = vmatprep.subr.mxu0 0.0
    %1395 = vmatpush2.msra.mxu0 0.0
    %1396 = vmatprep.subr.mxu0 0.0
    %1397 = vmatpush2.msra.mxu0 0.0
    %1398 = vmatprep.subr.mxu0 0.0
    %1399 = vmatpush2.msra.mxu0 0.0
    %1400 = vmatprep.subr.mxu0 0.0
    %1401 = vmatpush2.msra.mxu0 0.0
    %1402 = vmatprep.subr.mxu0 0.0
    %1403 = vmatpush2.msra.mxu0 0.0
    %1404 = vmatprep.subr.mxu0 0.0
    %1405 = vmatpush2.msra.mxu0 0.0
    %1406 = vmatprep.subr.mxu0 0.0
    %1407 = vmatpush2.msra.mxu0 0.0
    %1408 = vmatprep.subr.mxu0 0.0
    %1409 = vmatpush2.msra.mxu0 0.0
    %1410 = vmatprep.subr.mxu0 0.0
    %1411 = vmatpush2.msra.mxu0 0.0
    %1412 = vmatprep.subr.mxu0 0.0
    %1413 = vmatpush2.msra.mxu0 %v1343
    %1414 = vmatprep.subr.mxu0 0.0
    %1415 = vmatpush2.msra.mxu0 %v1342
    %1416 = vmatprep.mubr.f32.mxu0 %v1344
    %1417 = vmatmul.mubr.f32.gmra.mxu0 %v1303
    %v1418 = vpop.f32.mrf.mxu0
    %v1419 = vadd.f32 0.0, %v1418
    %v1420 = vpop.f32.mrf.mxu0
    %1421 = vmatprep.mubr.f32.mxu0 %v1346
    %1422 = vmatmul.mubr.f32.gmra.mxu0 %v1308
    %v1423 = vpop.f32.mrf.mxu0
    %v1424 = vadd.f32 0.0, %v1423
    %v1425 = vpop.f32.mrf.mxu0
    %1426 = vmatprep.mubr.f32.mxu0 %v1348
    %1427 = vmatmul.mubr.f32.gmra.mxu0 %v1313
    %v1428 = vpop.f32.mrf.mxu0
    %v1429 = vadd.f32 0.0, %v1428
    %v1430 = vpop.f32.mrf.mxu0
    %1431 = vmatprep.mubr.f32.mxu0 %v1350
    %1432 = vmatmul.mubr.f32.gmra.mxu0 %v1318
    %v1433 = vpop.f32.mrf.mxu0
    %v1434 = vadd.f32 0.0, %v1433
    %v1435 = vpop.f32.mrf.mxu0
    %1436 = vdwg.mxu0
    %v1438 = vsel %vm329, %v1256, 0
    %v1440 = vsel %vm329, %v1258, 0
    %v1443 = vsel %vm329, %v1260, 0
    %v1445 = vsel %vm329, %v1262, 0
    %1447 = vmatprep.subr.mxu0 0.0
    %1448 = vmatpush1.msra.mxu0 %v1278
    %1449 = vmatprep.subr.mxu0 0.0
    %1450 = vmatpush1.msra.mxu0 %v1277
    %1451 = vmatprep.subr.mxu0 0.0
    %1452 = vmatpush1.msra.mxu0 %v1276
    %1453 = vmatprep.subr.mxu0 0.0
    %1454 = vmatpush1.msra.mxu0 %v1275
    %1455 = vmatprep.subr.mxu0 0.0
    %1456 = vmatpush1.msra.mxu0 %v1274
    %1457 = vmatprep.subr.mxu0 0.0
    %1458 = vmatpush1.msra.mxu0 %v1273
    %1459 = vmatprep.subr.mxu0 0.0
    %1460 = vmatpush1.msra.mxu0 %v1272
    %1461 = vmatprep.subr.mxu0 0.0
    %1462 = vmatpush1.msra.mxu0 %v1271
    %1463 = vmatprep.subr.mxu0 0.0
    %1464 = vmatpush1.msra.mxu0 %v1270
    %1465 = vmatprep.subr.mxu0 0.0
    %1466 = vmatpush1.msra.mxu0 %v1269
    %1467 = vmatprep.subr.mxu0 0.0
    %1468 = vmatpush1.msra.mxu0 %v1268
    %1469 = vmatprep.subr.mxu0 0.0
    %1470 = vmatpush1.msra.mxu0 %v1267
    %1471 = vmatprep.subr.mxu0 0.0
    %1472 = vmatpush1.msra.mxu0 %v1266
    %1473 = vmatprep.subr.mxu0 0.0
    %1474 = vmatpush1.msra.mxu0 %v1265
    %1475 = vmatprep.subr.mxu0 0.0
    %1476 = vmatpush1.msra.mxu0 %v1264
    %1477 = vmatprep.subr.mxu0 0.0
    %1478 = vmatpush1.msra.mxu0 %v1263
    %1479 = vmatprep.subr.mxu0 0.0
    %1480 = vmatpush2.msra.mxu0 0.0
    %1481 = vmatprep.subr.mxu0 0.0
    %1482 = vmatpush2.msra.mxu0 0.0
    %1483 = vmatprep.subr.mxu0 0.0
    %1484 = vmatpush2.msra.mxu0 0.0
    %1485 = vmatprep.subr.mxu0 0.0
    %1486 = vmatpush2.msra.mxu0 0.0
    %1487 = vmatprep.subr.mxu0 0.0
    %1488 = vmatpush2.msra.mxu0 0.0
    %1489 = vmatprep.subr.mxu0 0.0
    %1490 = vmatpush2.msra.mxu0 0.0
    %1491 = vmatprep.subr.mxu0 0.0
    %1492 = vmatpush2.msra.mxu0 0.0
    %1493 = vmatprep.subr.mxu0 0.0
    %1494 = vmatpush2.msra.mxu0 0.0
    %1495 = vmatprep.subr.mxu0 0.0
    %1496 = vmatpush2.msra.mxu0 0.0
    %1497 = vmatprep.subr.mxu0 0.0
    %1498 = vmatpush2.msra.mxu0 0.0
    %1499 = vmatprep.subr.mxu0 0.0
    %1500 = vmatpush2.msra.mxu0 0.0
    %1501 = vmatprep.subr.mxu0 0.0
    %1502 = vmatpush2.msra.mxu0 0.0
    %1503 = vmatprep.subr.mxu0 0.0
    %1504 = vmatpush2.msra.mxu0 0.0
    %1505 = vmatprep.subr.mxu0 0.0
    %1506 = vmatpush2.msra.mxu0 0.0
    %1507 = vmatprep.subr.mxu0 0.0
    %1508 = vmatpush2.msra.mxu0 %v1280
    %1509 = vmatprep.subr.mxu0 0.0
    %1510 = vmatpush2.msra.mxu0 %v1279
    %1511 = vmatprep.mubr.f32.mxu0 %v1438
    %1512 = vmatmul.mubr.f32.gmra.mxu0 %v1255
    %v1513 = vpop.f32.mrf.mxu0
    %v1514 = vadd.f32 %v1419, %v1513
    %v1515 = vpop.f32.mrf.mxu0
    %1516 = vmatprep.mubr.f32.mxu0 %v1440
    %1517 = vmatmul.mubr.f32.gmra.mxu0 %v1257
    %v1518 = vpop.f32.mrf.mxu0
    %v1519 = vadd.f32 %v1424, %v1518
    %v1520 = vpop.f32.mrf.mxu0
    %1521 = vmatprep.mubr.f32.mxu0 %v1443
    %1522 = vmatmul.mubr.f32.gmra.mxu0 %v1259
    %v1523 = vpop.f32.mrf.mxu0
    %v1524 = vadd.f32 %v1429, %v1523
    %v1525 = vpop.f32.mrf.mxu0
    %1526 = vmatprep.mubr.f32.mxu0 %v1445
    %1527 = vmatmul.mubr.f32.gmra.mxu0 %v1261
    %v1528 = vpop.f32.mrf.mxu0
    %v1529 = vadd.f32 %v1434, %v1528
    %v1530 = vpop.f32.mrf.mxu0
    %1531 = vdwg.mxu0
    %v1532 = vld [vmem:[#allocation3] sm:$0xfc]
    %v1533 = vld [vmem:[#allocation3 + $0x8] sm:$0xfc]
    %v1534 = vld [vmem:[#allocation3 + $0x20] sm:$0x3]
    %v1535 = vld [vmem:[#allocation3 + $0x28] sm:$0x3]
    %v1536 = vld [vmem:[#allocation3 + $0x30] sm:$0xfc]
    %v1537 = vld [vmem:[#allocation3 + $0x38] sm:$0xfc]
    %v1538 = vld [vmem:[#allocation3 + $0x50] sm:$0x3]
    %v1539 = vld [vmem:[#allocation3 + $0x58] sm:$0x3]
    %v1548 = vrot.slane %v1532, 2
    %v1549 = vrot.slane %v1257, 2
    %v1550 = vsel %vm1059, %v1548, %v1549
    %v1551 = vrot.slane %v1533, 2
    %v1552 = vrot.slane %v1258, 2
    %v1553 = vsel %vm1059, %v1551, %v1552
    %v1554 = vrot.slane %v1534, 2
    %v1555 = vsel %vm1059, %v1549, %v1554
    %v1556 = vrot.slane %v1535, 2
    %v1557 = vsel %vm1059, %v1552, %v1556
    %v1558 = vrot.slane %v1536, 2
    %v1559 = vrot.slane %v1261, 2
    %v1560 = vsel %vm1059, %v1558, %v1559
    %v1561 = vrot.slane %v1537, 2
    %v1562 = vrot.slane %v1262, 2
    %v1563 = vsel %vm1059, %v1561, %v1562
    %v1564 = vrot.slane %v1538, 2
    %v1565 = vsel %vm1059, %v1559, %v1564
    %v1566 = vrot.slane %v1539, 2
    %v1567 = vsel %vm1059, %v1562, %v1566
    %s1572 = scalar_lea.vmem %s5, 288
    %v1573 = vld [vmem:[%s1572] sm:$0xff]
    %v1574 = vld [vmem:[%s1572 + $0x8] sm:$0xff]
    %v1575 = vld [vmem:[%s1572 + $0x10] sm:$0xff]
    %v1576 = vld [vmem:[%s1572 + $0x18] sm:$0xff]
    %v1577 = vld [vmem:[%s1572 + $0x20] sm:$0xff]
    %v1578 = vld [vmem:[%s1572 + $0x28] sm:$0xff]
    %v1579 = vld [vmem:[%s1572 + $0x30] sm:$0xff]
    %v1580 = vld [vmem:[%s1572 + $0x38] sm:$0xff]
    %v1581 = vld [vmem:[%s1572 + $0x40] sm:$0xff]
    %v1582 = vld [vmem:[%s1572 + $0x48] sm:$0xff]
    %v1583 = vld [vmem:[%s1572 + $0x50] sm:$0xff]
    %v1584 = vld [vmem:[%s1572 + $0x58] sm:$0xff]
    %v1585 = vld [vmem:[%s1572 + $0x60] sm:$0xff]
    %v1586 = vld [vmem:[%s1572 + $0x68] sm:$0xff]
    %v1587 = vld [vmem:[%s1572 + $0x70] sm:$0xff]
    %v1588 = vld [vmem:[%s1572 + $0x78] sm:$0xff]
    %v1589 = vld [vmem:[%s1572 + $0x80] sm:$0xff]
    %v1590 = vld [vmem:[%s1572 + $0x88] sm:$0xff]
    %v1591 = vsel %vm329, %v1553, 0
    %v1593 = vsel %vm329, %v1557, 0
    %v1595 = vsel %vm329, %v1563, 0
    %v1597 = vsel %vm329, %v1567, 0
    %1599 = vmatprep.subr.mxu0 0.0
    %1600 = vmatpush1.msra.mxu0 %v1588
    %1601 = vmatprep.subr.mxu0 0.0
    %1602 = vmatpush1.msra.mxu0 %v1587
    %1603 = vmatprep.subr.mxu0 0.0
    %1604 = vmatpush1.msra.mxu0 %v1586
    %1605 = vmatprep.subr.mxu0 0.0
    %1606 = vmatpush1.msra.mxu0 %v1585
    %1607 = vmatprep.subr.mxu0 0.0
    %1608 = vmatpush1.msra.mxu0 %v1584
    %1609 = vmatprep.subr.mxu0 0.0
    %1610 = vmatpush1.msra.mxu0 %v1583
    %1611 = vmatprep.subr.mxu0 0.0
    %1612 = vmatpush1.msra.mxu0 %v1582
    %1613 = vmatprep.subr.mxu0 0.0
    %1614 = vmatpush1.msra.mxu0 %v1581
    %1615 = vmatprep.subr.mxu0 0.0
    %1616 = vmatpush1.msra.mxu0 %v1580
    %1617 = vmatprep.subr.mxu0 0.0
    %1618 = vmatpush1.msra.mxu0 %v1579
    %1619 = vmatprep.subr.mxu0 0.0
    %1620 = vmatpush1.msra.mxu0 %v1578
    %1621 = vmatprep.subr.mxu0 0.0
    %1622 = vmatpush1.msra.mxu0 %v1577
    %1623 = vmatprep.subr.mxu0 0.0
    %1624 = vmatpush1.msra.mxu0 %v1576
    %1625 = vmatprep.subr.mxu0 0.0
    %1626 = vmatpush1.msra.mxu0 %v1575
    %1627 = vmatprep.subr.mxu0 0.0
    %1628 = vmatpush1.msra.mxu0 %v1574
    %1629 = vmatprep.subr.mxu0 0.0
    %1630 = vmatpush1.msra.mxu0 %v1573
    %1631 = vmatprep.subr.mxu0 0.0
    %1632 = vmatpush2.msra.mxu0 0.0
    %1633 = vmatprep.subr.mxu0 0.0
    %1634 = vmatpush2.msra.mxu0 0.0
    %1635 = vmatprep.subr.mxu0 0.0
    %1636 = vmatpush2.msra.mxu0 0.0
    %1637 = vmatprep.subr.mxu0 0.0
    %1638 = vmatpush2.msra.mxu0 0.0
    %1639 = vmatprep.subr.mxu0 0.0
    %1640 = vmatpush2.msra.mxu0 0.0
    %1641 = vmatprep.subr.mxu0 0.0
    %1642 = vmatpush2.msra.mxu0 0.0
    %1643 = vmatprep.subr.mxu0 0.0
    %1644 = vmatpush2.msra.mxu0 0.0
    %1645 = vmatprep.subr.mxu0 0.0
    %1646 = vmatpush2.msra.mxu0 0.0
    %1647 = vmatprep.subr.mxu0 0.0
    %1648 = vmatpush2.msra.mxu0 0.0
    %1649 = vmatprep.subr.mxu0 0.0
    %1650 = vmatpush2.msra.mxu0 0.0
    %1651 = vmatprep.subr.mxu0 0.0
    %1652 = vmatpush2.msra.mxu0 0.0
    %1653 = vmatprep.subr.mxu0 0.0
    %1654 = vmatpush2.msra.mxu0 0.0
    %1655 = vmatprep.subr.mxu0 0.0
    %1656 = vmatpush2.msra.mxu0 0.0
    %1657 = vmatprep.subr.mxu0 0.0
    %1658 = vmatpush2.msra.mxu0 0.0
    %1659 = vmatprep.subr.mxu0 0.0
    %1660 = vmatpush2.msra.mxu0 %v1590
    %1661 = vmatprep.subr.mxu0 0.0
    %1662 = vmatpush2.msra.mxu0 %v1589
    %1663 = vmatprep.mubr.f32.mxu0 %v1591
    %1664 = vmatmul.mubr.f32.gmra.mxu0 %v1550
    %v1665 = vpop.f32.mrf.mxu0
    %v1666 = vadd.f32 0.0, %v1665
    %v1667 = vpop.f32.mrf.mxu0
    %1668 = vmatprep.mubr.f32.mxu0 %v1593
    %1669 = vmatmul.mubr.f32.gmra.mxu0 %v1555
    %v1670 = vpop.f32.mrf.mxu0
    %v1671 = vadd.f32 0.0, %v1670
    %v1672 = vpop.f32.mrf.mxu0
    %1673 = vmatprep.mubr.f32.mxu0 %v1595
    %1674 = vmatmul.mubr.f32.gmra.mxu0 %v1560
    %v1675 = vpop.f32.mrf.mxu0
    %v1676 = vadd.f32 0.0, %v1675
    %v1677 = vpop.f32.mrf.mxu0
    %1678 = vmatprep.mubr.f32.mxu0 %v1597
    %1679 = vmatmul.mubr.f32.gmra.mxu0 %v1565
    %v1680 = vpop.f32.mrf.mxu0
    %v1681 = vadd.f32 0.0, %v1680
    %v1682 = vpop.f32.mrf.mxu0
    %1683 = vdwg.mxu0
    %v1684 = vadd.f32 %v1514, %v1666
    %v1685 = vadd.f32 %v1519, %v1671
    %v1686 = vadd.f32 %v1524, %v1676
    %v1687 = vadd.f32 %v1529, %v1681
    %v1688 = vld [vmem:[#allocation9] sm:$0x1]
    %v1690 = vlaneseq
    %v1691 = vshrl.u32 %v1690, 7
    %v1692 = vsub.s32 0, %v1691
    %v1693 = vrot.slane %v1688, %v1692
    %v1695 = vadd.f32 %v1684, %v1693
    %v1696 = vadd.f32 %v1685, %v1693
    %v1697 = vadd.f32 %v1686, %v1693
    %v1698 = vadd.f32 %v1687, %v1693
    %v1699 = vadd.f32 %v1695, %v714
    %v1700 = vadd.f32 %v1696, %v715
    %v1701 = vadd.f32 %v1697, %v716
    %v1702 = vadd.f32 %v1698, %v717
    %v1703 = vmax.f32 %v1699, 0.0
    %v1704 = vmax.f32 %v1700, 0.0
    %v1705 = vmax.f32 %v1701, 0.0
    %v1706 = vmax.f32 %v1702, 0.0
    %v1707 = vadd.f32 %v1703, %v1704
    %v1708 = vrot.slane %v1707, 4
    %v1709 = vadd.f32 %v1707, %v1708
    %v1710 = vrot.slane %v1709, 2
    %v1711 = vadd.f32 %v1709, %v1710
    %v1712 = vrot.slane %v1711, 1
    %v1713 = vadd.f32 %v1711, %v1712
    %v1714 = vadd.f32 %v1705, %v1706
    %v1715 = vrot.slane %v1714, 4
    %v1716 = vadd.f32 %v1714, %v1715
    %v1717 = vrot.slane %v1716, 2
    %v1718 = vadd.f32 %v1716, %v1717
    %v1719 = vrot.slane %v1718, 1
    %v1720 = vadd.f32 %v1718, %v1719
    %v1721 = vld [vmem:[%s7] sm:$0xff]
    %v1722 = vld [vmem:[%s7 + $0x8] sm:$0xff]
    %v1723 = vld [vmem:[%s7 + $0x10] sm:$0xff]
    %v1724 = vld [vmem:[%s7 + $0x18] sm:$0xff]
    %v1725 = vld [vmem:[%s7 + $0x20] sm:$0xff]
    %v1726 = vld [vmem:[%s7 + $0x28] sm:$0xff]
    %v1727 = vld [vmem:[%s7 + $0x30] sm:$0xff]
    %v1728 = vld [vmem:[%s7 + $0x38] sm:$0xff]
    %v1729 = vld [vmem:[%s7 + $0x40] sm:$0xff]
    %v1730 = vld [vmem:[%s7 + $0x48] sm:$0xff]
    %v1731 = vld [vmem:[%s7 + $0x50] sm:$0xff]
    %v1732 = vld [vmem:[%s7 + $0x58] sm:$0xff]
    %v1733 = vld [vmem:[%s7 + $0x60] sm:$0xff]
    %v1734 = vld [vmem:[%s7 + $0x68] sm:$0xff]
    %v1735 = vld [vmem:[%s7 + $0x70] sm:$0xff]
    %v1736 = vld [vmem:[%s7 + $0x78] sm:$0xff]
    %v1737 = vld [vmem:[%s8] sm:$0xff]
    %v1738 = vld [vmem:[%s8 + $0x8] sm:$0xff]
    %v1739 = vld [vmem:[#allocation10] sm:$0xff]
    %v1740 = vld [vmem:[#allocation10 + $0x8] sm:$0xff]
    %v1742 = vsel %vm329, %v1737, 0
    %v1745 = vsel %vm329, %v1738, 0
    %1747 = vmatprep.subr.mxu0 0.0
    %1748 = vmatpush1.msra.mxu0 0.0
    %1749 = vmatprep.subr.mxu0 0.0
    %1750 = vmatpush1.msra.mxu0 0.0
    %1751 = vmatprep.subr.mxu0 0.0
    %1752 = vmatpush1.msra.mxu0 0.0
    %1753 = vmatprep.subr.mxu0 0.0
    %1754 = vmatpush1.msra.mxu0 0.0
    %1755 = vmatprep.subr.mxu0 0.0
    %1756 = vmatpush1.msra.mxu0 0.0
    %1757 = vmatprep.subr.mxu0 0.0
    %1758 = vmatpush1.msra.mxu0 0.0
    %1759 = vmatprep.subr.mxu0 0.0
    %1760 = vmatpush1.msra.mxu0 0.0
    %1761 = vmatprep.subr.mxu0 0.0
    %1762 = vmatpush1.msra.mxu0 0.0
    %1763 = vmatprep.subr.mxu0 0.0
    %1764 = vmatpush1.msra.mxu0 0.0
    %1765 = vmatprep.subr.mxu0 0.0
    %1766 = vmatpush1.msra.mxu0 0.0
    %1767 = vmatprep.subr.mxu0 0.0
    %1768 = vmatpush1.msra.mxu0 0.0
    %1769 = vmatprep.subr.mxu0 0.0
    %1770 = vmatpush1.msra.mxu0 0.0
    %1771 = vmatprep.subr.mxu0 0.0
    %1772 = vmatpush1.msra.mxu0 0.0
    %1773 = vmatprep.subr.mxu0 0.0
    %1774 = vmatpush1.msra.mxu0 0.0
    %1775 = vmatprep.subr.mxu0 0.0
    %1776 = vmatpush1.msra.mxu0 %v1740
    %1777 = vmatprep.subr.mxu0 0.0
    %1778 = vmatpush1.msra.mxu0 %v1739
    %1779 = vmatprep.subr.mxu0 0.0
    %1780 = vmatpush2.msra.mxu0 0.0
    %1781 = vmatprep.subr.mxu0 0.0
    %1782 = vmatpush2.msra.mxu0 0.0
    %1783 = vmatprep.subr.mxu0 0.0
    %1784 = vmatpush2.msra.mxu0 0.0
    %1785 = vmatprep.subr.mxu0 0.0
    %1786 = vmatpush2.msra.mxu0 0.0
    %1787 = vmatprep.subr.mxu0 0.0
    %1788 = vmatpush2.msra.mxu0 0.0
    %1789 = vmatprep.subr.mxu0 0.0
    %1790 = vmatpush2.msra.mxu0 0.0
    %1791 = vmatprep.subr.mxu0 0.0
    %1792 = vmatpush2.msra.mxu0 0.0
    %1793 = vmatprep.subr.mxu0 0.0
    %1794 = vmatpush2.msra.mxu0 0.0
    %1795 = vmatprep.subr.mxu0 0.0
    %1796 = vmatpush2.msra.mxu0 0.0
    %1797 = vmatprep.subr.mxu0 0.0
    %1798 = vmatpush2.msra.mxu0 0.0
    %1799 = vmatprep.subr.mxu0 0.0
    %1800 = vmatpush2.msra.mxu0 0.0
    %1801 = vmatprep.subr.mxu0 0.0
    %1802 = vmatpush2.msra.mxu0 0.0
    %1803 = vmatprep.subr.mxu0 0.0
    %1804 = vmatpush2.msra.mxu0 0.0
    %1805 = vmatprep.subr.mxu0 0.0
    %1806 = vmatpush2.msra.mxu0 0.0
    %1807 = vmatprep.subr.mxu0 0.0
    %1808 = vmatpush2.msra.mxu0 0.0
    %1809 = vmatprep.subr.mxu0 0.0
    %1810 = vmatpush2.msra.mxu0 0.0
    %1811 = vmatprep.mubr.f32.mxu0 0.0
    %1812 = vmatmul.mubr.f32.gmra.mxu0 %v1742
    %v1813 = vpop.f32.mrf.mxu0
    %v1814 = vadd.f32 0.0, %v1813
    %v1815 = vpop.f32.mrf.mxu0
    %1816 = vmatprep.mubr.f32.mxu0 0.0
    %1817 = vmatmul.mubr.f32.gmra.mxu0 %v1745
    %v1818 = vpop.f32.mrf.mxu0
    %v1819 = vadd.f32 0.0, %v1818
    %v1820 = vpop.f32.mrf.mxu0
    %1821 = vdwg.mxu0
    %v1822 = vld [vmem:[#allocation12] sm:$0xff]
    %v1823 = vld [vmem:[#allocation12 + $0x8] sm:$0xff]
    %1824 = vmatprep.subr.mxu0 0.0
    %1825 = vmatpush1.msra.mxu0 0.0
    %1826 = vmatprep.subr.mxu0 0.0
    %1827 = vmatpush1.msra.mxu0 0.0
    %1828 = vmatprep.subr.mxu0 0.0
    %1829 = vmatpush1.msra.mxu0 0.0
    %1830 = vmatprep.subr.mxu0 0.0
    %1831 = vmatpush1.msra.mxu0 0.0
    %1832 = vmatprep.subr.mxu0 0.0
    %1833 = vmatpush1.msra.mxu0 0.0
    %1834 = vmatprep.subr.mxu0 0.0
    %1835 = vmatpush1.msra.mxu0 0.0
    %1836 = vmatprep.subr.mxu0 0.0
    %1837 = vmatpush1.msra.mxu0 0.0
    %1838 = vmatprep.subr.mxu0 0.0
    %1839 = vmatpush1.msra.mxu0 0.0
    %1840 = vmatprep.subr.mxu0 0.0
    %1841 = vmatpush1.msra.mxu0 0.0
    %1842 = vmatprep.subr.mxu0 0.0
    %1843 = vmatpush1.msra.mxu0 0.0
    %1844 = vmatprep.subr.mxu0 0.0
    %1845 = vmatpush1.msra.mxu0 0.0
    %1846 = vmatprep.subr.mxu0 0.0
    %1847 = vmatpush1.msra.mxu0 0.0
    %1848 = vmatprep.subr.mxu0 0.0
    %1849 = vmatpush1.msra.mxu0 0.0
    %1850 = vmatprep.subr.mxu0 0.0
    %1851 = vmatpush1.msra.mxu0 0.0
    %1852 = vmatprep.subr.mxu0 0.0
    %1853 = vmatpush1.msra.mxu0 %v1823
    %1854 = vmatprep.subr.mxu0 0.0
    %1855 = vmatpush1.msra.mxu0 %v1822
    %1856 = vmatprep.subr.mxu0 0.0
    %1857 = vmatpush2.msra.mxu0 0.0
    %1858 = vmatprep.subr.mxu0 0.0
    %1859 = vmatpush2.msra.mxu0 0.0
    %1860 = vmatprep.subr.mxu0 0.0
    %1861 = vmatpush2.msra.mxu0 0.0
    %1862 = vmatprep.subr.mxu0 0.0
    %1863 = vmatpush2.msra.mxu0 0.0
    %1864 = vmatprep.subr.mxu0 0.0
    %1865 = vmatpush2.msra.mxu0 0.0
    %1866 = vmatprep.subr.mxu0 0.0
    %1867 = vmatpush2.msra.mxu0 0.0
    %1868 = vmatprep.subr.mxu0 0.0
    %1869 = vmatpush2.msra.mxu0 0.0
    %1870 = vmatprep.subr.mxu0 0.0
    %1871 = vmatpush2.msra.mxu0 0.0
    %1872 = vmatprep.subr.mxu0 0.0
    %1873 = vmatpush2.msra.mxu0 0.0
    %1874 = vmatprep.subr.mxu0 0.0
    %1875 = vmatpush2.msra.mxu0 0.0
    %1876 = vmatprep.subr.mxu0 0.0
    %1877 = vmatpush2.msra.mxu0 0.0
    %1878 = vmatprep.subr.mxu0 0.0
    %1879 = vmatpush2.msra.mxu0 0.0
    %1880 = vmatprep.subr.mxu0 0.0
    %1881 = vmatpush2.msra.mxu0 0.0
    %1882 = vmatprep.subr.mxu0 0.0
    %1883 = vmatpush2.msra.mxu0 0.0
    %1884 = vmatprep.subr.mxu0 0.0
    %1885 = vmatpush2.msra.mxu0 0.0
    %1886 = vmatprep.subr.mxu0 0.0
    %1887 = vmatpush2.msra.mxu0 0.0
    %1888 = vmatprep.mubr.f32.mxu0 0.0
    %1889 = vmatmul.mubr.f32.gmra.mxu0 %v1742
    %v1890 = vpop.f32.mrf.mxu0
    %v1891 = vadd.f32 0.0, %v1890
    %v1892 = vpop.f32.mrf.mxu0
    %1893 = vmatprep.mubr.f32.mxu0 0.0
    %1894 = vmatmul.mubr.f32.gmra.mxu0 %v1745
    %v1895 = vpop.f32.mrf.mxu0
    %v1896 = vadd.f32 0.0, %v1895
    %v1897 = vpop.f32.mrf.mxu0
    %1898 = vdwg.mxu0
    %v1901 = vrot.slane %v1891, 7
    %v1902 = vrot.slane %v1896, 7
    %v1905 = vadd.f32 %v1814, %v1901
    %v1906 = vadd.f32 %v1819, %v1902
    %v1907 = vld [vmem:[#allocation13] sm:$0x1]
    %v1909 = vlaneseq
    %v1910 = vshrl.u32 %v1909, 7
    %v1911 = vsub.s32 0, %v1910
    %v1912 = vrot.slane %v1907, %v1911
    %v1914 = vadd.f32 %v1905, %v1912
    %v1915 = vadd.f32 %v1906, %v1912
    %v1916 = vld [vmem:[#allocation15] sm:$0xff]
    %v1917 = vld [vmem:[#allocation15 + $0x8] sm:$0xff]
    %v1918 = vld [vmem:[#allocation15 + $0x10] sm:$0xff]
    %v1919 = vld [vmem:[#allocation15 + $0x18] sm:$0xff]
    %vm1920 = vcmask 261120
    %v1922 = vsel %vm1920, 0.0, 0
    %1924 = vmatprep.subr.mxu0 0.0
    %1925 = vmatpush1.msra.mxu0 0.0
    %1926 = vmatprep.subr.mxu0 0.0
    %1927 = vmatpush1.msra.mxu0 0.0
    %1928 = vmatprep.subr.mxu0 0.0
    %1929 = vmatpush1.msra.mxu0 0.0
    %1930 = vmatprep.subr.mxu0 0.0
    %1931 = vmatpush1.msra.mxu0 0.0
    %1932 = vmatprep.subr.mxu0 0.0
    %1933 = vmatpush1.msra.mxu0 0.0
    %1934 = vmatprep.subr.mxu0 0.0
    %1935 = vmatpush1.msra.mxu0 0.0
    %1936 = vmatprep.subr.mxu0 0.0
    %1937 = vmatpush1.msra.mxu0 0.0
    %1938 = vmatprep.subr.mxu0 0.0
    %1939 = vmatpush1.msra.mxu0 0.0
    %1940 = vmatprep.subr.mxu0 0.0
    %1941 = vmatpush1.msra.mxu0 0.0
    %1942 = vmatprep.subr.mxu0 0.0
    %1943 = vmatpush1.msra.mxu0 0.0
    %1944 = vmatprep.subr.mxu0 0.0
    %1945 = vmatpush1.msra.mxu0 0.0
    %1946 = vmatprep.subr.mxu0 0.0
    %1947 = vmatpush1.msra.mxu0 0.0
    %1948 = vmatprep.subr.mxu0 0.0
    %1949 = vmatpush1.msra.mxu0 %v1919
    %1950 = vmatprep.subr.mxu0 0.0
    %1951 = vmatpush1.msra.mxu0 %v1918
    %1952 = vmatprep.subr.mxu0 0.0
    %1953 = vmatpush1.msra.mxu0 %v1917
    %1954 = vmatprep.subr.mxu0 0.0
    %1955 = vmatpush1.msra.mxu0 %v1916
    %1956 = vmatprep.subr.mxu0 0.0
    %1957 = vmatpush2.msra.mxu0 0.0
    %1958 = vmatprep.subr.mxu0 0.0
    %1959 = vmatpush2.msra.mxu0 0.0
    %1960 = vmatprep.subr.mxu0 0.0
    %1961 = vmatpush2.msra.mxu0 0.0
    %1962 = vmatprep.subr.mxu0 0.0
    %1963 = vmatpush2.msra.mxu0 0.0
    %1964 = vmatprep.subr.mxu0 0.0
    %1965 = vmatpush2.msra.mxu0 0.0
    %1966 = vmatprep.subr.mxu0 0.0
    %1967 = vmatpush2.msra.mxu0 0.0
    %1968 = vmatprep.subr.mxu0 0.0
    %1969 = vmatpush2.msra.mxu0 0.0
    %1970 = vmatprep.subr.mxu0 0.0
    %1971 = vmatpush2.msra.mxu0 0.0
    %1972 = vmatprep.subr.mxu0 0.0
    %1973 = vmatpush2.msra.mxu0 0.0
    %1974 = vmatprep.subr.mxu0 0.0
    %1975 = vmatpush2.msra.mxu0 0.0
    %1976 = vmatprep.subr.mxu0 0.0
    %1977 = vmatpush2.msra.mxu0 0.0
    %1978 = vmatprep.subr.mxu0 0.0
    %1979 = vmatpush2.msra.mxu0 0.0
    %1980 = vmatprep.subr.mxu0 0.0
    %1981 = vmatpush2.msra.mxu0 0.0
    %1982 = vmatprep.subr.mxu0 0.0
    %1983 = vmatpush2.msra.mxu0 0.0
    %1984 = vmatprep.subr.mxu0 0.0
    %1985 = vmatpush2.msra.mxu0 0.0
    %1986 = vmatprep.subr.mxu0 0.0
    %1987 = vmatpush2.msra.mxu0 0.0
    %1988 = vmatprep.mubr.f32.mxu0 0.0
    %1989 = vmatmul.mubr.f32.gmra.mxu0 %v1922
    %v1990 = vpop.f32.mrf.mxu0
    %v1991 = vadd.f32 0.0, %v1990
    %v1992 = vpop.f32.mrf.mxu0
    %1993 = vdwg.mxu0
    %v1995 = vrot.slane %v1991, 1
    %v1998 = vadd.f32 %v1914, %v1991
    %v1999 = vadd.f32 %v1915, %v1995
    %v2000 = vxor.u32 %v1998, 2147483648
    %v2001 = vxor.u32 %v1999, 2147483648
    %v2002 = vmul.f32 %v2000, 1.442695
    %v2003 = vpow.pop %v2002
    %v2004 = vmul.f32 %v2001, 1.442695
    %v2005 = vpow.pop %v2004
    %v2006 = vadd.f32 %v2003, 1.0
    %v2007 = vadd.f32 %v2005, 1.0
    %v2008 = vrcp.pop %v2006
    %v2009 = vmul.f32 1.0, %v2008
    %v2010 = vrcp.pop %v2007
    %v2011 = vmul.f32 1.0, %v2010
    %v2012 = vtanh.pop %v1998
    %v2013 = vtanh.pop %v1999
    %v2014 = vmul.f32 %v2009, 0.0
    %v2015 = vmul.f32 %v2011, 0.0
    %2018 = vrot.lane.b32.xlu0 %v2012, 64
    %v2019 = vpop.permute.xlu0 %2018
    %2020 = vrot.lane.b32.xlu0 %v2013, 64
    %v2021 = vpop.permute.xlu0 %2020
    %v2024 = vmul.f32 %v2009, %v2019
    %v2025 = vmul.f32 %v2011, %v2021
    %2028 = vrot.lane.b32.xlu0 %v2024, 32
    %v2029 = vpop.permute.xlu0 %2028
    %2030 = vrot.lane.b32.xlu0 %v2025, 32
    %v2031 = vpop.permute.xlu0 %2030
    %v2034 = vadd.f32 %v2014, %v2029
    %v2035 = vadd.f32 %v2015, %v2031
    %v2036 = vtanh.pop %v2034
    %v2037 = vtanh.pop %v2035
    %2040 = vrot.lane.b32.xlu0 %v2036, 64
    %v2041 = vpop.permute.xlu0 %2040
    %2042 = vrot.lane.b32.xlu0 %v2037, 64
    %v2043 = vpop.permute.xlu0 %2042
    %v2046 = vmul.f32 %v2009, %v2041
    %v2047 = vmul.f32 %v2011, %v2043
    %v2048 = vrot.slane %v1891, 5
    %v2049 = vrot.slane %v1896, 5
    %v2052 = vadd.f32 %v1814, %v2048
    %v2053 = vadd.f32 %v1819, %v2049
    %v2054 = vadd.f32 %v2052, %v1912
    %v2055 = vadd.f32 %v2053, %v1912
    %v2058 = vrot.slane %v2047, 7
    %vm2059 = vcmask 1041409
    %v2060 = vsel %vm2059, %v2058, %v2046
    %2061 = vrot.lane.b32.xlu0 %v2060, 32
    %v2062 = vpop.permute.xlu0 %2061
    %v2063 = vsel %vm1920, %v2062, 0
    %2065 = vmatprep.subr.mxu0 0.0
    %2066 = vmatpush1.msra.mxu0 0.0
    %2067 = vmatprep.subr.mxu0 0.0
    %2068 = vmatpush1.msra.mxu0 0.0
    %2069 = vmatprep.subr.mxu0 0.0
    %2070 = vmatpush1.msra.mxu0 0.0
    %2071 = vmatprep.subr.mxu0 0.0
    %2072 = vmatpush1.msra.mxu0 0.0
    %2073 = vmatprep.subr.mxu0 0.0
    %2074 = vmatpush1.msra.mxu0 0.0
    %2075 = vmatprep.subr.mxu0 0.0
    %2076 = vmatpush1.msra.mxu0 0.0
    %2077 = vmatprep.subr.mxu0 0.0
    %2078 = vmatpush1.msra.mxu0 0.0
    %2079 = vmatprep.subr.mxu0 0.0
    %2080 = vmatpush1.msra.mxu0 0.0
    %2081 = vmatprep.subr.mxu0 0.0
    %2082 = vmatpush1.msra.mxu0 0.0
    %2083 = vmatprep.subr.mxu0 0.0
    %2084 = vmatpush1.msra.mxu0 0.0
    %2085 = vmatprep.subr.mxu0 0.0
    %2086 = vmatpush1.msra.mxu0 0.0
    %2087 = vmatprep.subr.mxu0 0.0
    %2088 = vmatpush1.msra.mxu0 0.0
    %2089 = vmatprep.subr.mxu0 0.0
    %2090 = vmatpush1.msra.mxu0 %v1919
    %2091 = vmatprep.subr.mxu0 0.0
    %2092 = vmatpush1.msra.mxu0 %v1918
    %2093 = vmatprep.subr.mxu0 0.0
    %2094 = vmatpush1.msra.mxu0 %v1917
    %2095 = vmatprep.subr.mxu0 0.0
    %2096 = vmatpush1.msra.mxu0 %v1916
    %2097 = vmatprep.subr.mxu0 0.0
    %2098 = vmatpush2.msra.mxu0 0.0
    %2099 = vmatprep.subr.mxu0 0.0
    %2100 = vmatpush2.msra.mxu0 0.0
    %2101 = vmatprep.subr.mxu0 0.0
    %2102 = vmatpush2.msra.mxu0 0.0
    %2103 = vmatprep.subr.mxu0 0.0
    %2104 = vmatpush2.msra.mxu0 0.0
    %2105 = vmatprep.subr.mxu0 0.0
    %2106 = vmatpush2.msra.mxu0 0.0
    %2107 = vmatprep.subr.mxu0 0.0
    %2108 = vmatpush2.msra.mxu0 0.0
    %2109 = vmatprep.subr.mxu0 0.0
    %2110 = vmatpush2.msra.mxu0 0.0
    %2111 = vmatprep.subr.mxu0 0.0
    %2112 = vmatpush2.msra.mxu0 0.0
    %2113 = vmatprep.subr.mxu0 0.0
    %2114 = vmatpush2.msra.mxu0 0.0
    %2115 = vmatprep.subr.mxu0 0.0
    %2116 = vmatpush2.msra.mxu0 0.0
    %2117 = vmatprep.subr.mxu0 0.0
    %2118 = vmatpush2.msra.mxu0 0.0
    %2119 = vmatprep.subr.mxu0 0.0
    %2120 = vmatpush2.msra.mxu0 0.0
    %2121 = vmatprep.subr.mxu0 0.0
    %2122 = vmatpush2.msra.mxu0 0.0
    %2123 = vmatprep.subr.mxu0 0.0
    %2124 = vmatpush2.msra.mxu0 0.0
    %2125 = vmatprep.subr.mxu0 0.0
    %2126 = vmatpush2.msra.mxu0 0.0
    %2127 = vmatprep.subr.mxu0 0.0
    %2128 = vmatpush2.msra.mxu0 0.0
    %2129 = vmatprep.mubr.f32.mxu0 0.0
    %2130 = vmatmul.mubr.f32.gmra.mxu0 %v2063
    %v2131 = vpop.f32.mrf.mxu0
    %v2132 = vadd.f32 0.0, %v2131
    %v2133 = vpop.f32.mrf.mxu0
    %2134 = vdwg.mxu0
    %v2136 = vrot.slane %v2132, 7
    %v2139 = vadd.f32 %v2054, %v2136
    %v2140 = vadd.f32 %v2055, %v2132
    %v2141 = vxor.u32 %v2139, 2147483648
    %v2142 = vxor.u32 %v2140, 2147483648
    %v2143 = vmul.f32 %v2141, 1.442695
    %v2144 = vpow.pop %v2143
    %v2145 = vmul.f32 %v2142, 1.442695
    %v2146 = vpow.pop %v2145
    %v2147 = vadd.f32 %v2144, 1.0
    %v2148 = vadd.f32 %v2146, 1.0
    %v2149 = vrcp.pop %v2147
    %v2150 = vmul.f32 1.0, %v2149
    %v2151 = vrcp.pop %v2148
    %v2152 = vmul.f32 1.0, %v2151
    %v2153 = vtanh.pop %v2139
    %v2154 = vtanh.pop %v2140
    %v2157 = vrot.slane %v2034, 7
    %v2158 = vrot.slane %v2035, 7
    %v2161 = vmul.f32 %v2150, %v2157
    %v2162 = vmul.f32 %v2152, %v2158
    %2165 = vrot.lane.b32.xlu0 %v2153, 64
    %v2166 = vpop.permute.xlu0 %2165
    %2167 = vrot.lane.b32.xlu0 %v2154, 64
    %v2168 = vpop.permute.xlu0 %2167
    %v2171 = vmul.f32 %v2150, %v2166
    %v2172 = vmul.f32 %v2152, %v2168
    %2175 = vrot.lane.b32.xlu0 %v2171, 32
    %v2176 = vpop.permute.xlu0 %2175
    %2177 = vrot.lane.b32.xlu0 %v2172, 32
    %v2178 = vpop.permute.xlu0 %2177
    %v2181 = vadd.f32 %v2161, %v2176
    %v2182 = vadd.f32 %v2162, %v2178
    %v2183 = vtanh.pop %v2181
    %v2184 = vtanh.pop %v2182
    %2187 = vrot.lane.b32.xlu0 %v2183, 64
    %v2188 = vpop.permute.xlu0 %2187
    %2189 = vrot.lane.b32.xlu0 %v2184, 64
    %v2190 = vpop.permute.xlu0 %2189
    %v2193 = vmul.f32 %v2150, %v2188
    %v2194 = vmul.f32 %v2152, %v2190
    %v2195 = vrot.slane %v1891, 3
    %v2196 = vrot.slane %v1896, 3
    %v2199 = vadd.f32 %v1814, %v2195
    %v2200 = vadd.f32 %v1819, %v2196
    %v2201 = vadd.f32 %v2199, %v1912
    %v2202 = vadd.f32 %v2200, %v1912
    %v2205 = vrot.slane %v2193, 1
    %v2206 = vsel %vm2059, %v2194, %v2205
    %2207 = vrot.lane.b32.xlu0 %v2206, 32
    %v2208 = vpop.permute.xlu0 %2207
    %v2209 = vsel %vm1920, %v2208, 0
    %2211 = vmatprep.subr.mxu0 0.0
    %2212 = vmatpush1.msra.mxu0 0.0
    %2213 = vmatprep.subr.mxu0 0.0
    %2214 = vmatpush1.msra.mxu0 0.0
    %2215 = vmatprep.subr.mxu0 0.0
    %2216 = vmatpush1.msra.mxu0 0.0
    %2217 = vmatprep.subr.mxu0 0.0
    %2218 = vmatpush1.msra.mxu0 0.0
    %2219 = vmatprep.subr.mxu0 0.0
    %2220 = vmatpush1.msra.mxu0 0.0
    %2221 = vmatprep.subr.mxu0 0.0
    %2222 = vmatpush1.msra.mxu0 0.0
    %2223 = vmatprep.subr.mxu0 0.0
    %2224 = vmatpush1.msra.mxu0 0.0
    %2225 = vmatprep.subr.mxu0 0.0
    %2226 = vmatpush1.msra.mxu0 0.0
    %2227 = vmatprep.subr.mxu0 0.0
    %2228 = vmatpush1.msra.mxu0 0.0
    %2229 = vmatprep.subr.mxu0 0.0
    %2230 = vmatpush1.msra.mxu0 0.0
    %2231 = vmatprep.subr.mxu0 0.0
    %2232 = vmatpush1.msra.mxu0 0.0
    %2233 = vmatprep.subr.mxu0 0.0
    %2234 = vmatpush1.msra.mxu0 0.0
    %2235 = vmatprep.subr.mxu0 0.0
    %2236 = vmatpush1.msra.mxu0 %v1919
    %2237 = vmatprep.subr.mxu0 0.0
    %2238 = vmatpush1.msra.mxu0 %v1918
    %2239 = vmatprep.subr.mxu0 0.0
    %2240 = vmatpush1.msra.mxu0 %v1917
    %2241 = vmatprep.subr.mxu0 0.0
    %2242 = vmatpush1.msra.mxu0 %v1916
    %2243 = vmatprep.subr.mxu0 0.0
    %2244 = vmatpush2.msra.mxu0 0.0
    %2245 = vmatprep.subr.mxu0 0.0
    %2246 = vmatpush2.msra.mxu0 0.0
    %2247 = vmatprep.subr.mxu0 0.0
    %2248 = vmatpush2.msra.mxu0 0.0
    %2249 = vmatprep.subr.mxu0 0.0
    %2250 = vmatpush2.msra.mxu0 0.0
    %2251 = vmatprep.subr.mxu0 0.0
    %2252 = vmatpush2.msra.mxu0 0.0
    %2253 = vmatprep.subr.mxu0 0.0
    %2254 = vmatpush2.msra.mxu0 0.0
    %2255 = vmatprep.subr.mxu0 0.0
    %2256 = vmatpush2.msra.mxu0 0.0
    %2257 = vmatprep.subr.mxu0 0.0
    %2258 = vmatpush2.msra.mxu0 0.0
    %2259 = vmatprep.subr.mxu0 0.0
    %2260 = vmatpush2.msra.mxu0 0.0
    %2261 = vmatprep.subr.mxu0 0.0
    %2262 = vmatpush2.msra.mxu0 0.0
    %2263 = vmatprep.subr.mxu0 0.0
    %2264 = vmatpush2.msra.mxu0 0.0
    %2265 = vmatprep.subr.mxu0 0.0
    %2266 = vmatpush2.msra.mxu0 0.0
    %2267 = vmatprep.subr.mxu0 0.0
    %2268 = vmatpush2.msra.mxu0 0.0
    %2269 = vmatprep.subr.mxu0 0.0
    %2270 = vmatpush2.msra.mxu0 0.0
    %2271 = vmatprep.subr.mxu0 0.0
    %2272 = vmatpush2.msra.mxu0 0.0
    %2273 = vmatprep.subr.mxu0 0.0
    %2274 = vmatpush2.msra.mxu0 0.0
    %2275 = vmatprep.mubr.f32.mxu0 0.0
    %2276 = vmatmul.mubr.f32.gmra.mxu0 %v2209
    %v2277 = vpop.f32.mrf.mxu0
    %v2278 = vadd.f32 0.0, %v2277
    %v2279 = vpop.f32.mrf.mxu0
    %2280 = vdwg.mxu0
    %v2282 = vrot.slane %v2278, 6
    %v2283 = vrot.slane %v2278, 7
    %v2286 = vadd.f32 %v2201, %v2282
    %v2287 = vadd.f32 %v2202, %v2283
    %v2288 = vxor.u32 %v2286, 2147483648
    %v2289 = vxor.u32 %v2287, 2147483648
    %v2290 = vmul.f32 %v2288, 1.442695
    %v2291 = vpow.pop %v2290
    %v2292 = vmul.f32 %v2289, 1.442695
    %v2293 = vpow.pop %v2292
    %v2294 = vadd.f32 %v2291, 1.0
    %v2295 = vadd.f32 %v2293, 1.0
    %v2296 = vrcp.pop %v2294
    %v2297 = vmul.f32 1.0, %v2296
    %v2298 = vrcp.pop %v2295
    %v2299 = vmul.f32 1.0, %v2298
    %v2300 = vtanh.pop %v2286
    %v2301 = vtanh.pop %v2287
    %v2304 = vrot.slane %v2181, 7
    %v2305 = vrot.slane %v2182, 7
    %v2308 = vmul.f32 %v2297, %v2304
    %v2309 = vmul.f32 %v2299, %v2305
    %2312 = vrot.lane.b32.xlu0 %v2300, 64
    %v2313 = vpop.permute.xlu0 %2312
    %2314 = vrot.lane.b32.xlu0 %v2301, 64
    %v2315 = vpop.permute.xlu0 %2314
    %v2318 = vmul.f32 %v2297, %v2313
    %v2319 = vmul.f32 %v2299, %v2315
    %2322 = vrot.lane.b32.xlu0 %v2318, 32
    %v2323 = vpop.permute.xlu0 %2322
    %2324 = vrot.lane.b32.xlu0 %v2319, 32
    %v2325 = vpop.permute.xlu0 %2324
    %v2328 = vadd.f32 %v2308, %v2323
    %v2329 = vadd.f32 %v2309, %v2325
    %v2330 = vtanh.pop %v2328
    %v2331 = vtanh.pop %v2329
    %2334 = vrot.lane.b32.xlu0 %v2330, 64
    %v2335 = vpop.permute.xlu0 %2334
    %2336 = vrot.lane.b32.xlu0 %v2331, 64
    %v2337 = vpop.permute.xlu0 %2336
    %v2340 = vmul.f32 %v2297, %v2335
    %v2341 = vmul.f32 %v2299, %v2337
    %v2342 = vrot.slane %v1891, 1
    %v2343 = vrot.slane %v1896, 1
    %v2346 = vadd.f32 %v1814, %v2342
    %v2347 = vadd.f32 %v1819, %v2343
    %v2348 = vadd.f32 %v2346, %v1912
    %v2349 = vadd.f32 %v2347, %v1912
    %v2352 = vrot.slane %v2340, 2
    %v2353 = vrot.slane %v2341, 1
    %v2354 = vsel %vm2059, %v2353, %v2352
    %2355 = vrot.lane.b32.xlu0 %v2354, 32
    %v2356 = vpop.permute.xlu0 %2355
    %v2357 = vsel %vm1920, %v2356, 0
    %2359 = vmatprep.subr.mxu0 0.0
    %2360 = vmatpush1.msra.mxu0 0.0
    %2361 = vmatprep.subr.mxu0 0.0
    %2362 = vmatpush1.msra.mxu0 0.0
    %2363 = vmatprep.subr.mxu0 0.0
    %2364 = vmatpush1.msra.mxu0 0.0
    %2365 = vmatprep.subr.mxu0 0.0
    %2366 = vmatpush1.msra.mxu0 0.0
    %2367 = vmatprep.subr.mxu0 0.0
    %2368 = vmatpush1.msra.mxu0 0.0
    %2369 = vmatprep.subr.mxu0 0.0
    %2370 = vmatpush1.msra.mxu0 0.0
    %2371 = vmatprep.subr.mxu0 0.0
    %2372 = vmatpush1.msra.mxu0 0.0
    %2373 = vmatprep.subr.mxu0 0.0
    %2374 = vmatpush1.msra.mxu0 0.0
    %2375 = vmatprep.subr.mxu0 0.0
    %2376 = vmatpush1.msra.mxu0 0.0
    %2377 = vmatprep.subr.mxu0 0.0
    %2378 = vmatpush1.msra.mxu0 0.0
    %2379 = vmatprep.subr.mxu0 0.0
    %2380 = vmatpush1.msra.mxu0 0.0
    %2381 = vmatprep.subr.mxu0 0.0
    %2382 = vmatpush1.msra.mxu0 0.0
    %2383 = vmatprep.subr.mxu0 0.0
    %2384 = vmatpush1.msra.mxu0 %v1919
    %2385 = vmatprep.subr.mxu0 0.0
    %2386 = vmatpush1.msra.mxu0 %v1918
    %2387 = vmatprep.subr.mxu0 0.0
    %2388 = vmatpush1.msra.mxu0 %v1917
    %2389 = vmatprep.subr.mxu0 0.0
    %2390 = vmatpush1.msra.mxu0 %v1916
    %2391 = vmatprep.subr.mxu0 0.0
    %2392 = vmatpush2.msra.mxu0 0.0
    %2393 = vmatprep.subr.mxu0 0.0
    %2394 = vmatpush2.msra.mxu0 0.0
    %2395 = vmatprep.subr.mxu0 0.0
    %2396 = vmatpush2.msra.mxu0 0.0
    %2397 = vmatprep.subr.mxu0 0.0
    %2398 = vmatpush2.msra.mxu0 0.0
    %2399 = vmatprep.subr.mxu0 0.0
    %2400 = vmatpush2.msra.mxu0 0.0
    %2401 = vmatprep.subr.mxu0 0.0
    %2402 = vmatpush2.msra.mxu0 0.0
    %2403 = vmatprep.subr.mxu0 0.0
    %2404 = vmatpush2.msra.mxu0 0.0
    %2405 = vmatprep.subr.mxu0 0.0
    %2406 = vmatpush2.msra.mxu0 0.0
    %2407 = vmatprep.subr.mxu0 0.0
    %2408 = vmatpush2.msra.mxu0 0.0
    %2409 = vmatprep.subr.mxu0 0.0
    %2410 = vmatpush2.msra.mxu0 0.0
    %2411 = vmatprep.subr.mxu0 0.0
    %2412 = vmatpush2.msra.mxu0 0.0
    %2413 = vmatprep.subr.mxu0 0.0
    %2414 = vmatpush2.msra.mxu0 0.0
    %2415 = vmatprep.subr.mxu0 0.0
    %2416 = vmatpush2.msra.mxu0 0.0
    %2417 = vmatprep.subr.mxu0 0.0
    %2418 = vmatpush2.msra.mxu0 0.0
    %2419 = vmatprep.subr.mxu0 0.0
    %2420 = vmatpush2.msra.mxu0 0.0
    %2421 = vmatprep.subr.mxu0 0.0
    %2422 = vmatpush2.msra.mxu0 0.0
    %2423 = vmatprep.mubr.f32.mxu0 0.0
    %2424 = vmatmul.mubr.f32.gmra.mxu0 %v2357
    %v2425 = vpop.f32.mrf.mxu0
    %v2426 = vadd.f32 0.0, %v2425
    %v2427 = vpop.f32.mrf.mxu0
    %2428 = vdwg.mxu0
    %v2430 = vrot.slane %v2426, 5
    %v2431 = vrot.slane %v2426, 6
    %v2434 = vadd.f32 %v2348, %v2430
    %v2435 = vadd.f32 %v2349, %v2431
    %v2436 = vxor.u32 %v2434, 2147483648
    %v2437 = vxor.u32 %v2435, 2147483648
    %v2438 = vmul.f32 %v2436, 1.442695
    %v2439 = vpow.pop %v2438
    %v2440 = vmul.f32 %v2437, 1.442695
    %v2441 = vpow.pop %v2440
    %v2442 = vadd.f32 %v2439, 1.0
    %v2443 = vadd.f32 %v2441, 1.0
    %v2444 = vrcp.pop %v2442
    %v2445 = vmul.f32 1.0, %v2444
    %v2446 = vrcp.pop %v2443
    %v2447 = vmul.f32 1.0, %v2446
    %v2448 = vtanh.pop %v2434
    %v2449 = vtanh.pop %v2435
    %v2452 = vrot.slane %v2328, 7
    %v2453 = vrot.slane %v2329, 7
    %v2456 = vmul.f32 %v2445, %v2452
    %v2457 = vmul.f32 %v2447, %v2453
    %2460 = vrot.lane.b32.xlu0 %v2448, 64
    %v2461 = vpop.permute.xlu0 %2460
    %2462 = vrot.lane.b32.xlu0 %v2449, 64
    %v2463 = vpop.permute.xlu0 %2462
    %v2466 = vmul.f32 %v2445, %v2461
    %v2467 = vmul.f32 %v2447, %v2463
    %2470 = vrot.lane.b32.xlu0 %v2466, 32
    %v2471 = vpop.permute.xlu0 %2470
    %2472 = vrot.lane.b32.xlu0 %v2467, 32
    %v2473 = vpop.permute.xlu0 %2472
    %v2476 = vadd.f32 %v2456, %v2471
    %v2477 = vadd.f32 %v2457, %v2473
    %v2478 = vtanh.pop %v2476
    %v2479 = vtanh.pop %v2477
    %2482 = vrot.lane.b32.xlu0 %v2478, 64
    %v2483 = vpop.permute.xlu0 %2482
    %2484 = vrot.lane.b32.xlu0 %v2479, 64
    %v2485 = vpop.permute.xlu0 %2484
    %v2488 = vmul.f32 %v2445, %v2483
    %v2489 = vmul.f32 %v2447, %v2485
    %v2492 = vrot.slane %v2488, 3
    %v2493 = vrot.slane %v2489, 2
    %v2494 = vsel %vm2059, %v2493, %v2492
    %2495 = vrot.lane.b32.xlu0 %v2494, 32
    %v2496 = vpop.permute.xlu0 %2495
    %v2497 = vsel %vm1920, %v2496, 0
    %2499 = vmatprep.subr.mxu0 0.0
    %2500 = vmatpush1.msra.mxu0 0.0
    %2501 = vmatprep.subr.mxu0 0.0
    %2502 = vmatpush1.msra.mxu0 0.0
    %2503 = vmatprep.subr.mxu0 0.0
    %2504 = vmatpush1.msra.mxu0 0.0
    %2505 = vmatprep.subr.mxu0 0.0
    %2506 = vmatpush1.msra.mxu0 0.0
    %2507 = vmatprep.subr.mxu0 0.0
    %2508 = vmatpush1.msra.mxu0 0.0
    %2509 = vmatprep.subr.mxu0 0.0
    %2510 = vmatpush1.msra.mxu0 0.0
    %2511 = vmatprep.subr.mxu0 0.0
    %2512 = vmatpush1.msra.mxu0 0.0
    %2513 = vmatprep.subr.mxu0 0.0
    %2514 = vmatpush1.msra.mxu0 0.0
    %2515 = vmatprep.subr.mxu0 0.0
    %2516 = vmatpush1.msra.mxu0 0.0
    %2517 = vmatprep.subr.mxu0 0.0
    %2518 = vmatpush1.msra.mxu0 0.0
    %2519 = vmatprep.subr.mxu0 0.0
    %2520 = vmatpush1.msra.mxu0 0.0
    %2521 = vmatprep.subr.mxu0 0.0
    %2522 = vmatpush1.msra.mxu0 0.0
    %2523 = vmatprep.subr.mxu0 0.0
    %2524 = vmatpush1.msra.mxu0 %v1919
    %2525 = vmatprep.subr.mxu0 0.0
    %2526 = vmatpush1.msra.mxu0 %v1918
    %2527 = vmatprep.subr.mxu0 0.0
    %2528 = vmatpush1.msra.mxu0 %v1917
    %2529 = vmatprep.subr.mxu0 0.0
    %2530 = vmatpush1.msra.mxu0 %v1916
    %2531 = vmatprep.subr.mxu0 0.0
    %2532 = vmatpush2.msra.mxu0 0.0
    %2533 = vmatprep.subr.mxu0 0.0
    %2534 = vmatpush2.msra.mxu0 0.0
    %2535 = vmatprep.subr.mxu0 0.0
    %2536 = vmatpush2.msra.mxu0 0.0
    %2537 = vmatprep.subr.mxu0 0.0
    %2538 = vmatpush2.msra.mxu0 0.0
    %2539 = vmatprep.subr.mxu0 0.0
    %2540 = vmatpush2.msra.mxu0 0.0
    %2541 = vmatprep.subr.mxu0 0.0
    %2542 = vmatpush2.msra.mxu0 0.0
    %2543 = vmatprep.subr.mxu0 0.0
    %2544 = vmatpush2.msra.mxu0 0.0
    %2545 = vmatprep.subr.mxu0 0.0
    %2546 = vmatpush2.msra.mxu0 0.0
    %2547 = vmatprep.subr.mxu0 0.0
    %2548 = vmatpush2.msra.mxu0 0.0
    %2549 = vmatprep.subr.mxu0 0.0
    %2550 = vmatpush2.msra.mxu0 0.0
    %2551 = vmatprep.subr.mxu0 0.0
    %2552 = vmatpush2.msra.mxu0 0.0
    %2553 = vmatprep.subr.mxu0 0.0
    %2554 = vmatpush2.msra.mxu0 0.0
    %2555 = vmatprep.subr.mxu0 0.0
    %2556 = vmatpush2.msra.mxu0 0.0
    %2557 = vmatprep.subr.mxu0 0.0
    %2558 = vmatpush2.msra.mxu0 0.0
    %2559 = vmatprep.subr.mxu0 0.0
    %2560 = vmatpush2.msra.mxu0 0.0
    %2561 = vmatprep.subr.mxu0 0.0
    %2562 = vmatpush2.msra.mxu0 0.0
    %2563 = vmatprep.mubr.f32.mxu0 0.0
    %2564 = vmatmul.mubr.f32.gmra.mxu0 %v2497
    %v2565 = vpop.f32.mrf.mxu0
    %v2566 = vadd.f32 0.0, %v2565
    %v2567 = vpop.f32.mrf.mxu0
    %2568 = vdwg.mxu0
    %v2570 = vrot.slane %v2566, 4
    %v2571 = vrot.slane %v2566, 5
    %v2574 = vadd.f32 %v1914, %v2570
    %v2575 = vadd.f32 %v1915, %v2571
    %v2576 = vxor.u32 %v2574, 2147483648
    %v2577 = vxor.u32 %v2575, 2147483648
    %v2578 = vmul.f32 %v2576, 1.442695
    %v2579 = vpow.pop %v2578
    %v2580 = vmul.f32 %v2577, 1.442695
    %v2581 = vpow.pop %v2580
    %v2582 = vadd.f32 %v2579, 1.0
    %v2583 = vadd.f32 %v2581, 1.0
    %v2584 = vrcp.pop %v2582
    %v2585 = vmul.f32 1.0, %v2584
    %v2586 = vrcp.pop %v2583
    %v2587 = vmul.f32 1.0, %v2586
    %v2588 = vtanh.pop %v2574
    %v2589 = vtanh.pop %v2575
    %v2592 = vrot.slane %v2476, 7
    %v2593 = vrot.slane %v2477, 7
    %v2596 = vmul.f32 %v2585, %v2592
    %v2597 = vmul.f32 %v2587, %v2593
    %2600 = vrot.lane.b32.xlu0 %v2588, 64
    %v2601 = vpop.permute.xlu0 %2600
    %2602 = vrot.lane.b32.xlu0 %v2589, 64
    %v2603 = vpop.permute.xlu0 %2602
    %v2606 = vmul.f32 %v2585, %v2601
    %v2607 = vmul.f32 %v2587, %v2603
    %2610 = vrot.lane.b32.xlu0 %v2606, 32
    %v2611 = vpop.permute.xlu0 %2610
    %2612 = vrot.lane.b32.xlu0 %v2607, 32
    %v2613 = vpop.permute.xlu0 %2612
    %v2616 = vadd.f32 %v2596, %v2611
    %v2617 = vadd.f32 %v2597, %v2613
    %v2618 = vtanh.pop %v2616
    %v2619 = vtanh.pop %v2617
    %2622 = vrot.lane.b32.xlu0 %v2618, 64
    %v2623 = vpop.permute.xlu0 %2622
    %2624 = vrot.lane.b32.xlu0 %v2619, 64
    %v2625 = vpop.permute.xlu0 %2624
    %v2628 = vmul.f32 %v2585, %v2623
    %v2629 = vmul.f32 %v2587, %v2625
    %v2632 = vrot.slane %v2628, 4
    %v2633 = vrot.slane %v2629, 3
    %v2634 = vsel %vm2059, %v2633, %v2632
    %2635 = vrot.lane.b32.xlu0 %v2634, 32
    %v2636 = vpop.permute.xlu0 %2635
    %v2637 = vsel %vm1920, %v2636, 0
    %2639 = vmatprep.subr.mxu0 0.0
    %2640 = vmatpush1.msra.mxu0 0.0
    %2641 = vmatprep.subr.mxu0 0.0
    %2642 = vmatpush1.msra.mxu0 0.0
    %2643 = vmatprep.subr.mxu0 0.0
    %2644 = vmatpush1.msra.mxu0 0.0
    %2645 = vmatprep.subr.mxu0 0.0
    %2646 = vmatpush1.msra.mxu0 0.0
    %2647 = vmatprep.subr.mxu0 0.0
    %2648 = vmatpush1.msra.mxu0 0.0
    %2649 = vmatprep.subr.mxu0 0.0
    %2650 = vmatpush1.msra.mxu0 0.0
    %2651 = vmatprep.subr.mxu0 0.0
    %2652 = vmatpush1.msra.mxu0 0.0
    %2653 = vmatprep.subr.mxu0 0.0
    %2654 = vmatpush1.msra.mxu0 0.0
    %2655 = vmatprep.subr.mxu0 0.0
    %2656 = vmatpush1.msra.mxu0 0.0
    %2657 = vmatprep.subr.mxu0 0.0
    %2658 = vmatpush1.msra.mxu0 0.0
    %2659 = vmatprep.subr.mxu0 0.0
    %2660 = vmatpush1.msra.mxu0 0.0
    %2661 = vmatprep.subr.mxu0 0.0
    %2662 = vmatpush1.msra.mxu0 0.0
    %2663 = vmatprep.subr.mxu0 0.0
    %2664 = vmatpush1.msra.mxu0 %v1919
    %2665 = vmatprep.subr.mxu0 0.0
    %2666 = vmatpush1.msra.mxu0 %v1918
    %2667 = vmatprep.subr.mxu0 0.0
    %2668 = vmatpush1.msra.mxu0 %v1917
    %2669 = vmatprep.subr.mxu0 0.0
    %2670 = vmatpush1.msra.mxu0 %v1916
    %2671 = vmatprep.subr.mxu0 0.0
    %2672 = vmatpush2.msra.mxu0 0.0
    %2673 = vmatprep.subr.mxu0 0.0
    %2674 = vmatpush2.msra.mxu0 0.0
    %2675 = vmatprep.subr.mxu0 0.0
    %2676 = vmatpush2.msra.mxu0 0.0
    %2677 = vmatprep.subr.mxu0 0.0
    %2678 = vmatpush2.msra.mxu0 0.0
    %2679 = vmatprep.subr.mxu0 0.0
    %2680 = vmatpush2.msra.mxu0 0.0
    %2681 = vmatprep.subr.mxu0 0.0
    %2682 = vmatpush2.msra.mxu0 0.0
    %2683 = vmatprep.subr.mxu0 0.0
    %2684 = vmatpush2.msra.mxu0 0.0
    %2685 = vmatprep.subr.mxu0 0.0
    %2686 = vmatpush2.msra.mxu0 0.0
    %2687 = vmatprep.subr.mxu0 0.0
    %2688 = vmatpush2.msra.mxu0 0.0
    %2689 = vmatprep.subr.mxu0 0.0
    %2690 = vmatpush2.msra.mxu0 0.0
    %2691 = vmatprep.subr.mxu0 0.0
    %2692 = vmatpush2.msra.mxu0 0.0
    %2693 = vmatprep.subr.mxu0 0.0
    %2694 = vmatpush2.msra.mxu0 0.0
    %2695 = vmatprep.subr.mxu0 0.0
    %2696 = vmatpush2.msra.mxu0 0.0
    %2697 = vmatprep.subr.mxu0 0.0
    %2698 = vmatpush2.msra.mxu0 0.0
    %2699 = vmatprep.subr.mxu0 0.0
    %2700 = vmatpush2.msra.mxu0 0.0
    %2701 = vmatprep.subr.mxu0 0.0
    %2702 = vmatpush2.msra.mxu0 0.0
    %2703 = vmatprep.mubr.f32.mxu0 0.0
    %2704 = vmatmul.mubr.f32.gmra.mxu0 %v2637
    %v2705 = vpop.f32.mrf.mxu0
    %v2706 = vadd.f32 0.0, %v2705
    %v2707 = vpop.f32.mrf.mxu0
    %2708 = vdwg.mxu0
    %v2710 = vrot.slane %v2706, 3
    %v2711 = vrot.slane %v2706, 4
    %v2714 = vadd.f32 %v2054, %v2710
    %v2715 = vadd.f32 %v2055, %v2711
    %v2716 = vxor.u32 %v2714, 2147483648
    %v2717 = vxor.u32 %v2715, 2147483648
    %v2718 = vmul.f32 %v2716, 1.442695
    %v2719 = vpow.pop %v2718
    %v2720 = vmul.f32 %v2717, 1.442695
    %v2721 = vpow.pop %v2720
    %v2722 = vadd.f32 %v2719, 1.0
    %v2723 = vadd.f32 %v2721, 1.0
    %v2724 = vrcp.pop %v2722
    %v2725 = vmul.f32 1.0, %v2724
    %v2726 = vrcp.pop %v2723
    %v2727 = vmul.f32 1.0, %v2726
    %v2728 = vtanh.pop %v2714
    %v2729 = vtanh.pop %v2715
    %v2732 = vrot.slane %v2616, 7
    %v2733 = vrot.slane %v2617, 7
    %v2736 = vmul.f32 %v2725, %v2732
    %v2737 = vmul.f32 %v2727, %v2733
    %2740 = vrot.lane.b32.xlu0 %v2728, 64
    %v2741 = vpop.permute.xlu0 %2740
    %2742 = vrot.lane.b32.xlu0 %v2729, 64
    %v2743 = vpop.permute.xlu0 %2742
    %v2746 = vmul.f32 %v2725, %v2741
    %v2747 = vmul.f32 %v2727, %v2743
    %2750 = vrot.lane.b32.xlu0 %v2746, 32
    %v2751 = vpop.permute.xlu0 %2750
    %2752 = vrot.lane.b32.xlu0 %v2747, 32
    %v2753 = vpop.permute.xlu0 %2752
    %v2756 = vadd.f32 %v2736, %v2751
    %v2757 = vadd.f32 %v2737, %v2753
    %v2758 = vtanh.pop %v2756
    %v2759 = vtanh.pop %v2757
    %2762 = vrot.lane.b32.xlu0 %v2758, 64
    %v2763 = vpop.permute.xlu0 %2762
    %2764 = vrot.lane.b32.xlu0 %v2759, 64
    %v2765 = vpop.permute.xlu0 %2764
    %v2768 = vmul.f32 %v2725, %v2763
    %v2769 = vmul.f32 %v2727, %v2765
    %v2772 = vrot.slane %v2768, 5
    %v2773 = vrot.slane %v2769, 4
    %v2774 = vsel %vm2059, %v2773, %v2772
    %2775 = vrot.lane.b32.xlu0 %v2774, 32
    %v2776 = vpop.permute.xlu0 %2775
    %v2777 = vsel %vm1920, %v2776, 0
    %2779 = vmatprep.subr.mxu0 0.0
    %2780 = vmatpush1.msra.mxu0 0.0
    %2781 = vmatprep.subr.mxu0 0.0
    %2782 = vmatpush1.msra.mxu0 0.0
    %2783 = vmatprep.subr.mxu0 0.0
    %2784 = vmatpush1.msra.mxu0 0.0
    %2785 = vmatprep.subr.mxu0 0.0
    %2786 = vmatpush1.msra.mxu0 0.0
    %2787 = vmatprep.subr.mxu0 0.0
    %2788 = vmatpush1.msra.mxu0 0.0
    %2789 = vmatprep.subr.mxu0 0.0
    %2790 = vmatpush1.msra.mxu0 0.0
    %2791 = vmatprep.subr.mxu0 0.0
    %2792 = vmatpush1.msra.mxu0 0.0
    %2793 = vmatprep.subr.mxu0 0.0
    %2794 = vmatpush1.msra.mxu0 0.0
    %2795 = vmatprep.subr.mxu0 0.0
    %2796 = vmatpush1.msra.mxu0 0.0
    %2797 = vmatprep.subr.mxu0 0.0
    %2798 = vmatpush1.msra.mxu0 0.0
    %2799 = vmatprep.subr.mxu0 0.0
    %2800 = vmatpush1.msra.mxu0 0.0
    %2801 = vmatprep.subr.mxu0 0.0
    %2802 = vmatpush1.msra.mxu0 0.0
    %2803 = vmatprep.subr.mxu0 0.0
    %2804 = vmatpush1.msra.mxu0 %v1919
    %2805 = vmatprep.subr.mxu0 0.0
    %2806 = vmatpush1.msra.mxu0 %v1918
    %2807 = vmatprep.subr.mxu0 0.0
    %2808 = vmatpush1.msra.mxu0 %v1917
    %2809 = vmatprep.subr.mxu0 0.0
    %2810 = vmatpush1.msra.mxu0 %v1916
    %2811 = vmatprep.subr.mxu0 0.0
    %2812 = vmatpush2.msra.mxu0 0.0
    %2813 = vmatprep.subr.mxu0 0.0
    %2814 = vmatpush2.msra.mxu0 0.0
    %2815 = vmatprep.subr.mxu0 0.0
    %2816 = vmatpush2.msra.mxu0 0.0
    %2817 = vmatprep.subr.mxu0 0.0
    %2818 = vmatpush2.msra.mxu0 0.0
    %2819 = vmatprep.subr.mxu0 0.0
    %2820 = vmatpush2.msra.mxu0 0.0
    %2821 = vmatprep.subr.mxu0 0.0
    %2822 = vmatpush2.msra.mxu0 0.0
    %2823 = vmatprep.subr.mxu0 0.0
    %2824 = vmatpush2.msra.mxu0 0.0
    %2825 = vmatprep.subr.mxu0 0.0
    %2826 = vmatpush2.msra.mxu0 0.0
    %2827 = vmatprep.subr.mxu0 0.0
    %2828 = vmatpush2.msra.mxu0 0.0
    %2829 = vmatprep.subr.mxu0 0.0
    %2830 = vmatpush2.msra.mxu0 0.0
    %2831 = vmatprep.subr.mxu0 0.0
    %2832 = vmatpush2.msra.mxu0 0.0
    %2833 = vmatprep.subr.mxu0 0.0
    %2834 = vmatpush2.msra.mxu0 0.0
    %2835 = vmatprep.subr.mxu0 0.0
    %2836 = vmatpush2.msra.mxu0 0.0
    %2837 = vmatprep.subr.mxu0 0.0
    %2838 = vmatpush2.msra.mxu0 0.0
    %2839 = vmatprep.subr.mxu0 0.0
    %2840 = vmatpush2.msra.mxu0 0.0
    %2841 = vmatprep.subr.mxu0 0.0
    %2842 = vmatpush2.msra.mxu0 0.0
    %2843 = vmatprep.mubr.f32.mxu0 0.0
    %2844 = vmatmul.mubr.f32.gmra.mxu0 %v2777
    %v2845 = vpop.f32.mrf.mxu0
    %v2846 = vadd.f32 0.0, %v2845
    %v2847 = vpop.f32.mrf.mxu0
    %2848 = vdwg.mxu0
    %v2850 = vrot.slane %v2846, 2
    %v2851 = vrot.slane %v2846, 3
    %v2854 = vadd.f32 %v2201, %v2850
    %v2855 = vadd.f32 %v2202, %v2851
    %v2856 = vxor.u32 %v2854, 2147483648
    %v2857 = vxor.u32 %v2855, 2147483648
    %v2858 = vmul.f32 %v2856, 1.442695
    %v2859 = vpow.pop %v2858
    %v2860 = vmul.f32 %v2857, 1.442695
    %v2861 = vpow.pop %v2860
    %v2862 = vadd.f32 %v2859, 1.0
    %v2863 = vadd.f32 %v2861, 1.0
    %v2864 = vrcp.pop %v2862
    %v2865 = vmul.f32 1.0, %v2864
    %v2866 = vrcp.pop %v2863
    %v2867 = vmul.f32 1.0, %v2866
    %v2868 = vtanh.pop %v2854
    %v2869 = vtanh.pop %v2855
    %v2872 = vrot.slane %v2756, 7
    %v2873 = vrot.slane %v2757, 7
    %v2876 = vmul.f32 %v2865, %v2872
    %v2877 = vmul.f32 %v2867, %v2873
    %2880 = vrot.lane.b32.xlu0 %v2868, 64
    %v2881 = vpop.permute.xlu0 %2880
    %2882 = vrot.lane.b32.xlu0 %v2869, 64
    %v2883 = vpop.permute.xlu0 %2882
    %v2886 = vmul.f32 %v2865, %v2881
    %v2887 = vmul.f32 %v2867, %v2883
    %2890 = vrot.lane.b32.xlu0 %v2886, 32
    %v2891 = vpop.permute.xlu0 %2890
    %2892 = vrot.lane.b32.xlu0 %v2887, 32
    %v2893 = vpop.permute.xlu0 %2892
    %v2896 = vadd.f32 %v2876, %v2891
    %v2897 = vadd.f32 %v2877, %v2893
    %v2898 = vtanh.pop %v2896
    %v2899 = vtanh.pop %v2897
    %2902 = vrot.lane.b32.xlu0 %v2898, 64
    %v2903 = vpop.permute.xlu0 %2902
    %2904 = vrot.lane.b32.xlu0 %v2899, 64
    %v2905 = vpop.permute.xlu0 %2904
    %v2908 = vmul.f32 %v2865, %v2903
    %v2909 = vmul.f32 %v2867, %v2905
    %v2912 = vrot.slane %v2908, 6
    %v2913 = vrot.slane %v2909, 5
    %v2914 = vsel %vm2059, %v2913, %v2912
    %2915 = vrot.lane.b32.xlu0 %v2914, 32
    %v2916 = vpop.permute.xlu0 %2915
    %v2917 = vsel %vm1920, %v2916, 0
    %2919 = vmatprep.subr.mxu0 0.0
    %2920 = vmatpush1.msra.mxu0 0.0
    %2921 = vmatprep.subr.mxu0 0.0
    %2922 = vmatpush1.msra.mxu0 0.0
    %2923 = vmatprep.subr.mxu0 0.0
    %2924 = vmatpush1.msra.mxu0 0.0
    %2925 = vmatprep.subr.mxu0 0.0
    %2926 = vmatpush1.msra.mxu0 0.0
    %2927 = vmatprep.subr.mxu0 0.0
    %2928 = vmatpush1.msra.mxu0 0.0
    %2929 = vmatprep.subr.mxu0 0.0
    %2930 = vmatpush1.msra.mxu0 0.0
    %2931 = vmatprep.subr.mxu0 0.0
    %2932 = vmatpush1.msra.mxu0 0.0
    %2933 = vmatprep.subr.mxu0 0.0
    %2934 = vmatpush1.msra.mxu0 0.0
    %2935 = vmatprep.subr.mxu0 0.0
    %2936 = vmatpush1.msra.mxu0 0.0
    %2937 = vmatprep.subr.mxu0 0.0
    %2938 = vmatpush1.msra.mxu0 0.0
    %2939 = vmatprep.subr.mxu0 0.0
    %2940 = vmatpush1.msra.mxu0 0.0
    %2941 = vmatprep.subr.mxu0 0.0
    %2942 = vmatpush1.msra.mxu0 0.0
    %2943 = vmatprep.subr.mxu0 0.0
    %2944 = vmatpush1.msra.mxu0 %v1919
    %2945 = vmatprep.subr.mxu0 0.0
    %2946 = vmatpush1.msra.mxu0 %v1918
    %2947 = vmatprep.subr.mxu0 0.0
    %2948 = vmatpush1.msra.mxu0 %v1917
    %2949 = vmatprep.subr.mxu0 0.0
    %2950 = vmatpush1.msra.mxu0 %v1916
    %2951 = vmatprep.subr.mxu0 0.0
    %2952 = vmatpush2.msra.mxu0 0.0
    %2953 = vmatprep.subr.mxu0 0.0
    %2954 = vmatpush2.msra.mxu0 0.0
    %2955 = vmatprep.subr.mxu0 0.0
    %2956 = vmatpush2.msra.mxu0 0.0
    %2957 = vmatprep.subr.mxu0 0.0
    %2958 = vmatpush2.msra.mxu0 0.0
    %2959 = vmatprep.subr.mxu0 0.0
    %2960 = vmatpush2.msra.mxu0 0.0
    %2961 = vmatprep.subr.mxu0 0.0
    %2962 = vmatpush2.msra.mxu0 0.0
    %2963 = vmatprep.subr.mxu0 0.0
    %2964 = vmatpush2.msra.mxu0 0.0
    %2965 = vmatprep.subr.mxu0 0.0
    %2966 = vmatpush2.msra.mxu0 0.0
    %2967 = vmatprep.subr.mxu0 0.0
    %2968 = vmatpush2.msra.mxu0 0.0
    %2969 = vmatprep.subr.mxu0 0.0
    %2970 = vmatpush2.msra.mxu0 0.0
    %2971 = vmatprep.subr.mxu0 0.0
    %2972 = vmatpush2.msra.mxu0 0.0
    %2973 = vmatprep.subr.mxu0 0.0
    %2974 = vmatpush2.msra.mxu0 0.0
    %2975 = vmatprep.subr.mxu0 0.0
    %2976 = vmatpush2.msra.mxu0 0.0
    %2977 = vmatprep.subr.mxu0 0.0
    %2978 = vmatpush2.msra.mxu0 0.0
    %2979 = vmatprep.subr.mxu0 0.0
    %2980 = vmatpush2.msra.mxu0 0.0
    %2981 = vmatprep.subr.mxu0 0.0
    %2982 = vmatpush2.msra.mxu0 0.0
    %2983 = vmatprep.mubr.f32.mxu0 0.0
    %2984 = vmatmul.mubr.f32.gmra.mxu0 %v2917
    %v2985 = vpop.f32.mrf.mxu0
    %v2986 = vadd.f32 0.0, %v2985
    %v2987 = vpop.f32.mrf.mxu0
    %2988 = vdwg.mxu0
    %v2990 = vrot.slane %v2986, 1
    %v2991 = vrot.slane %v2986, 2
    %v2994 = vadd.f32 %v2348, %v2990
    %v2995 = vadd.f32 %v2349, %v2991
    %v2996 = vxor.u32 %v2994, 2147483648
    %v2997 = vxor.u32 %v2995, 2147483648
    %v2998 = vmul.f32 %v2996, 1.442695
    %v2999 = vpow.pop %v2998
    %v3000 = vmul.f32 %v2997, 1.442695
    %v3001 = vpow.pop %v3000
    %v3002 = vadd.f32 %v2999, 1.0
    %v3003 = vadd.f32 %v3001, 1.0
    %v3004 = vrcp.pop %v3002
    %v3005 = vmul.f32 1.0, %v3004
    %v3006 = vrcp.pop %v3003
    %v3007 = vmul.f32 1.0, %v3006
    %v3008 = vtanh.pop %v2994
    %v3009 = vtanh.pop %v2995
    %v3012 = vrot.slane %v2896, 7
    %v3013 = vrot.slane %v2897, 7
    %v3016 = vmul.f32 %v3005, %v3012
    %v3017 = vmul.f32 %v3007, %v3013
    %3020 = vrot.lane.b32.xlu0 %v3008, 64
    %v3021 = vpop.permute.xlu0 %3020
    %3022 = vrot.lane.b32.xlu0 %v3009, 64
    %v3023 = vpop.permute.xlu0 %3022
    %v3026 = vmul.f32 %v3005, %v3021
    %v3027 = vmul.f32 %v3007, %v3023
    %3030 = vrot.lane.b32.xlu0 %v3026, 32
    %v3031 = vpop.permute.xlu0 %3030
    %3032 = vrot.lane.b32.xlu0 %v3027, 32
    %v3033 = vpop.permute.xlu0 %3032
    %v3036 = vadd.f32 %v3016, %v3031
    %v3037 = vadd.f32 %v3017, %v3033
    %v3038 = vtanh.pop %v3036
    %v3039 = vtanh.pop %v3037
    %3042 = vrot.lane.b32.xlu0 %v3038, 64
    %v3043 = vpop.permute.xlu0 %3042
    %3044 = vrot.lane.b32.xlu0 %v3039, 64
    %v3045 = vpop.permute.xlu0 %3044
    %v3048 = vmul.f32 %v3005, %v3043
    %v3049 = vmul.f32 %v3007, %v3045
    %v3050 = vld [vmem:[#allocation16] sm:$0xff]
    %v3051 = vld [vmem:[#allocation16 + $0x8] sm:$0xff]
    %v3052 = vld [vmem:[#allocation16 + $0x10] sm:$0xff]
    %v3053 = vld [vmem:[#allocation16 + $0x18] sm:$0xff]
    %v3056 = vrot.slane %v3048, 7
    %v3057 = vrot.slane %v3049, 6
    %v3058 = vsel %vm2059, %v3057, %v3056
    %3059 = vrot.lane.b32.xlu0 %v3058, 32
    %v3060 = vpop.permute.xlu0 %3059
    %v3061 = vsel %vm1920, %v3060, 0
    %3063 = vmatprep.subr.mxu0 0.0
    %3064 = vmatpush1.msra.mxu0 0.0
    %3065 = vmatprep.subr.mxu0 0.0
    %3066 = vmatpush1.msra.mxu0 0.0
    %3067 = vmatprep.subr.mxu0 0.0
    %3068 = vmatpush1.msra.mxu0 0.0
    %3069 = vmatprep.subr.mxu0 0.0
    %3070 = vmatpush1.msra.mxu0 0.0
    %3071 = vmatprep.subr.mxu0 0.0
    %3072 = vmatpush1.msra.mxu0 0.0
    %3073 = vmatprep.subr.mxu0 0.0
    %3074 = vmatpush1.msra.mxu0 0.0
    %3075 = vmatprep.subr.mxu0 0.0
    %3076 = vmatpush1.msra.mxu0 0.0
    %3077 = vmatprep.subr.mxu0 0.0
    %3078 = vmatpush1.msra.mxu0 0.0
    %3079 = vmatprep.subr.mxu0 0.0
    %3080 = vmatpush1.msra.mxu0 0.0
    %3081 = vmatprep.subr.mxu0 0.0
    %3082 = vmatpush1.msra.mxu0 0.0
    %3083 = vmatprep.subr.mxu0 0.0
    %3084 = vmatpush1.msra.mxu0 0.0
    %3085 = vmatprep.subr.mxu0 0.0
    %3086 = vmatpush1.msra.mxu0 0.0
    %3087 = vmatprep.subr.mxu0 0.0
    %3088 = vmatpush1.msra.mxu0 %v3053
    %3089 = vmatprep.subr.mxu0 0.0
    %3090 = vmatpush1.msra.mxu0 %v3052
    %3091 = vmatprep.subr.mxu0 0.0
    %3092 = vmatpush1.msra.mxu0 %v3051
    %3093 = vmatprep.subr.mxu0 0.0
    %3094 = vmatpush1.msra.mxu0 %v3050
    %3095 = vmatprep.subr.mxu0 0.0
    %3096 = vmatpush2.msra.mxu0 0.0
    %3097 = vmatprep.subr.mxu0 0.0
    %3098 = vmatpush2.msra.mxu0 0.0
    %3099 = vmatprep.subr.mxu0 0.0
    %3100 = vmatpush2.msra.mxu0 0.0
    %3101 = vmatprep.subr.mxu0 0.0
    %3102 = vmatpush2.msra.mxu0 0.0
    %3103 = vmatprep.subr.mxu0 0.0
    %3104 = vmatpush2.msra.mxu0 0.0
    %3105 = vmatprep.subr.mxu0 0.0
    %3106 = vmatpush2.msra.mxu0 0.0
    %3107 = vmatprep.subr.mxu0 0.0
    %3108 = vmatpush2.msra.mxu0 0.0
    %3109 = vmatprep.subr.mxu0 0.0
    %3110 = vmatpush2.msra.mxu0 0.0
    %3111 = vmatprep.subr.mxu0 0.0
    %3112 = vmatpush2.msra.mxu0 0.0
    %3113 = vmatprep.subr.mxu0 0.0
    %3114 = vmatpush2.msra.mxu0 0.0
    %3115 = vmatprep.subr.mxu0 0.0
    %3116 = vmatpush2.msra.mxu0 0.0
    %3117 = vmatprep.subr.mxu0 0.0
    %3118 = vmatpush2.msra.mxu0 0.0
    %3119 = vmatprep.subr.mxu0 0.0
    %3120 = vmatpush2.msra.mxu0 0.0
    %3121 = vmatprep.subr.mxu0 0.0
    %3122 = vmatpush2.msra.mxu0 0.0
    %3123 = vmatprep.subr.mxu0 0.0
    %3124 = vmatpush2.msra.mxu0 0.0
    %3125 = vmatprep.subr.mxu0 0.0
    %3126 = vmatpush2.msra.mxu0 0.0
    %3127 = vmatprep.mubr.f32.mxu0 0.0
    %3128 = vmatmul.mubr.f32.gmra.mxu0 %v3061
    %v3129 = vpop.f32.mrf.mxu0
    %v3130 = vadd.f32 0.0, %v3129
    %v3131 = vpop.f32.mrf.mxu0
    %3132 = vdwg.mxu0
    %v3135 = vsel %vm2059, %v1720, %v1713
    %3137 = vmatprep.subr.mxu0 0.0
    %3138 = vmatpush1.msra.mxu0 %v1736
    %3139 = vmatprep.subr.mxu0 0.0
    %3140 = vmatpush1.msra.mxu0 %v1735
    %3141 = vmatprep.subr.mxu0 0.0
    %3142 = vmatpush1.msra.mxu0 %v1734
    %3143 = vmatprep.subr.mxu0 0.0
    %3144 = vmatpush1.msra.mxu0 %v1733
    %3145 = vmatprep.subr.mxu0 0.0
    %3146 = vmatpush1.msra.mxu0 %v1732
    %3147 = vmatprep.subr.mxu0 0.0
    %3148 = vmatpush1.msra.mxu0 %v1731
    %3149 = vmatprep.subr.mxu0 0.0
    %3150 = vmatpush1.msra.mxu0 %v1730
    %3151 = vmatprep.subr.mxu0 0.0
    %3152 = vmatpush1.msra.mxu0 %v1729
    %3153 = vmatprep.subr.mxu0 0.0
    %3154 = vmatpush1.msra.mxu0 %v1728
    %3155 = vmatprep.subr.mxu0 0.0
    %3156 = vmatpush1.msra.mxu0 %v1727
    %3157 = vmatprep.subr.mxu0 0.0
    %3158 = vmatpush1.msra.mxu0 %v1726
    %3159 = vmatprep.subr.mxu0 0.0
    %3160 = vmatpush1.msra.mxu0 %v1725
    %3161 = vmatprep.subr.mxu0 0.0
    %3162 = vmatpush1.msra.mxu0 %v1724
    %3163 = vmatprep.subr.mxu0 0.0
    %3164 = vmatpush1.msra.mxu0 %v1723
    %3165 = vmatprep.subr.mxu0 0.0
    %3166 = vmatpush1.msra.mxu0 %v1722
    %3167 = vmatprep.subr.mxu0 0.0
    %3168 = vmatpush1.msra.mxu0 %v1721
    %3169 = vmatprep.subr.mxu0 0.0
    %3170 = vmatpush2.msra.mxu0 0.0
    %3171 = vmatprep.subr.mxu0 0.0
    %3172 = vmatpush2.msra.mxu0 0.0
    %3173 = vmatprep.subr.mxu0 0.0
    %3174 = vmatpush2.msra.mxu0 0.0
    %3175 = vmatprep.subr.mxu0 0.0
    %3176 = vmatpush2.msra.mxu0 0.0
    %3177 = vmatprep.subr.mxu0 0.0
    %3178 = vmatpush2.msra.mxu0 0.0
    %3179 = vmatprep.subr.mxu0 0.0
    %3180 = vmatpush2.msra.mxu0 0.0
    %3181 = vmatprep.subr.mxu0 0.0
    %3182 = vmatpush2.msra.mxu0 0.0
    %3183 = vmatprep.subr.mxu0 0.0
    %3184 = vmatpush2.msra.mxu0 0.0
    %3185 = vmatprep.subr.mxu0 0.0
    %3186 = vmatpush2.msra.mxu0 0.0
    %3187 = vmatprep.subr.mxu0 0.0
    %3188 = vmatpush2.msra.mxu0 0.0
    %3189 = vmatprep.subr.mxu0 0.0
    %3190 = vmatpush2.msra.mxu0 0.0
    %3191 = vmatprep.subr.mxu0 0.0
    %3192 = vmatpush2.msra.mxu0 0.0
    %3193 = vmatprep.subr.mxu0 0.0
    %3194 = vmatpush2.msra.mxu0 0.0
    %3195 = vmatprep.subr.mxu0 0.0
    %3196 = vmatpush2.msra.mxu0 0.0
    %3197 = vmatprep.subr.mxu0 0.0
    %3198 = vmatpush2.msra.mxu0 0.0
    %3199 = vmatprep.subr.mxu0 0.0
    %3200 = vmatpush2.msra.mxu0 0.0
    %3201 = vmatprep.mubr.f32.mxu0 0.0
    %3202 = vmatmul.mubr.f32.gmra.mxu0 %v3135
    %v3203 = vpop.f32.mrf.mxu0
    %v3204 = vadd.f32 %v3130, %v3203
    %v3205 = vpop.f32.mrf.mxu0
    %3206 = vdwg.mxu0
    %v3207 = vld [vmem:[#allocation18] sm:$0x1]
    %v3209 = vlaneseq
    %v3210 = vshrl.u32 %v3209, 7
    %v3211 = vsub.s32 0, %v3210
    %v3212 = vrot.slane %v3207, %v3211
    %v3214 = vadd.f32 %v3204, %v3212
    %v3215 = vld [vmem:[#allocation19] sm:$0xff]
    %v3216 = vld [vmem:[#allocation19 + $0x8] sm:$0xff]
    %v3217 = vld [vmem:[#allocation19 + $0x10] sm:$0xff]
    %v3218 = vld [vmem:[#allocation19 + $0x18] sm:$0xff]
    %v3219 = vld [vmem:[#allocation19 + $0x20] sm:$0xff]
    %v3220 = vld [vmem:[#allocation19 + $0x28] sm:$0xff]
    %v3221 = vld [vmem:[#allocation19 + $0x30] sm:$0xff]
    %v3222 = vld [vmem:[#allocation19 + $0x38] sm:$0xff]
    %v3223 = vld [vmem:[#allocation21] sm:$0x1]
    %v3225 = vlaneseq
    %v3226 = vshrl.u32 %v3225, 7
    %v3227 = vsub.s32 0, %v3226
    %v3228 = vrot.slane %v3223, %v3227
    %vm3230 = vcmask 523264
    %v3232 = vsel %vm3230, %v3214, 0
    %3234 = vmatprep.subr.mxu0 0.0
    %3235 = vmatpush1.msra.mxu0 0.0
    %3236 = vmatprep.subr.mxu0 0.0
    %3237 = vmatpush1.msra.mxu0 0.0
    %3238 = vmatprep.subr.mxu0 0.0
    %3239 = vmatpush1.msra.mxu0 0.0
    %3240 = vmatprep.subr.mxu0 0.0
    %3241 = vmatpush1.msra.mxu0 0.0
    %3242 = vmatprep.subr.mxu0 0.0
    %3243 = vmatpush1.msra.mxu0 0.0
    %3244 = vmatprep.subr.mxu0 0.0
    %3245 = vmatpush1.msra.mxu0 0.0
    %3246 = vmatprep.subr.mxu0 0.0
    %3247 = vmatpush1.msra.mxu0 0.0
    %3248 = vmatprep.subr.mxu0 0.0
    %3249 = vmatpush1.msra.mxu0 0.0
    %3250 = vmatprep.subr.mxu0 0.0
    %3251 = vmatpush1.msra.mxu0 %v3222
    %3252 = vmatprep.subr.mxu0 0.0
    %3253 = vmatpush1.msra.mxu0 %v3221
    %3254 = vmatprep.subr.mxu0 0.0
    %3255 = vmatpush1.msra.mxu0 %v3220
    %3256 = vmatprep.subr.mxu0 0.0
    %3257 = vmatpush1.msra.mxu0 %v3219
    %3258 = vmatprep.subr.mxu0 0.0
    %3259 = vmatpush1.msra.mxu0 %v3218
    %3260 = vmatprep.subr.mxu0 0.0
    %3261 = vmatpush1.msra.mxu0 %v3217
    %3262 = vmatprep.subr.mxu0 0.0
    %3263 = vmatpush1.msra.mxu0 %v3216
    %3264 = vmatprep.subr.mxu0 0.0
    %3265 = vmatpush1.msra.mxu0 %v3215
    %3266 = vmatprep.subr.mxu0 0.0
    %3267 = vmatpush2.msra.mxu0 0.0
    %3268 = vmatprep.subr.mxu0 0.0
    %3269 = vmatpush2.msra.mxu0 0.0
    %3270 = vmatprep.subr.mxu0 0.0
    %3271 = vmatpush2.msra.mxu0 0.0
    %3272 = vmatprep.subr.mxu0 0.0
    %3273 = vmatpush2.msra.mxu0 0.0
    %3274 = vmatprep.subr.mxu0 0.0
    %3275 = vmatpush2.msra.mxu0 0.0
    %3276 = vmatprep.subr.mxu0 0.0
    %3277 = vmatpush2.msra.mxu0 0.0
    %3278 = vmatprep.subr.mxu0 0.0
    %3279 = vmatpush2.msra.mxu0 0.0
    %3280 = vmatprep.subr.mxu0 0.0
    %3281 = vmatpush2.msra.mxu0 0.0
    %3282 = vmatprep.subr.mxu0 0.0
    %3283 = vmatpush2.msra.mxu0 0.0
    %3284 = vmatprep.subr.mxu0 0.0
    %3285 = vmatpush2.msra.mxu0 0.0
    %3286 = vmatprep.subr.mxu0 0.0
    %3287 = vmatpush2.msra.mxu0 0.0
    %3288 = vmatprep.subr.mxu0 0.0
    %3289 = vmatpush2.msra.mxu0 0.0
    %3290 = vmatprep.subr.mxu0 0.0
    %3291 = vmatpush2.msra.mxu0 0.0
    %3292 = vmatprep.subr.mxu0 0.0
    %3293 = vmatpush2.msra.mxu0 0.0
    %3294 = vmatprep.subr.mxu0 0.0
    %3295 = vmatpush2.msra.mxu0 0.0
    %3296 = vmatprep.subr.mxu0 0.0
    %3297 = vmatpush2.msra.mxu0 0.0
    %3298 = vmatprep.mubr.f32.mxu0 0.0
    %3299 = vmatmul.mubr.f32.gmra.mxu0 %v3232
    %v3300 = vpop.f32.mrf.mxu0
    %v3301 = vadd.f32 %v3228, %v3300
    %v3302 = vpop.f32.mrf.mxu0
    %3303 = vdwg.mxu0
    %v3304 = vld [vmem:[#allocation22] sm:$0xff]
    %v3305 = vld [vmem:[#allocation22 + $0x8] sm:$0xff]
    %v3306 = vld [vmem:[#allocation22 + $0x10] sm:$0xff]
    %v3307 = vld [vmem:[#allocation22 + $0x18] sm:$0xff]
    %v3308 = vld [vmem:[#allocation22 + $0x20] sm:$0xff]
    %v3309 = vld [vmem:[#allocation22 + $0x28] sm:$0xff]
    %v3310 = vld [vmem:[#allocation22 + $0x30] sm:$0xff]
    %v3311 = vld [vmem:[#allocation22 + $0x38] sm:$0xff]
    %v3312 = vld [vmem:[#allocation24] sm:$0x1]
    %v3314 = vlaneseq
    %v3315 = vshrl.u32 %v3314, 7
    %v3316 = vsub.s32 0, %v3315
    %v3317 = vrot.slane %v3312, %v3316
    %v3320 = vsel %vm3230, %v3301, 0
    %3322 = vmatprep.subr.mxu0 0.0
    %3323 = vmatpush1.msra.mxu0 0.0
    %3324 = vmatprep.subr.mxu0 0.0
    %3325 = vmatpush1.msra.mxu0 0.0
    %3326 = vmatprep.subr.mxu0 0.0
    %3327 = vmatpush1.msra.mxu0 0.0
    %3328 = vmatprep.subr.mxu0 0.0
    %3329 = vmatpush1.msra.mxu0 0.0
    %3330 = vmatprep.subr.mxu0 0.0
    %3331 = vmatpush1.msra.mxu0 0.0
    %3332 = vmatprep.subr.mxu0 0.0
    %3333 = vmatpush1.msra.mxu0 0.0
    %3334 = vmatprep.subr.mxu0 0.0
    %3335 = vmatpush1.msra.mxu0 0.0
    %3336 = vmatprep.subr.mxu0 0.0
    %3337 = vmatpush1.msra.mxu0 0.0
    %3338 = vmatprep.subr.mxu0 0.0
    %3339 = vmatpush1.msra.mxu0 %v3311
    %3340 = vmatprep.subr.mxu0 0.0
    %3341 = vmatpush1.msra.mxu0 %v3310
    %3342 = vmatprep.subr.mxu0 0.0
    %3343 = vmatpush1.msra.mxu0 %v3309
    %3344 = vmatprep.subr.mxu0 0.0
    %3345 = vmatpush1.msra.mxu0 %v3308
    %3346 = vmatprep.subr.mxu0 0.0
    %3347 = vmatpush1.msra.mxu0 %v3307
    %3348 = vmatprep.subr.mxu0 0.0
    %3349 = vmatpush1.msra.mxu0 %v3306
    %3350 = vmatprep.subr.mxu0 0.0
    %3351 = vmatpush1.msra.mxu0 %v3305
    %3352 = vmatprep.subr.mxu0 0.0
    %3353 = vmatpush1.msra.mxu0 %v3304
    %3354 = vmatprep.subr.mxu0 0.0
    %3355 = vmatpush2.msra.mxu0 0.0
    %3356 = vmatprep.subr.mxu0 0.0
    %3357 = vmatpush2.msra.mxu0 0.0
    %3358 = vmatprep.subr.mxu0 0.0
    %3359 = vmatpush2.msra.mxu0 0.0
    %3360 = vmatprep.subr.mxu0 0.0
    %3361 = vmatpush2.msra.mxu0 0.0
    %3362 = vmatprep.subr.mxu0 0.0
    %3363 = vmatpush2.msra.mxu0 0.0
    %3364 = vmatprep.subr.mxu0 0.0
    %3365 = vmatpush2.msra.mxu0 0.0
    %3366 = vmatprep.subr.mxu0 0.0
    %3367 = vmatpush2.msra.mxu0 0.0
    %3368 = vmatprep.subr.mxu0 0.0
    %3369 = vmatpush2.msra.mxu0 0.0
    %3370 = vmatprep.subr.mxu0 0.0
    %3371 = vmatpush2.msra.mxu0 0.0
    %3372 = vmatprep.subr.mxu0 0.0
    %3373 = vmatpush2.msra.mxu0 0.0
    %3374 = vmatprep.subr.mxu0 0.0
    %3375 = vmatpush2.msra.mxu0 0.0
    %3376 = vmatprep.subr.mxu0 0.0
    %3377 = vmatpush2.msra.mxu0 0.0
    %3378 = vmatprep.subr.mxu0 0.0
    %3379 = vmatpush2.msra.mxu0 0.0
    %3380 = vmatprep.subr.mxu0 0.0
    %3381 = vmatpush2.msra.mxu0 0.0
    %3382 = vmatprep.subr.mxu0 0.0
    %3383 = vmatpush2.msra.mxu0 0.0
    %3384 = vmatprep.subr.mxu0 0.0
    %3385 = vmatpush2.msra.mxu0 0.0
    %3386 = vmatprep.mubr.f32.mxu0 0.0
    %3387 = vmatmul.mubr.f32.gmra.mxu0 %v3320
    %v3388 = vpop.f32.mrf.mxu0
    %v3389 = vadd.f32 %v3317, %v3388
    %v3390 = vpop.f32.mrf.mxu0
    %3391 = vdwg.mxu0
    %v3392 = vadd.f32 %v3214, %v3389
    %vm3393 = vcmask 517120
    %v3394 = vsel %vm3393, %v3392, 0.0
    %3395 = vadd.xlane.f32.xlu0 %v3394
    %v3396 = vpop.xlane.xlu0 %3395
    %v3397 = vrcp.pop 64.0
    %v3398 = vmul.f32 %v3396, %v3397
    %v3399 = vsub.f32 %v3392, %v3398
    %v3400 = vmul.f32 %v3399, %v3399
    %v3401 = vsel %vm3393, %v3400, 0.0
    %3402 = vadd.xlane.f32.xlu0 %v3401
    %v3403 = vpop.xlane.xlu0 %3402
    %v3404 = vmul.f32 %v3403, %v3397
    %v3405 = vadd.f32 %v3404, 1e-05
    %v3406 = vrsqrt.pop %v3405
    %v3407 = vmul.f32 %v3399, %v3406
    %v3408 = vld [vmem:[#allocation25] sm:$0x1]
    %v3409 = vlaneseq
    %v3410 = vshrl.u32 %v3409, 7
    %v3411 = vsub.s32 0, %v3410
    %v3412 = vrot.slane %v3408, %v3411
    %v3413 = vmul.f32 %v3407, %v3412
    %v3414 = vld [vmem:[#allocation25 + $0x1] sm:$0x1]
    %v3415 = vlaneseq
    %v3416 = vshrl.u32 %v3415, 7
    %v3417 = vsub.s32 0, %v3416
    %v3418 = vrot.slane %v3414, %v3417
    %v3419 = vadd.f32 %v3413, %v3418
    %v3420 = vld [vmem:[#allocation27] sm:$0xff]
    %v3421 = vld [vmem:[#allocation27 + $0x8] sm:$0xff]
    %v3422 = vld [vmem:[#allocation27 + $0x10] sm:$0xff]
    %v3423 = vld [vmem:[#allocation27 + $0x18] sm:$0xff]
    %v3424 = vld [vmem:[#allocation27 + $0x20] sm:$0xff]
    %v3425 = vld [vmem:[#allocation27 + $0x28] sm:$0xff]
    %v3426 = vld [vmem:[#allocation27 + $0x30] sm:$0xff]
    %v3427 = vld [vmem:[#allocation27 + $0x38] sm:$0xff]
    %v3428 = vld [vmem:[#allocation28] sm:$0x1]
    %v3430 = vlaneseq
    %v3431 = vshrl.u32 %v3430, 7
    %v3432 = vsub.s32 0, %v3431
    %v3433 = vrot.slane %v3428, %v3432
    %v3436 = vsel %vm3230, %v3419, 0
    %3438 = vmatprep.subr.mxu0 0.0
    %3439 = vmatpush1.msra.mxu0 0.0
    %3440 = vmatprep.subr.mxu0 0.0
    %3441 = vmatpush1.msra.mxu0 0.0
    %3442 = vmatprep.subr.mxu0 0.0
    %3443 = vmatpush1.msra.mxu0 0.0
    %3444 = vmatprep.subr.mxu0 0.0
    %3445 = vmatpush1.msra.mxu0 0.0
    %3446 = vmatprep.subr.mxu0 0.0
    %3447 = vmatpush1.msra.mxu0 0.0
    %3448 = vmatprep.subr.mxu0 0.0
    %3449 = vmatpush1.msra.mxu0 0.0
    %3450 = vmatprep.subr.mxu0 0.0
    %3451 = vmatpush1.msra.mxu0 0.0
    %3452 = vmatprep.subr.mxu0 0.0
    %3453 = vmatpush1.msra.mxu0 0.0
    %3454 = vmatprep.subr.mxu0 0.0
    %3455 = vmatpush1.msra.mxu0 %v3427
    %3456 = vmatprep.subr.mxu0 0.0
    %3457 = vmatpush1.msra.mxu0 %v3426
    %3458 = vmatprep.subr.mxu0 0.0
    %3459 = vmatpush1.msra.mxu0 %v3425
    %3460 = vmatprep.subr.mxu0 0.0
    %3461 = vmatpush1.msra.mxu0 %v3424
    %3462 = vmatprep.subr.mxu0 0.0
    %3463 = vmatpush1.msra.mxu0 %v3423
    %3464 = vmatprep.subr.mxu0 0.0
    %3465 = vmatpush1.msra.mxu0 %v3422
    %3466 = vmatprep.subr.mxu0 0.0
    %3467 = vmatpush1.msra.mxu0 %v3421
    %3468 = vmatprep.subr.mxu0 0.0
    %3469 = vmatpush1.msra.mxu0 %v3420
    %3470 = vmatprep.subr.mxu0 0.0
    %3471 = vmatpush2.msra.mxu0 0.0
    %3472 = vmatprep.subr.mxu0 0.0
    %3473 = vmatpush2.msra.mxu0 0.0
    %3474 = vmatprep.subr.mxu0 0.0
    %3475 = vmatpush2.msra.mxu0 0.0
    %3476 = vmatprep.subr.mxu0 0.0
    %3477 = vmatpush2.msra.mxu0 0.0
    %3478 = vmatprep.subr.mxu0 0.0
    %3479 = vmatpush2.msra.mxu0 0.0
    %3480 = vmatprep.subr.mxu0 0.0
    %3481 = vmatpush2.msra.mxu0 0.0
    %3482 = vmatprep.subr.mxu0 0.0
    %3483 = vmatpush2.msra.mxu0 0.0
    %3484 = vmatprep.subr.mxu0 0.0
    %3485 = vmatpush2.msra.mxu0 0.0
    %3486 = vmatprep.subr.mxu0 0.0
    %3487 = vmatpush2.msra.mxu0 0.0
    %3488 = vmatprep.subr.mxu0 0.0
    %3489 = vmatpush2.msra.mxu0 0.0
    %3490 = vmatprep.subr.mxu0 0.0
    %3491 = vmatpush2.msra.mxu0 0.0
    %3492 = vmatprep.subr.mxu0 0.0
    %3493 = vmatpush2.msra.mxu0 0.0
    %3494 = vmatprep.subr.mxu0 0.0
    %3495 = vmatpush2.msra.mxu0 0.0
    %3496 = vmatprep.subr.mxu0 0.0
    %3497 = vmatpush2.msra.mxu0 0.0
    %3498 = vmatprep.subr.mxu0 0.0
    %3499 = vmatpush2.msra.mxu0 0.0
    %3500 = vmatprep.subr.mxu0 0.0
    %3501 = vmatpush2.msra.mxu0 0.0
    %3502 = vmatprep.mubr.f32.mxu0 0.0
    %3503 = vmatmul.mubr.f32.gmra.mxu0 %v3436
    %v3504 = vpop.f32.mrf.mxu0
    %v3505 = vadd.f32 %v3433, %v3504
    %v3506 = vpop.f32.mrf.mxu0
    %3507 = vdwg.mxu0
    %v3508 = vmax.f32 %v3505, 0.0
    %v3509 = vld [vmem:[%s22] sm:$0xff]
    %v3510 = vld [vmem:[%s22 + $0x8] sm:$0xff]
    %v3511 = vld [vmem:[%s22 + $0x10] sm:$0xff]
    %v3512 = vld [vmem:[%s22 + $0x18] sm:$0xff]
    %v3513 = vld [vmem:[%s22 + $0x20] sm:$0xff]
    %v3514 = vld [vmem:[%s22 + $0x28] sm:$0xff]
    %v3515 = vld [vmem:[%s22 + $0x30] sm:$0xff]
    %v3516 = vld [vmem:[%s22 + $0x38] sm:$0xff]
    %v3517 = vld [vmem:[%s22 + $0x40] sm:$0xff]
    %v3518 = vld [vmem:[%s22 + $0x48] sm:$0xff]
    %v3519 = vld [vmem:[%s22 + $0x50] sm:$0xff]
    %v3520 = vld [vmem:[%s22 + $0x58] sm:$0xff]
    %v3521 = vld [vmem:[%s22 + $0x60] sm:$0xff]
    %v3522 = vld [vmem:[%s22 + $0x68] sm:$0xff]
    %v3523 = vld [vmem:[%s22 + $0x70] sm:$0xff]
    %v3524 = vld [vmem:[%s22 + $0x78] sm:$0xff]
    %v3525 = vld [vmem:[#allocation30] sm:$0x1]
    %v3527 = vlaneseq
    %v3528 = vshrl.u32 %v3527, 7
    %v3529 = vsub.s32 0, %v3528
    %v3530 = vrot.slane %v3525, %v3529
    %3532 = vmatprep.subr.mxu0 0.0
    %3533 = vmatpush1.msra.mxu0 %v3524
    %3534 = vmatprep.subr.mxu0 0.0
    %3535 = vmatpush1.msra.mxu0 %v3523
    %3536 = vmatprep.subr.mxu0 0.0
    %3537 = vmatpush1.msra.mxu0 %v3522
    %3538 = vmatprep.subr.mxu0 0.0
    %3539 = vmatpush1.msra.mxu0 %v3521
    %3540 = vmatprep.subr.mxu0 0.0
    %3541 = vmatpush1.msra.mxu0 %v3520
    %3542 = vmatprep.subr.mxu0 0.0
    %3543 = vmatpush1.msra.mxu0 %v3519
    %3544 = vmatprep.subr.mxu0 0.0
    %3545 = vmatpush1.msra.mxu0 %v3518
    %3546 = vmatprep.subr.mxu0 0.0
    %3547 = vmatpush1.msra.mxu0 %v3517
    %3548 = vmatprep.subr.mxu0 0.0
    %3549 = vmatpush1.msra.mxu0 %v3516
    %3550 = vmatprep.subr.mxu0 0.0
    %3551 = vmatpush1.msra.mxu0 %v3515
    %3552 = vmatprep.subr.mxu0 0.0
    %3553 = vmatpush1.msra.mxu0 %v3514
    %3554 = vmatprep.subr.mxu0 0.0
    %3555 = vmatpush1.msra.mxu0 %v3513
    %3556 = vmatprep.subr.mxu0 0.0
    %3557 = vmatpush1.msra.mxu0 %v3512
    %3558 = vmatprep.subr.mxu0 0.0
    %3559 = vmatpush1.msra.mxu0 %v3511
    %3560 = vmatprep.subr.mxu0 0.0
    %3561 = vmatpush1.msra.mxu0 %v3510
    %3562 = vmatprep.subr.mxu0 0.0
    %3563 = vmatpush1.msra.mxu0 %v3509
    %3564 = vmatprep.subr.mxu0 0.0
    %3565 = vmatpush2.msra.mxu0 0.0
    %3566 = vmatprep.subr.mxu0 0.0
    %3567 = vmatpush2.msra.mxu0 0.0
    %3568 = vmatprep.subr.mxu0 0.0
    %3569 = vmatpush2.msra.mxu0 0.0
    %3570 = vmatprep.subr.mxu0 0.0
    %3571 = vmatpush2.msra.mxu0 0.0
    %3572 = vmatprep.subr.mxu0 0.0
    %3573 = vmatpush2.msra.mxu0 0.0
    %3574 = vmatprep.subr.mxu0 0.0
    %3575 = vmatpush2.msra.mxu0 0.0
    %3576 = vmatprep.subr.mxu0 0.0
    %3577 = vmatpush2.msra.mxu0 0.0
    %3578 = vmatprep.subr.mxu0 0.0
    %3579 = vmatpush2.msra.mxu0 0.0
    %3580 = vmatprep.subr.mxu0 0.0
    %3581 = vmatpush2.msra.mxu0 0.0
    %3582 = vmatprep.subr.mxu0 0.0
    %3583 = vmatpush2.msra.mxu0 0.0
    %3584 = vmatprep.subr.mxu0 0.0
    %3585 = vmatpush2.msra.mxu0 0.0
    %3586 = vmatprep.subr.mxu0 0.0
    %3587 = vmatpush2.msra.mxu0 0.0
    %3588 = vmatprep.subr.mxu0 0.0
    %3589 = vmatpush2.msra.mxu0 0.0
    %3590 = vmatprep.subr.mxu0 0.0
    %3591 = vmatpush2.msra.mxu0 0.0
    %3592 = vmatprep.subr.mxu0 0.0
    %3593 = vmatpush2.msra.mxu0 0.0
    %3594 = vmatprep.subr.mxu0 0.0
    %3595 = vmatpush2.msra.mxu0 0.0
    %3596 = vmatprep.mubr.f32.mxu0 0.0
    %3597 = vmatmul.mubr.f32.gmra.mxu0 %v3508
    %v3598 = vpop.f32.mrf.mxu0
    %v3599 = vadd.f32 %v3530, %v3598
    %v3600 = vpop.f32.mrf.mxu0
    %3601 = vdwg.mxu0
    %v3602 = vadd.f32 %v3419, %v3599
    %v3603 = vsel %vm3393, %v3602, 0.0
    %3604 = vadd.xlane.f32.xlu0 %v3603
    %v3605 = vpop.xlane.xlu0 %3604
    %v3606 = vmul.f32 %v3605, %v3397
    %v3607 = vsub.f32 %v3602, %v3606
    %v3608 = vmul.f32 %v3607, %v3607
    %v3609 = vsel %vm3393, %v3608, 0.0
    %3610 = vadd.xlane.f32.xlu0 %v3609
    %v3611 = vpop.xlane.xlu0 %3610
    %v3612 = vmul.f32 %v3611, %v3397
    %v3613 = vadd.f32 %v3612, 1e-05
    %v3614 = vrsqrt.pop %v3613
    %v3615 = vmul.f32 %v3607, %v3614
    %v3616 = vld [vmem:[#allocation31] sm:$0x1]
    %v3617 = vlaneseq
    %v3618 = vshrl.u32 %v3617, 7
    %v3619 = vsub.s32 0, %v3618
    %v3620 = vrot.slane %v3616, %v3619
    %v3621 = vmul.f32 %v3615, %v3620
    %v3622 = vld [vmem:[#allocation31 + $0x1] sm:$0x1]
    %v3623 = vlaneseq
    %v3624 = vshrl.u32 %v3623, 7
    %v3625 = vsub.s32 0, %v3624
    %v3626 = vrot.slane %v3622, %v3625
    %v3627 = vadd.f32 %v3621, %v3626
    %v3628 = vld [vmem:[%s25] sm:$0xff]
    %v3629 = vld [vmem:[%s25 + $0x8] sm:$0xff]
    %v3630 = vld [vmem:[%s25 + $0x10] sm:$0xff]
    %v3631 = vld [vmem:[%s25 + $0x18] sm:$0xff]
    %v3632 = vld [vmem:[%s25 + $0x20] sm:$0xff]
    %v3633 = vld [vmem:[%s25 + $0x28] sm:$0xff]
    %v3634 = vld [vmem:[%s25 + $0x30] sm:$0xff]
    %v3635 = vld [vmem:[%s25 + $0x38] sm:$0xff]
    %v3636 = vld [vmem:[#allocation33] sm:$0x1]
    %v3638 = vlaneseq
    %v3639 = vshrl.u32 %v3638, 7
    %v3640 = vsub.s32 0, %v3639
    %v3641 = vrot.slane %v3636, %v3640
    %v3644 = vsel %vm3230, %v3627, 0
    %3646 = vmatprep.subr.mxu0 0.0
    %3647 = vmatpush1.msra.mxu0 0.0
    %3648 = vmatprep.subr.mxu0 0.0
    %3649 = vmatpush1.msra.mxu0 0.0
    %3650 = vmatprep.subr.mxu0 0.0
    %3651 = vmatpush1.msra.mxu0 0.0
    %3652 = vmatprep.subr.mxu0 0.0
    %3653 = vmatpush1.msra.mxu0 0.0
    %3654 = vmatprep.subr.mxu0 0.0
    %3655 = vmatpush1.msra.mxu0 0.0
    %3656 = vmatprep.subr.mxu0 0.0
    %3657 = vmatpush1.msra.mxu0 0.0
    %3658 = vmatprep.subr.mxu0 0.0
    %3659 = vmatpush1.msra.mxu0 0.0
    %3660 = vmatprep.subr.mxu0 0.0
    %3661 = vmatpush1.msra.mxu0 0.0
    %3662 = vmatprep.subr.mxu0 0.0
    %3663 = vmatpush1.msra.mxu0 %v3635
    %3664 = vmatprep.subr.mxu0 0.0
    %3665 = vmatpush1.msra.mxu0 %v3634
    %3666 = vmatprep.subr.mxu0 0.0
    %3667 = vmatpush1.msra.mxu0 %v3633
    %3668 = vmatprep.subr.mxu0 0.0
    %3669 = vmatpush1.msra.mxu0 %v3632
    %3670 = vmatprep.subr.mxu0 0.0
    %3671 = vmatpush1.msra.mxu0 %v3631
    %3672 = vmatprep.subr.mxu0 0.0
    %3673 = vmatpush1.msra.mxu0 %v3630
    %3674 = vmatprep.subr.mxu0 0.0
    %3675 = vmatpush1.msra.mxu0 %v3629
    %3676 = vmatprep.subr.mxu0 0.0
    %3677 = vmatpush1.msra.mxu0 %v3628
    %3678 = vmatprep.subr.mxu0 0.0
    %3679 = vmatpush2.msra.mxu0 0.0
    %3680 = vmatprep.subr.mxu0 0.0
    %3681 = vmatpush2.msra.mxu0 0.0
    %3682 = vmatprep.subr.mxu0 0.0
    %3683 = vmatpush2.msra.mxu0 0.0
    %3684 = vmatprep.subr.mxu0 0.0
    %3685 = vmatpush2.msra.mxu0 0.0
    %3686 = vmatprep.subr.mxu0 0.0
    %3687 = vmatpush2.msra.mxu0 0.0
    %3688 = vmatprep.subr.mxu0 0.0
    %3689 = vmatpush2.msra.mxu0 0.0
    %3690 = vmatprep.subr.mxu0 0.0
    %3691 = vmatpush2.msra.mxu0 0.0
    %3692 = vmatprep.subr.mxu0 0.0
    %3693 = vmatpush2.msra.mxu0 0.0
    %3694 = vmatprep.subr.mxu0 0.0
    %3695 = vmatpush2.msra.mxu0 0.0
    %3696 = vmatprep.subr.mxu0 0.0
    %3697 = vmatpush2.msra.mxu0 0.0
    %3698 = vmatprep.subr.mxu0 0.0
    %3699 = vmatpush2.msra.mxu0 0.0
    %3700 = vmatprep.subr.mxu0 0.0
    %3701 = vmatpush2.msra.mxu0 0.0
    %3702 = vmatprep.subr.mxu0 0.0
    %3703 = vmatpush2.msra.mxu0 0.0
    %3704 = vmatprep.subr.mxu0 0.0
    %3705 = vmatpush2.msra.mxu0 0.0
    %3706 = vmatprep.subr.mxu0 0.0
    %3707 = vmatpush2.msra.mxu0 0.0
    %3708 = vmatprep.subr.mxu0 0.0
    %3709 = vmatpush2.msra.mxu0 0.0
    %3710 = vmatprep.mubr.f32.mxu0 0.0
    %3711 = vmatmul.mubr.f32.gmra.mxu0 %v3644
    %v3712 = vpop.f32.mrf.mxu0
    %v3713 = vadd.f32 %v3641, %v3712
    %v3714 = vpop.f32.mrf.mxu0
    %3715 = vdwg.mxu0
    %vm3716 = vcmask 25600
    %3717 = vst.msk [vmem:[#allocation34] sm:$0x3] %vm3716, %v3713
    // Predicated region
    $region186: #{mmltf_forward.1} parent=1 // pred_check
      _
    $region187: #{mmltf_forward.1} parent=1 // pred_check_branch
      %3719 = sbr.rel (0) target = $region189
    $region188: #{mmltf_forward.1} parent=1 // pred_region
      %s3721 = ssub.s32 32, 32
      %3722 = vsyncadd [#allocation6], %s3721
      %s3724 = sshll.u32 [#allocation34], 4
      %s3725 = int_to_ptr.vmem [resolvable:$true] %s3724
      %3727 = dma.vmem_to_hbm [thread:$0]  %s3725, 32, %s27, [#allocation6]
    $region189: #{mmltf_forward.1} parent=1 // pred_fallthru
      _
    // Predicated region
    $region190: #{mmltf_forward.1} parent=1 // pred_check
      _
    $region191: #{mmltf_forward.1} parent=1 // pred_check_branch
      %3729 = sbr.rel (0) target = $region193
    $region192: #{mmltf_forward.1} parent=1 // pred_region
      %3730 = dma.done [#allocation6], 32
    $region193: #{mmltf_forward.1} parent=1 // pred_fallthru
      _
    %3731 = vsyncpa [#allocation5], 1
    %3732 = vsyncpa [#allocation8], 1
    %3733 = vsyncpa [#allocation11], 1
    %3734 = vsyncpa [#allocation14], 1
    %3735 = vsyncpa [#allocation17], 1
    %3736 = vsyncpa [#allocation20], 1
    %3737 = vsyncpa [#allocation23], 1
    %3738 = vsyncpa [#allocation26], 1
    %3739 = vsyncpa [#allocation29], 1
    %3740 = vsyncpa [#allocation32], 1
    %3741 = vsyncpa [#allocation6], 1

</llo_original>
